<compile_context>
chip_gen: v7x
topology: tpu7x:2x2x1
jax: 0.10.0
libtpu: 0.0.40
codegen_flags: <defaults>
</compile_context>

<pallas_src>
import functools

import jax
import jax.numpy as jnp
from jax.experimental import pallas as pl
from jax.experimental.pallas import tpu as pltpu

_ON_TPU = jax.default_backend() == "tpu"
# bf16 x bf16 -> f32 dots hit the MXU on TPU; the CPU dot thunk (interpret
# mode) rejects that combination, so fall back to f32 operands off-TPU.
_MM_DTYPE = jnp.bfloat16 if _ON_TPU else jnp.float32


def _round_up(x, m):
    return -(-x // m) * m


# ---------------------------------------------------------------------------
# One-time weight preprocessing (layout + absorption).  Call once at init,
# never per forward step.
# ---------------------------------------------------------------------------
def prepare_mla_weights(params, *, n_heads, qk_nope_head_dim, qk_rope_head_dim,
                        v_head_dim, softmax_scale, mm_dtype=_MM_DTYPE):
    f32 = jnp.float32
    h, nope, r, dv = n_heads, qk_nope_head_dim, qk_rope_head_dim, v_head_dim
    qk = nope + r
    r2 = r // 2
    d = params["wq_w"].shape[-1]
    c = params["kvn_w"].shape[0]

    wq = params["wq_w"].astype(f32).reshape(h, qk, d)
    bq = params["wq_b"].astype(f32).reshape(h, qk)
    wkvb = params["wkvb_w"].astype(f32).reshape(h, nope + dv, c)

    # (a) absorb q_nope -> latent (softmax_scale folded in).
    w_abs = jnp.einsum("hnd,hnc->dhc", wq[:, :nope, :], wkvb[:, :nope, :])
    w_abs = (softmax_scale * w_abs).reshape(d, h * c)
    b_abs = jnp.einsum("hn,hnc->hc", bq[:, :nope], wkvb[:, :nope, :])
    b_abs = (softmax_scale * b_abs).reshape(1, h * c)

    # (b) rope part of Wq, de-interleaved into [re | im] (head-major) blocks;
    #     scale folded in (the rotation is linear so scaling commutes).
    wq_rope = wq[:, nope:, :].reshape(h, r2, 2, d)
    wq_rope = jnp.stack([wq_rope[:, :, 0, :], wq_rope[:, :, 1, :]], axis=0)
    wqr_t = (softmax_scale * wq_rope.reshape(h * r, d)).T              # (d, h*r)
    bq_rope = bq[:, nope:].reshape(h, r2, 2)
    bq_rope = jnp.stack([bq_rope[:, :, 0], bq_rope[:, :, 1]], axis=0)
    bqr = (softmax_scale * bq_rope.reshape(1, h * r))

    # (c) wkv_a split into latent part and de-interleaved rope part.
    wkva = params["wkva_w"].astype(f32)
    bkva = params["wkva_b"].astype(f32)
    wkvl_t = wkva[:c].T                                                # (d, c)
    bkvl = bkva[:c].reshape(1, c)
    wkr = wkva[c:].reshape(r2, 2, d)
    wkr_t = jnp.concatenate([wkr[:, 0, :], wkr[:, 1, :]], axis=0).T    # (d, r)
    bkr3 = bkva[c:].reshape(r2, 2)
    bkr = jnp.concatenate([bkr3[:, 0], bkr3[:, 1]], axis=0).reshape(1, r)

    # (d) absorb value-up-projection into wo: W_ov[h] = wkv_b_v[h]^T @ wo_h.
    wo_r = params["wo_w"].astype(f32).reshape(d, h, dv)
    w_ov = jnp.einsum("hvc,ehv->hce", wkvb[:, nope:, :], wo_r)          # (h, c, d)
    wo_b = params["wo_b"].astype(f32).reshape(1, d)

    return dict(
        w_abs=w_abs.astype(mm_dtype), b_abs=b_abs,
        wqr_t=wqr_t.astype(mm_dtype), bqr=bqr,
        wkvl_t=wkvl_t.astype(mm_dtype), bkvl=bkvl,
        wkr_t=wkr_t.astype(mm_dtype), bkr=bkr,
        kvn_w=params["kvn_w"].astype(f32).reshape(1, c),
        w_ov=w_ov.astype(mm_dtype), wo_b=wo_b,
    )


# ---------------------------------------------------------------------------
# Kernel 1: fused projections + RMSNorm + RoPE + q_nope "absorb" matmul.
# ---------------------------------------------------------------------------
def _mla_proj_kernel(x_ref, cos_ref, sin_ref, wabs_ref, babs_ref, wqr_ref,
                     bqr_ref, wkvl_ref, bkvl_ref, wkr_ref, bkr_ref, kvnw_ref,
                     qabs_ref, qpe_ref, kvn_ref, kpe_ref, *, eps, mm_dtype):
    x = x_ref[...].astype(mm_dtype)            # (tile_n, dim)
    cos = cos_ref[...]                         # (tile_n, h*r2) f32, head-tiled
    sin = sin_ref[...]

    # q absorbed projection: one big MXU matmul (softmax_scale pre-folded).
    qabs_ref[...] = (
        jnp.dot(x, wabs_ref[...], preferred_element_type=jnp.float32)
        + babs_ref[...]).astype(qabs_ref.dtype)

    # q rope part; columns are [re-block | im-block], head-major within each
    # block -> RoPE is two full-width VPU ops + one lane-dense store.
    qr = jnp.dot(x, wqr_ref[...], preferred_element_type=jnp.float32) + bqr_ref[...]
    half = cos.shape[-1]
    q_re, q_im = qr[:, :half], qr[:, half:]
    qpe_ref[...] = jnp.concatenate(
        [q_re * cos - q_im * sin, q_re * sin + q_im * cos],
        axis=-1).astype(qpe_ref.dtype)

    # kv latent + RMSNorm (f32).  NOTE: zero-padded token rows only see the
    # bias -> rsqrt stays finite; the wrapper discards those rows.
    kv = jnp.dot(x, wkvl_ref[...], preferred_element_type=jnp.float32) + bkvl_ref[...]
    ms = jnp.mean(kv * kv, axis=-1, keepdims=True)
    kvn_ref[...] = (kv * jax.lax.rsqrt(ms + eps) * kvnw_ref[...]).astype(kvn_ref.dtype)

    # k rope part ([re | im] layout; wrapper re-interleaves the tiny new slice
    # before writing the cache, preserving the original cache layout).
    kr = jnp.dot(x, wkr_ref[...], preferred_element_type=jnp.float32) + bkr_ref[...]
    r2 = kr.shape[-1] // 2
    k_re, k_im = kr[:, :r2], kr[:, r2:]
    c0, s0 = cos[:, :r2], sin[:, :r2]
    kpe_ref[...] = jnp.concatenate(
        [k_re * c0 - k_im * s0, k_re * s0 + k_im * c0],
        axis=-1).astype(kpe_ref.dtype)


# ---------------------------------------------------------------------------
# Kernel 2: stacked-head latent attention with T-tiled online softmax.
# Grid: (batch, num_key_blocks) with ("parallel", "arbitrary").
# ---------------------------------------------------------------------------
def _mla_attn_kernel(qa_ref, qp_ref, kv_ref, pe_ref, wov_ref, wob_ref, out_ref,
                     m_sc, l_sc, acc_sc, *, n_heads, s_len, t_valid, t_blk,
                     mm_dtype):
    ti = pl.program_id(1)
    nt = pl.num_programs(1)

    @pl.when(ti == 0)
    def _():
        m_sc[...] = jnp.full(m_sc.shape, -jnp.inf, jnp.float32)
        l_sc[...] = jnp.zeros(l_sc.shape, jnp.float32)
        acc_sc[...] = jnp.zeros(acc_sc.shape, jnp.float32)

    qa = qa_ref[0]                    # (h*s, c)   softmax_scale pre-folded
    qp = qp_ref[0]                    # (h*s, r)
    kv = kv_ref[0]                    # (t_blk, c)
    pe = pe_ref[0]                    # (t_blk, r)

    dn = (((1,), (1,)), ((), ()))     # contract last dims: A @ B^T
    s = (jax.lax.dot_general(qa, kv, dn, preferred_element_type=jnp.float32)
         + jax.lax.dot_general(qp, pe, dn, preferred_element_type=jnp.float32))

    # NOTE: the PyTorch module builds a causal mask but never applies it ->
    # faithfully unmasked.  Only padded keys (beyond the true cache length)
    # are masked, and only when padding actually exists (static check).
    if t_valid % t_blk != 0:
        key_pos = ti * t_blk + jax.lax.broadcasted_iota(jnp.int32, s.shape, 1)
        s = jnp.where(key_pos < t_valid, s, -jnp.inf)

    # online softmax update (f32, exact reciprocal at the end).
    m_new = jnp.maximum(m_sc[...], jnp.max(s, axis=-1, keepdims=True))
    alpha = jnp.exp(m_sc[...] - m_new)
    p = jnp.exp(s - m_new)
    l_sc[...] = alpha * l_sc[...] + jnp.sum(p, axis=-1, keepdims=True)
    acc_sc[...] = alpha * acc_sc[...] + jnp.dot(
        p.astype(mm_dtype), kv, preferred_element_type=jnp.float32)
    m_sc[...] = m_new

    @pl.when(ti == nt - 1)
    def _():
        ctx = acc_sc[...] / l_sc[...]                          # (h*s, c) f32
        ctx3 = ctx.reshape(n_heads, s_len, -1).astype(mm_dtype)
        # batched per-head absorbed output projection: (h,s,c)x(h,c,d)->(h,s,d)
        dnb = (((2,), (1,)), ((0,), (0,)))
        o = jax.lax.dot_general(ctx3, wov_ref[...], dnb,
                                preferred_element_type=jnp.float32)
        out_ref[0] = (jnp.sum(o, axis=0) + wob_ref[...]).astype(out_ref.dtype)


# ---------------------------------------------------------------------------
# Forward wrapper
# ---------------------------------------------------------------------------
def mla_forward(x, start_pos, cos, sin, prep, kv_cache, pe_cache, *,
                is_train, n_heads, qk_rope_head_dim, eps=1e-3,
                tile_n=256, t_blk=512):
    """x: (B, S, dim).  cos/sin: (S, r/2) f32 RoPE tables for positions
    [start_pos, start_pos+S).  prep: output of prepare_mla_weights (call once).
    kv_cache: (max_bs, max_seq, kv_rank) f32, pe_cache: (max_bs, max_seq, r)
    f32 in the original interleaved layout.  Returns (out, kv_cache, pe_cache).
    """
    f32 = jnp.float32
    b, s, d = x.shape
    h, r = n_heads, qk_rope_head_dim
    r2 = r // 2
    c = kv_cache.shape[-1]
    n = b * s
    end_pos = start_pos + s
    mm_dtype = prep["w_abs"].dtype
    msz = jnp.dtype(mm_dtype).itemsize

    # ---- kernel 1: token-tiled fused projection ---------------------------
    tile_n = max(16, min(_round_up(int(tile_n), 16), _round_up(n, 16)))
    n_pad = _round_up(n, tile_n)

    x_tok = x.reshape(n, d)
    cos_h = jnp.tile(cos.astype(f32), (1, h))                # (s, h*r2)
    sin_h = jnp.tile(sin.astype(f32), (1, h))
    cos_tok = jnp.broadcast_to(cos_h[None], (b, s, h * r2)).reshape(n, h * r2)
    sin_tok = jnp.broadcast_to(sin_h[None], (b, s, h * r2)).reshape(n, h * r2)
    if n_pad != n:
        pad = ((0, n_pad - n), (0, 0))
        x_tok = jnp.pad(x_tok, pad)
        cos_tok = jnp.pad(cos_tok, pad)
        sin_tok = jnp.pad(sin_tok, pad)

    flops1 = int(2 * n_pad * d * (h * c + h * r + c + r))
    bytes1 = int(n_pad * d * x.dtype.itemsize
                 + d * (h * c + h * r + c + r) * msz
                 + n_pad * (h * c + h * r) * msz
                 + n_pad * (c + r) * 4
                 + 2 * n_pad * h * r2 * 4)

    qabs, qpe, kvn, kpe = pl.pallas_call(
        functools.partial(_mla_proj_kernel, eps=float(eps), mm_dtype=mm_dtype),
        out_shape=(
            jax.ShapeDtypeStruct((n_pad, h * c), mm_dtype),
            jax.ShapeDtypeStruct((n_pad, h * r), mm_dtype),
            jax.ShapeDtypeStruct((n_pad, c), f32),
            jax.ShapeDtypeStruct((n_pad, r), f32),
        ),
        grid=(n_pad // tile_n,),
        in_specs=[
            pl.BlockSpec((tile_n, d), lambda i: (i, 0)),
            pl.BlockSpec((tile_n, h * r2), lambda i: (i, 0)),
            pl.BlockSpec((tile_n, h * r2), lambda i: (i, 0)),
            pl.BlockSpec((d, h * c), lambda i: (0, 0)),
            pl.BlockSpec((1, h * c), lambda i: (0, 0)),
            pl.BlockSpec((d, h * r), lambda i: (0, 0)),
            pl.BlockSpec((1, h * r), lambda i: (0, 0)),
            pl.BlockSpec((d, c), lambda i: (0, 0)),
            pl.BlockSpec((1, c), lambda i: (0, 0)),
            pl.BlockSpec((d, r), lambda i: (0, 0)),
            pl.BlockSpec((1, r), lambda i: (0, 0)),
            pl.BlockSpec((1, c), lambda i: (0, 0)),
        ],
        out_specs=(
            pl.BlockSpec((tile_n, h * c), lambda i: (i, 0)),
            pl.BlockSpec((tile_n, h * r), lambda i: (i, 0)),
            pl.BlockSpec((tile_n, c), lambda i: (i, 0)),
            pl.BlockSpec((tile_n, r), lambda i: (i, 0)),
        ),
        compiler_params=pltpu.CompilerParams(dimension_semantics=("parallel",)),
        cost_estimate=pl.CostEstimate(flops=flops1, transcendentals=n_pad,
                                      bytes_accessed=bytes1),
    )(x_tok, cos_tok, sin_tok, prep["w_abs"], prep["b_abs"], prep["wqr_t"],
      prep["bqr"], prep["wkvl_t"], prep["bkvl"], prep["wkr_t"], prep["bkr"],
      prep["kvn_w"])

    # tiny, seq-sized layout fixups (never touch the whole cache):
    # stack heads into the M dimension for kernel 2, re-interleave rope dims.
    qabs = qabs[:n].reshape(b, s, h, c).transpose(0, 2, 1, 3).reshape(b, h * s, c)
    qpe = (qpe[:n].reshape(b, s, 2, h, r2)
           .transpose(0, 3, 1, 4, 2).reshape(b, h * s, r))
    kvn = kvn[:n].reshape(b, s, c)
    kpe = kpe[:n].reshape(b, s, 2, r2).transpose(0, 1, 3, 2).reshape(b, s, r)

    # ---- cache update (original layouts preserved; train mode skips it) ---
    if not is_train:
        kv_cache = jax.lax.dynamic_update_slice(
            kv_cache, kvn.astype(kv_cache.dtype), (0, start_pos, 0))
        pe_cache = jax.lax.dynamic_update_slice(
            pe_cache, kpe.astype(pe_cache.dtype), (0, start_pos, 0))

    # ---- kernel 2: stacked-head flash-style latent attention --------------
    t = end_pos
    t_blk = max(16, min(_round_up(int(t_blk), 16), _round_up(t, 16)))
    t_pad = _round_up(t, t_blk)
    nt = t_pad // t_blk

    kv_used = kv_cache[:b, :t].astype(mm_dtype)     # bf16 cache stream on TPU
    pe_used = pe_cache[:b, :t].astype(mm_dtype)
    if t_pad != t:
        kv_used = jnp.pad(kv_used, ((0, 0), (0, t_pad - t), (0, 0)))
        pe_used = jnp.pad(pe_used, ((0, 0), (0, t_pad - t), (0, 0)))

    flops2 = int(2 * b * h * s * (t_pad * (2 * c + r) + c * d))
    bytes2 = int(b * h * s * (c + r) * msz + b * t_pad * (c + r) * msz
                 + h * c * d * msz + b * s * d * x.dtype.itemsize + 2 * d * 4)

    out = pl.pallas_call(
        functools.partial(_mla_attn_kernel, n_heads=h, s_len=s, t_valid=t,
                          t_blk=t_blk, mm_dtype=mm_dtype),
        out_shape=jax.ShapeDtypeStruct((b, s, d), x.dtype),
        grid=(b, nt),
        in_specs=[
            pl.BlockSpec((1, h * s, c), lambda bi, ti: (bi, 0, 0)),
            pl.BlockSpec((1, h * s, r), lambda bi, ti: (bi, 0, 0)),
            pl.BlockSpec((1, t_blk, c), lambda bi, ti: (bi, ti, 0)),
            pl.BlockSpec((1, t_blk, r), lambda bi, ti: (bi, ti, 0)),
            pl.BlockSpec((h, c, d), lambda bi, ti: (0, 0, 0)),
            pl.BlockSpec((1, d), lambda bi, ti: (0, 0)),
        ],
        out_specs=pl.BlockSpec((1, s, d), lambda bi, ti: (bi, 0, 0)),
        scratch_shapes=[
            pltpu.VMEM((h * s, 1), jnp.float32),   # running max
            pltpu.VMEM((h * s, 1), jnp.float32),   # running sum
            pltpu.VMEM((h * s, c), jnp.float32),   # running context accum
        ],
        compiler_params=pltpu.CompilerParams(
            dimension_semantics=("parallel", "arbitrary")),
        cost_estimate=pl.CostEstimate(flops=flops2,
                                      transcendentals=int(b * h * s * t_pad),
                                      bytes_accessed=bytes2),
    )(qabs, qpe, kv_used, pe_used, prep["w_ov"], prep["wo_b"])

    return out, kv_cache, pe_cache


# ---------------------------------------------------------------------------
# Pure-JAX reference (mirrors the PyTorch forward: interleaved RoPE, original
# weight layout, matmul operands in the same compute dtype as the kernels).
# ---------------------------------------------------------------------------
def _rope_ref(x, cos, sin):
    r2 = x.shape[-1] // 2
    xr = x.reshape(*x.shape[:-1], r2, 2)
    re, im = xr[..., 0], xr[..., 1]
    cb = cos[None, :, None, :]
    sb = sin[None, :, None, :]
    return jnp.stack([re * cb - im * sb, re * sb + im * cb],
                     axis=-1).reshape(x.shape)


def mla_reference(x, start_pos, cos, sin, params, kv_cache, pe_cache, *,
                  is_train, n_heads, qk_nope_head_dim, qk_rope_head_dim,
                  v_head_dim, softmax_scale, eps=1e-3, mm_dtype=_MM_DTYPE):
    f32 = jnp.float32
    b, s, _ = x.shape
    h, nope, r, dv = n_heads, qk_nope_head_dim, qk_rope_head_dim, v_head_dim
    qk = nope + r
    c = kv_cache.shape[-1]
    t = start_pos + s
    xm = x.astype(mm_dtype)

    q = (jnp.dot(xm, params["wq_w"].T.astype(mm_dtype), preferred_element_type=f32)
         + params["wq_b"]).reshape(b, s, h, qk)
    q_nope, q_pe = q[..., :nope], q[..., nope:]
    q_pe = _rope_ref(q_pe, cos, sin)

    kva = (jnp.dot(xm, params["wkva_w"].T.astype(mm_dtype), preferred_element_type=f32)
           + params["wkva_b"])
    kv_lat, k_pe = kva[..., :c], kva[..., c:]
    k_pe = _rope_ref(k_pe[:, :, None, :], cos, sin)[:, :, 0]
    kvn = kv_lat * jax.lax.rsqrt(
        jnp.mean(kv_lat * kv_lat, -1, keepdims=True) + eps) * params["kvn_w"]

    wkvb = params["wkvb_w"].reshape(h, nope + dv, c).astype(mm_dtype)
    q_abs = jnp.einsum("bshd,hdc->bshc", q_nope.astype(mm_dtype), wkvb[:, :nope],
                       preferred_element_type=f32)

    if not is_train:
        kv_cache = jax.lax.dynamic_update_slice(
            kv_cache, kvn.astype(kv_cache.dtype), (0, start_pos, 0))
        pe_cache = jax.lax.dynamic_update_slice(
            pe_cache, k_pe.astype(pe_cache.dtype), (0, start_pos, 0))

    kv = kv_cache[:b, :t].astype(mm_dtype)
    pe = pe_cache[:b, :t].astype(mm_dtype)
    scores = (jnp.einsum("bshc,btc->bsht", q_abs.astype(mm_dtype), kv,
                         preferred_element_type=f32)
              + jnp.einsum("bshr,btr->bsht", q_pe.astype(mm_dtype), pe,
                           preferred_element_type=f32)) * softmax_scale
    # NOTE: the PyTorch module builds a causal mask but never applies it.
    probs = jax.nn.softmax(scores, axis=-1)
    ctx = jnp.einsum("bsht,btc->bshc", probs.astype(mm_dtype), kv,
                     preferred_element_type=f32)
    o_h = jnp.einsum("bshc,hdc->bshd", ctx.astype(mm_dtype), wkvb[:, nope:],
                     preferred_element_type=f32)
    out = (jnp.dot(o_h.reshape(b, s, h * dv).astype(mm_dtype),
                   params["wo_w"].T.astype(mm_dtype), preferred_element_type=f32)
           + params["wo_b"])
    return out.astype(x.dtype), kv_cache, pe_cache


if __name__ == "__main__":
    # Shapes consistent with ModelArgs defaults:
    #   dim=256, n_heads=8, kv_lora_rank=256, qk_nope=64, qk_rope=32, v=64,
    #   max_batch_size=2, max_seq_len=256.  Tokens: batch=2, seq=16.
    B, S, START_POS = 2, 16, 0
    DIM, H, NOPE, R, DV, C = 256, 8, 64, 32, 64, 256
    MAX_BS, MAX_SEQ = 2, 256
    QK = NOPE + R
    EPS = 1e-3
    ROPE_THETA = 10000.0
    SOFTMAX_SCALE = QK ** -0.5   # max_seq_len (256) <= original_seq_len (512)

    key = jax.random.PRNGKey(0)
    ks = jax.random.split(key, 9)
    x = jax.random.normal(ks[0], (B, S, DIM), jnp.float32).astype(jnp.bfloat16)
    params = {
        "wq_w": 0.02 * jax.random.normal(ks[1], (H * QK, DIM), jnp.float32),
        "wq_b": 0.01 * jax.random.normal(ks[2], (H * QK,), jnp.float32),
        "wkva_w": 0.02 * jax.random.normal(ks[3], (C + R, DIM), jnp.float32),
        "wkva_b": 0.01 * jax.random.normal(ks[4], (C + R,), jnp.float32),
        "kvn_w": 1.0 + 0.1 * jax.random.normal(ks[5], (C,), jnp.float32),
        "wkvb_w": 0.02 * jax.random.normal(ks[6], (H * (NOPE + DV), C), jnp.float32),
        "wo_w": 0.02 * jax.random.normal(ks[7], (DIM, H * DV), jnp.float32),
        "wo_b": 0.01 * jax.random.normal(ks[8], (DIM,), jnp.float32),
    }
    kv_cache = jnp.zeros((MAX_BS, MAX_SEQ, C), jnp.float32)
    pe_cache = jnp.zeros((MAX_BS, MAX_SEQ, R), jnp.float32)

    # RoPE tables (standard theta schedule) for positions [START_POS, +S).
    pos = jnp.arange(START_POS, START_POS + S, dtype=jnp.float32)
    inv_freq = 1.0 / (ROPE_THETA ** (jnp.arange(0, R, 2, dtype=jnp.float32) / R))
    ang = pos[:, None] * inv_freq[None, :]
    cos, sin = jnp.cos(ang), jnp.sin(ang)

    # One-time weight prep (absorption + layout), NOT per forward call.
    prep = prepare_mla_weights(
        params, n_heads=H, qk_nope_head_dim=NOPE, qk_rope_head_dim=R,
        v_head_dim=DV, softmax_scale=SOFTMAX_SCALE)

    # Inference path (args.train=False): caches populated, attention reads the
    # freshly written latents (prefill step).
    out, kvc, pec = mla_forward(
        x, START_POS, cos, sin, prep, kv_cache, pe_cache,
        is_train=False, n_heads=H, qk_rope_head_dim=R, eps=EPS,
        tile_n=256, t_blk=512)
    jax.block_until_ready((out, kvc, pec))

    out_ref, kvc_ref, pec_ref = mla_reference(
        x, START_POS, cos, sin, params, kv_cache, pe_cache,
        is_train=False, n_heads=H, qk_nope_head_dim=NOPE, qk_rope_head_dim=R,
        v_head_dim=DV, softmax_scale=SOFTMAX_SCALE, eps=EPS)
    jax.block_until_ready((out_ref, kvc_ref, pec_ref))

    assert out.shape == (B, S, DIM) and out.dtype == x.dtype
    assert jnp.allclose(out.astype(jnp.float32), out_ref.astype(jnp.float32),
                        atol=2e-2, rtol=2e-2)
    assert jnp.allclose(kvc, kvc_ref, atol=2e-2, rtol=2e-2)
    assert jnp.allclose(pec, pec_ref, atol=2e-2, rtol=2e-2)
    print("KERNEL_OK")
</pallas_src>

<mosaic_0001>
module attributes {stable_mosaic.version = 11 : i64} {
  func.func @_mla_proj_kernel(%arg0: i32, %arg1: memref<32x256xbf16, #tpu.memory_space<vmem>>, %arg2: memref<32x128xf32, #tpu.memory_space<vmem>>, %arg3: memref<32x128xf32, #tpu.memory_space<vmem>>, %arg4: memref<256x2048xf32, #tpu.memory_space<vmem>>, %arg5: memref<1x2048xf32, #tpu.memory_space<vmem>>, %arg6: memref<256x256xf32, #tpu.memory_space<vmem>>, %arg7: memref<1x256xf32, #tpu.memory_space<vmem>>, %arg8: memref<256x256xf32, #tpu.memory_space<vmem>>, %arg9: memref<1x256xf32, #tpu.memory_space<vmem>>, %arg10: memref<256x32xf32, #tpu.memory_space<vmem>>, %arg11: memref<1x32xf32, #tpu.memory_space<vmem>>, %arg12: memref<1x256xf32, #tpu.memory_space<vmem>>, %arg13: memref<32x2048xf32, #tpu.memory_space<vmem>>, %arg14: memref<32x256xf32, #tpu.memory_space<vmem>>, %arg15: memref<32x256xf32, #tpu.memory_space<vmem>>, %arg16: memref<32x32xf32, #tpu.memory_space<vmem>>) attributes {dimension_semantics = [#tpu.dimension_semantics<parallel>], iteration_bounds = array<i64: 1>, scalar_prefetch = 0 : i64, scratch_operands = 0 : i64, tpu.core_type = #tpu.core_type<tc>, window_params = [{transform_indices = @transform_0, window_bounds = array<i64: 32, 256>}, {transform_indices = @transform_1, window_bounds = array<i64: 32, 128>}, {transform_indices = @transform_2, window_bounds = array<i64: 32, 128>}, {pipeline_mode = #tpu.pipeline_mode<synchronous>, transform_indices = @transform_3, window_bounds = array<i64: 256, 2048>}, {pipeline_mode = #tpu.pipeline_mode<synchronous>, transform_indices = @transform_4, window_bounds = array<i64: 1, 2048>}, {pipeline_mode = #tpu.pipeline_mode<synchronous>, transform_indices = @transform_5, window_bounds = array<i64: 256, 256>}, {pipeline_mode = #tpu.pipeline_mode<synchronous>, transform_indices = @transform_6, window_bounds = array<i64: 1, 256>}, {pipeline_mode = #tpu.pipeline_mode<synchronous>, transform_indices = @transform_7, window_bounds = array<i64: 256, 256>}, {pipeline_mode = #tpu.pipeline_mode<synchronous>, transform_indices = @transform_8, window_bounds = array<i64: 1, 256>}, {pipeline_mode = #tpu.pipeline_mode<synchronous>, transform_indices = @transform_9, window_bounds = array<i64: 256, 32>}, {pipeline_mode = #tpu.pipeline_mode<synchronous>, transform_indices = @transform_10, window_bounds = array<i64: 1, 32>}, {pipeline_mode = #tpu.pipeline_mode<synchronous>, transform_indices = @transform_11, window_bounds = array<i64: 1, 256>}, {transform_indices = @transform_12, window_bounds = array<i64: 32, 2048>}, {transform_indices = @transform_13, window_bounds = array<i64: 32, 256>}, {transform_indices = @transform_14, window_bounds = array<i64: 32, 256>}, {transform_indices = @transform_15, window_bounds = array<i64: 32, 32>}]} {
    %c0 = arith.constant 0 : index
    %c0_0 = arith.constant 0 : index
    %0 = vector.load %arg1[%c0, %c0_0] : memref<32x256xbf16, #tpu.memory_space<vmem>>, vector<32x256xbf16>
    %1 = arith.extf %0 : vector<32x256xbf16> to vector<32x256xf32>
    %c0_1 = arith.constant 0 : index
    %c0_2 = arith.constant 0 : index
    %2 = vector.load %arg2[%c0_1, %c0_2] : memref<32x128xf32, #tpu.memory_space<vmem>>, vector<32x128xf32>
    %c0_3 = arith.constant 0 : index
    %c0_4 = arith.constant 0 : index
    %3 = vector.load %arg3[%c0_3, %c0_4] : memref<32x128xf32, #tpu.memory_space<vmem>>, vector<32x128xf32>
    %c0_5 = arith.constant 0 : index
    %c0_6 = arith.constant 0 : index
    %4 = vector.load %arg4[%c0_5, %c0_6] : memref<256x2048xf32, #tpu.memory_space<vmem>>, vector<256x2048xf32>
    %cst = arith.constant dense<0.000000e+00> : vector<32x2048xf32>
    %5 = tpu.matmul %1, %4, %cst {dimension_numbers = #tpu.dot_dimension_numbers<[1], [0], [0], [1], [0, 0, 1, 1], [], []>} : vector<32x256xf32>, vector<256x2048xf32>, vector<32x2048xf32> -> vector<32x2048xf32>
    %c0_7 = arith.constant 0 : index
    %c0_8 = arith.constant 0 : index
    %6 = vector.load %arg5[%c0_7, %c0_8] : memref<1x2048xf32, #tpu.memory_space<vmem>>, vector<1x2048xf32>
    %7 = vector.broadcast %6 : vector<1x2048xf32> to vector<32x2048xf32>
    %8 = arith.addf %5, %7 : vector<32x2048xf32>
    %c0_9 = arith.constant 0 : index
    %c0_10 = arith.constant 0 : index
    %9 = vector.load %arg13[%c0_9, %c0_10] : memref<32x2048xf32, #tpu.memory_space<vmem>>, vector<32x2048xf32>
    tpu.vector_store %arg13[%c0_9, %c0_10], %8 {strides = array<i32>} : memref<32x2048xf32, #tpu.memory_space<vmem>>, vector<32x2048xf32>,
    %c0_11 = arith.constant 0 : index
    %c0_12 = arith.constant 0 : index
    %10 = vector.load %arg6[%c0_11, %c0_12] : memref<256x256xf32, #tpu.memory_space<vmem>>, vector<256x256xf32>
    %cst_13 = arith.constant dense<0.000000e+00> : vector<32x256xf32>
    %11 = tpu.matmul %1, %10, %cst_13 {dimension_numbers = #tpu.dot_dimension_numbers<[1], [0], [0], [1], [0, 0, 1, 1], [], []>} : vector<32x256xf32>, vector<256x256xf32>, vector<32x256xf32> -> vector<32x256xf32>
    %c0_14 = arith.constant 0 : index
    %c0_15 = arith.constant 0 : index
    %12 = vector.load %arg7[%c0_14, %c0_15] : memref<1x256xf32, #tpu.memory_space<vmem>>, vector<1x256xf32>
    %13 = vector.broadcast %12 : vector<1x256xf32> to vector<32x256xf32>
    %14 = arith.addf %11, %13 : vector<32x256xf32>
    %15 = vector.extract_strided_slice %14 {offsets = [0, 0], sizes = [32, 128], strides = [1, 1]} : vector<32x256xf32> to vector<32x128xf32>
    %16 = vector.extract_strided_slice %14 {offsets = [0, 128], sizes = [32, 128], strides = [1, 1]} : vector<32x256xf32> to vector<32x128xf32>
    %17 = arith.mulf %15, %2 : vector<32x128xf32>
    %18 = arith.mulf %16, %3 : vector<32x128xf32>
    %19 = arith.subf %17, %18 : vector<32x128xf32>
    %20 = arith.mulf %15, %3 : vector<32x128xf32>
    %21 = arith.mulf %16, %2 : vector<32x128xf32>
    %22 = arith.addf %20, %21 : vector<32x128xf32>
    %23 = tpu.concatenate %19, %22 in 1 : vector<32x128xf32>, vector<32x128xf32> -> vector<32x256xf32>
    %c0_16 = arith.constant 0 : index
    %c0_17 = arith.constant 0 : index
    %24 = vector.load %arg14[%c0_16, %c0_17] : memref<32x256xf32, #tpu.memory_space<vmem>>, vector<32x256xf32>
    tpu.vector_store %arg14[%c0_16, %c0_17], %23 {strides = array<i32>} : memref<32x256xf32, #tpu.memory_space<vmem>>, vector<32x256xf32>,
    %c0_18 = arith.constant 0 : index
    %c0_19 = arith.constant 0 : index
    %25 = vector.load %arg8[%c0_18, %c0_19] : memref<256x256xf32, #tpu.memory_space<vmem>>, vector<256x256xf32>
    %cst_20 = arith.constant dense<0.000000e+00> : vector<32x256xf32>
    %26 = tpu.matmul %1, %25, %cst_20 {dimension_numbers = #tpu.dot_dimension_numbers<[1], [0], [0], [1], [0, 0, 1, 1], [], []>} : vector<32x256xf32>, vector<256x256xf32>, vector<32x256xf32> -> vector<32x256xf32>
    %c0_21 = arith.constant 0 : index
    %c0_22 = arith.constant 0 : index
    %27 = vector.load %arg9[%c0_21, %c0_22] : memref<1x256xf32, #tpu.memory_space<vmem>>, vector<1x256xf32>
    %28 = vector.broadcast %27 : vector<1x256xf32> to vector<32x256xf32>
    %29 = arith.addf %26, %28 : vector<32x256xf32>
    %30 = arith.mulf %29, %29 : vector<32x256xf32>
    %cst_23 = arith.constant dense<0.000000e+00> : vector<32xf32>
    %31 = vector.multi_reduction <add>, %30, %cst_23 [1] : vector<32x256xf32> to vector<32xf32>
    %32 = vector.shape_cast %31 : vector<32xf32> to vector<32x1xf32>
    %cst_24 = arith.constant 2.560000e+02 : f32
    %33 = vector.broadcast %cst_24 : f32 to vector<32x1xf32>
    %34 = arith.divf %32, %33 : vector<32x1xf32>
    %cst_25 = arith.constant 1.000000e-03 : f32
    %35 = vector.broadcast %cst_25 : f32 to vector<32x1xf32>
    %36 = arith.addf %34, %35 : vector<32x1xf32>
    %37 = math.rsqrt %36 : vector<32x1xf32>
    %38 = vector.broadcast %37 : vector<32x1xf32> to vector<32x256xf32>
    %39 = arith.mulf %29, %38 : vector<32x256xf32>
    %c0_26 = arith.constant 0 : index
    %c0_27 = arith.constant 0 : index
    %40 = vector.load %arg12[%c0_26, %c0_27] : memref<1x256xf32, #tpu.memory_space<vmem>>, vector<1x256xf32>
    %41 = vector.broadcast %40 : vector<1x256xf32> to vector<32x256xf32>
    %42 = arith.mulf %39, %41 : vector<32x256xf32>
    %c0_28 = arith.constant 0 : index
    %c0_29 = arith.constant 0 : index
    %43 = vector.load %arg15[%c0_28, %c0_29] : memref<32x256xf32, #tpu.memory_space<vmem>>, vector<32x256xf32>
    tpu.vector_store %arg15[%c0_28, %c0_29], %42 {strides = array<i32>} : memref<32x256xf32, #tpu.memory_space<vmem>>, vector<32x256xf32>,
    %c0_30 = arith.constant 0 : index
    %c0_31 = arith.constant 0 : index
    %44 = vector.load %arg10[%c0_30, %c0_31] : memref<256x32xf32, #tpu.memory_space<vmem>>, vector<256x32xf32>
    %cst_32 = arith.constant dense<0.000000e+00> : vector<32x32xf32>
    %45 = tpu.matmul %1, %44, %cst_32 {dimension_numbers = #tpu.dot_dimension_numbers<[1], [0], [0], [1], [0, 0, 1, 1], [], []>} : vector<32x256xf32>, vector<256x32xf32>, vector<32x32xf32> -> vector<32x32xf32>
    %c0_33 = arith.constant 0 : index
    %c0_34 = arith.constant 0 : index
    %46 = vector.load %arg11[%c0_33, %c0_34] : memref<1x32xf32, #tpu.memory_space<vmem>>, vector<1x32xf32>
    %47 = vector.broadcast %46 : vector<1x32xf32> to vector<32x32xf32>
    %48 = arith.addf %45, %47 : vector<32x32xf32>
    %49 = vector.extract_strided_slice %48 {offsets = [0, 0], sizes = [32, 16], strides = [1, 1]} : vector<32x32xf32> to vector<32x16xf32>
    %50 = vector.extract_strided_slice %48 {offsets = [0, 16], sizes = [32, 16], strides = [1, 1]} : vector<32x32xf32> to vector<32x16xf32>
    %51 = vector.extract_strided_slice %2 {offsets = [0, 0], sizes = [32, 16], strides = [1, 1]} : vector<32x128xf32> to vector<32x16xf32>
    %52 = vector.extract_strided_slice %3 {offsets = [0, 0], sizes = [32, 16], strides = [1, 1]} : vector<32x128xf32> to vector<32x16xf32>
    %53 = arith.mulf %49, %51 : vector<32x16xf32>
    %54 = arith.mulf %50, %52 : vector<32x16xf32>
    %55 = arith.subf %53, %54 : vector<32x16xf32>
    %56 = arith.mulf %49, %52 : vector<32x16xf32>
    %57 = arith.mulf %50, %51 : vector<32x16xf32>
    %58 = arith.addf %56, %57 : vector<32x16xf32>
    %59 = tpu.concatenate %55, %58 in 1 : vector<32x16xf32>, vector<32x16xf32> -> vector<32x32xf32>
    %c0_35 = arith.constant 0 : index
    %c0_36 = arith.constant 0 : index
    %60 = vector.load %arg16[%c0_35, %c0_36] : memref<32x32xf32, #tpu.memory_space<vmem>>, vector<32x32xf32>
    tpu.vector_store %arg16[%c0_35, %c0_36], %59 {strides = array<i32>} : memref<32x32xf32, #tpu.memory_space<vmem>>, vector<32x32xf32>,
    return
  }
  func.func @transform_0(%arg0: i32) -> (i32, i32) {
    %c0_i32 = arith.constant 0 : i32
    %c0_i32_0 = arith.constant 0 : i32
    return %arg0, %c0_i32 : i32, i32
  }
  func.func @transform_1(%arg0: i32) -> (i32, i32) {
    %c0_i32 = arith.constant 0 : i32
    %c0_i32_0 = arith.constant 0 : i32
    return %arg0, %c0_i32 : i32, i32
  }
  func.func @transform_2(%arg0: i32) -> (i32, i32) {
    %c0_i32 = arith.constant 0 : i32
    %c0_i32_0 = arith.constant 0 : i32
    return %arg0, %c0_i32 : i32, i32
  }
  func.func @transform_3(%arg0: i32) -> (i32, i32) {
    %c0_i32 = arith.constant 0 : i32
    %c0_i32_0 = arith.constant 0 : i32
    %c0_i32_1 = arith.constant 0 : i32
    return %c0_i32, %c0_i32_0 : i32, i32
  }
  func.func @transform_4(%arg0: i32) -> (i32, i32) {
    %c0_i32 = arith.constant 0 : i32
    %c0_i32_0 = arith.constant 0 : i32
    %c0_i32_1 = arith.constant 0 : i32
    return %c0_i32, %c0_i32_0 : i32, i32
  }
  func.func @transform_5(%arg0: i32) -> (i32, i32) {
    %c0_i32 = arith.constant 0 : i32
    %c0_i32_0 = arith.constant 0 : i32
    %c0_i32_1 = arith.constant 0 : i32
    return %c0_i32, %c0_i32_0 : i32, i32
  }
  func.func @transform_6(%arg0: i32) -> (i32, i32) {
    %c0_i32 = arith.constant 0 : i32
    %c0_i32_0 = arith.constant 0 : i32
    %c0_i32_1 = arith.constant 0 : i32
    return %c0_i32, %c0_i32_0 : i32, i32
  }
  func.func @transform_7(%arg0: i32) -> (i32, i32) {
    %c0_i32 = arith.constant 0 : i32
    %c0_i32_0 = arith.constant 0 : i32
    %c0_i32_1 = arith.constant 0 : i32
    return %c0_i32, %c0_i32_0 : i32, i32
  }
  func.func @transform_8(%arg0: i32) -> (i32, i32) {
    %c0_i32 = arith.constant 0 : i32
    %c0_i32_0 = arith.constant 0 : i32
    %c0_i32_1 = arith.constant 0 : i32
    return %c0_i32, %c0_i32_0 : i32, i32
  }
  func.func @transform_9(%arg0: i32) -> (i32, i32) {
    %c0_i32 = arith.constant 0 : i32
    %c0_i32_0 = arith.constant 0 : i32
    %c0_i32_1 = arith.constant 0 : i32
    return %c0_i32, %c0_i32_0 : i32, i32
  }
  func.func @transform_10(%arg0: i32) -> (i32, i32) {
    %c0_i32 = arith.constant 0 : i32
    %c0_i32_0 = arith.constant 0 : i32
    %c0_i32_1 = arith.constant 0 : i32
    return %c0_i32, %c0_i32_0 : i32, i32
  }
  func.func @transform_11(%arg0: i32) -> (i32, i32) {
    %c0_i32 = arith.constant 0 : i32
    %c0_i32_0 = arith.constant 0 : i32
    %c0_i32_1 = arith.constant 0 : i32
    return %c0_i32, %c0_i32_0 : i32, i32
  }
  func.func @transform_12(%arg0: i32) -> (i32, i32) {
    %c0_i32 = arith.constant 0 : i32
    %c0_i32_0 = arith.constant 0 : i32
    return %arg0, %c0_i32 : i32, i32
  }
  func.func @transform_13(%arg0: i32) -> (i32, i32) {
    %c0_i32 = arith.constant 0 : i32
    %c0_i32_0 = arith.constant 0 : i32
    return %arg0, %c0_i32 : i32, i32
  }
  func.func @transform_14(%arg0: i32) -> (i32, i32) {
    %c0_i32 = arith.constant 0 : i32
    %c0_i32_0 = arith.constant 0 : i32
    return %arg0, %c0_i32 : i32, i32
  }
  func.func @transform_15(%arg0: i32) -> (i32, i32) {
    %c0_i32 = arith.constant 0 : i32
    %c0_i32_0 = arith.constant 0 : i32
    return %arg0, %c0_i32 : i32, i32
  }
}

</mosaic_0001>

<llo_original>
// kernel: tpu_custom_call.1
$region0: #{tpu_custom_call.1}
  #allocation0 [shape = 'u32[]', space=smem, size = 0x4, offset = 0x4, fixed_abs, tag = 'smem constant byte address 0x4 - core index']
  #allocation1 [shape = 'u32[144,128]{1,0:T(1,128)}', space=vmem, size = 0x12000, scoped, tag = 'internal scratch']
  %s0 = inlined_call_operand.hbm [shape: bf16[32,256], index: 0, kind: input, shape index: {}]
  %s1 = inlined_call_operand.hbm [shape: f32[32,128], index: 1, kind: input, shape index: {}]
  %s2 = inlined_call_operand.hbm [shape: f32[32,128], index: 2, kind: input, shape index: {}]
  %s3 = inlined_call_operand.hbm [shape: f32[256,2048], index: 3, kind: input, shape index: {}]
  %s4 = inlined_call_operand.hbm [shape: f32[1,2048], index: 4, kind: input, shape index: {}]
  %s5 = inlined_call_operand.hbm [shape: f32[256,256], index: 5, kind: input, shape index: {}]
  %s6 = inlined_call_operand.hbm [shape: f32[1,256], index: 6, kind: input, shape index: {}]
  %s7 = inlined_call_operand.hbm [shape: f32[256,256], index: 7, kind: input, shape index: {}]
  %s8 = inlined_call_operand.hbm [shape: f32[1,256], index: 8, kind: input, shape index: {}]
  %s9 = inlined_call_operand.vmem [shape: f32[256,32], index: 9, kind: input, shape index: {}]
  %s10 = inlined_call_operand.hbm [shape: f32[1,32], index: 10, kind: input, shape index: {}]
  %s11 = inlined_call_operand.hbm [shape: f32[1,256], index: 11, kind: input, shape index: {}]
  %s12 = inlined_call_operand.hbm [shape: f32[32,2048], index: 12, kind: output, shape index: {0}]
  %s13 = inlined_call_operand.hbm [shape: f32[32,256], index: 13, kind: output, shape index: {1}]
  %s14 = inlined_call_operand.hbm [shape: f32[32,256], index: 14, kind: output, shape index: {2}]
  %s15 = inlined_call_operand.hbm [shape: f32[32,32], index: 15, kind: output, shape index: {3}]
  %16 = xla_tuple %s12, %s13, %s14, %s15
  %s17 = sld [smem:[#allocation0]]
  $region126: #{tpu_custom_call.1} parent=0
    _
  %s19 = ssub.s32 1, %s17
  %s20 = scalar_select 0, %s19, %s17
  $region1: #{tpu_custom_call.1} parent=0
    #allocation2 [shape = 'u8[16384]{0}', space=vmem, size = 0x4000, scoped, tag = 'input window, operand 0, single buffered']
    #allocation3 [shape = 's32[1]{0}', space=sflag, size = 0x4, scoped, tag = 'scoped memory for tpu_custom_call.1']
    #allocation4 [shape = 's32[1]{0}', space=sflag, size = 0x4, scoped, tag = 'scoped memory for tpu_custom_call.1']
    #allocation5 [shape = 'u8[16384]{0}', space=vmem, size = 0x4000, scoped, tag = 'input window, operand 1, single buffered']
    #allocation6 [shape = 's32[1]{0}', space=sflag, size = 0x4, scoped, tag = 'scoped memory for tpu_custom_call.1']
    #allocation7 [shape = 'u8[16384]{0}', space=vmem, size = 0x4000, scoped, tag = 'input window, operand 2, single buffered']
    #allocation8 [shape = 'u8[2097152]{0}', space=vmem, size = 0x200000, scoped, tag = 'input window, operand 3, single buffered']
    #allocation9 [shape = 's32[1]{0}', space=sflag, size = 0x4, scoped, tag = 'scoped memory for tpu_custom_call.1']
    #allocation10 [shape = 'u8[8192]{0}', space=vmem, size = 0x2000, scoped, tag = 'input window, operand 4, single buffered']
    #allocation11 [shape = 'u8[262144]{0}', space=vmem, size = 0x40000, scoped, tag = 'input window, operand 5, single buffered']
    #allocation12 [shape = 's32[1]{0}', space=sflag, size = 0x4, scoped, tag = 'scoped memory for tpu_custom_call.1']
    #allocation13 [shape = 'u8[1024]{0}', space=vmem, size = 0x400, scoped, tag = 'input window, operand 6, single buffered']
    #allocation14 [shape = 'u8[262144]{0}', space=vmem, size = 0x40000, scoped, tag = 'input window, operand 7, single buffered']
    #allocation15 [shape = 's32[1]{0}', space=sflag, size = 0x4, scoped, tag = 'scoped memory for tpu_custom_call.1']
    #allocation16 [shape = 'u8[1024]{0}', space=vmem, size = 0x400, scoped, tag = 'input window, operand 8, single buffered']
    #allocation17 [shape = 'u8[512]{0}', space=vmem, size = 0x400, scoped, tag = 'input window, operand 10, single buffered']
    #allocation18 [shape = 's32[1]{0}', space=sflag, size = 0x4, scoped, tag = 'scoped memory for tpu_custom_call.1']
    #allocation19 [shape = 'u8[1024]{0}', space=vmem, size = 0x400, scoped, tag = 'input window, operand 11, single buffered']
    #allocation20 [shape = 'u8[262144]{0}', space=vmem, size = 0x40000, scoped, tag = 'output window, operand 0, single buffered']
    #allocation21 [shape = 'u8[32768]{0}', space=vmem, size = 0x8000, scoped, tag = 'output window, operand 1, single buffered']
    #allocation22 [shape = 's32[1]{0}', space=sflag, size = 0x4, scoped, tag = 'scoped memory for tpu_custom_call.1']
    #allocation23 [shape = 'u8[32768]{0}', space=vmem, size = 0x8000, scoped, tag = 'output window, operand 2, single buffered']
    #allocation24 [shape = 'u8[16384]{0}', space=vmem, size = 0x4000, scoped, tag = 'output window, operand 3, single buffered']
    #allocation25 [shape = 's32[1]{0}', space=sflag, size = 0x4, scoped, tag = 'scoped memory for tpu_custom_call.1']
    %21 = vsyncpa [#allocation3], 0
    %22 = vsyncpa [#allocation6], 0
    %23 = vsyncpa [#allocation9], 0
    %24 = vsyncpa [#allocation12], 0
    %25 = vsyncpa [#allocation15], 0
    %26 = vsyncpa [#allocation18], 0
    %27 = vsyncpa [#allocation4], 0
    %28 = vsyncpa [#allocation22], 0
    %29 = vsyncpa [#allocation25], 0
    // Predicated region
    $region2: #{tpu_custom_call.1} parent=1 // pred_check
      _
    $region3: #{tpu_custom_call.1} parent=1 // pred_check_branch
      %31 = sbr.rel (0) target = $region5
    $region4: #{tpu_custom_call.1} parent=1 // pred_region
      %s33 = ssub.s32 512, 512
      %34 = vsyncadd [#allocation3], %s33
      %s35 = sshll.u32 [#allocation2], 4
      %s36 = int_to_ptr.vmem [resolvable:$true] %s35
      %41 = dma.hbm_to_vmem [thread:$0]  %s0, 512, %s36, [#allocation3], 128, 128, 8
    $region5: #{tpu_custom_call.1} parent=1 // pred_fallthru
      _
    // Predicated region
    $region6: #{tpu_custom_call.1} parent=1 // pred_check
      _
    $region7: #{tpu_custom_call.1} parent=1 // pred_check_branch
      %43 = sbr.rel (0) target = $region9
    $region8: #{tpu_custom_call.1} parent=1 // pred_region
      %s45 = ssub.s32 512, 512
      %46 = vsyncadd [#allocation6], %s45
      %s47 = sshll.u32 [#allocation5], 4
      %s48 = int_to_ptr.vmem [resolvable:$true] %s47
      %53 = dma.hbm_to_vmem [thread:$0]  %s1, 512, %s48, [#allocation6], 128, 128, 8
    $region9: #{tpu_custom_call.1} parent=1 // pred_fallthru
      _
    // Predicated region
    $region10: #{tpu_custom_call.1} parent=1 // pred_check
      _
    $region11: #{tpu_custom_call.1} parent=1 // pred_check_branch
      %55 = sbr.rel (0) target = $region13
    $region12: #{tpu_custom_call.1} parent=1 // pred_region
      %s57 = ssub.s32 512, 512
      %58 = vsyncadd [#allocation6], %s57
      %s59 = sshll.u32 [#allocation7], 4
      %s60 = int_to_ptr.vmem [resolvable:$true] %s59
      %65 = dma.hbm_to_vmem [thread:$0]  %s2, 512, %s60, [#allocation6], 128, 128, 8
    $region13: #{tpu_custom_call.1} parent=1 // pred_fallthru
      _
    // Predicated region
    $region14: #{tpu_custom_call.1} parent=1 // pred_check
      _
    $region15: #{tpu_custom_call.1} parent=1 // pred_check_branch
      %67 = sbr.rel (0) target = $region17
    $region16: #{tpu_custom_call.1} parent=1 // pred_region
      %s69 = ssub.s32 65536, 65536
      %70 = vsyncadd [#allocation9], %s69
      %s71 = sshll.u32 [#allocation8], 4
      %s72 = int_to_ptr.vmem [resolvable:$true] %s71
      %77 = dma.hbm_to_vmem [thread:$0]  %s3, 65536, %s72, [#allocation9], 2048, 2048, 128
    $region17: #{tpu_custom_call.1} parent=1 // pred_fallthru
      _
    // Predicated region
    $region18: #{tpu_custom_call.1} parent=1 // pred_check
      _
    $region19: #{tpu_custom_call.1} parent=1 // pred_check_branch
      %79 = sbr.rel (0) target = $region21
    $region20: #{tpu_custom_call.1} parent=1 // pred_region
      %s81 = ssub.s32 256, 256
      %82 = vsyncadd [#allocation9], %s81
      %s84 = sshll.u32 [#allocation10], 4
      %s85 = int_to_ptr.vmem [resolvable:$true] %s84
      %87 = dma.hbm_to_vmem [thread:$0]  %s4, 256, %s85, [#allocation9]
    $region21: #{tpu_custom_call.1} parent=1 // pred_fallthru
      _
    // Predicated region
    $region22: #{tpu_custom_call.1} parent=1 // pred_check
      _
    $region23: #{tpu_custom_call.1} parent=1 // pred_check_branch
      %89 = sbr.rel (0) target = $region25
    $region24: #{tpu_custom_call.1} parent=1 // pred_region
      %s91 = ssub.s32 8192, 8192
      %92 = vsyncadd [#allocation12], %s91
      %s93 = sshll.u32 [#allocation11], 4
      %s94 = int_to_ptr.vmem [resolvable:$true] %s93
      %99 = dma.hbm_to_vmem [thread:$0]  %s5, 8192, %s94, [#allocation12], 256, 256, 16
    $region25: #{tpu_custom_call.1} parent=1 // pred_fallthru
      _
    // Predicated region
    $region26: #{tpu_custom_call.1} parent=1 // pred_check
      _
    $region27: #{tpu_custom_call.1} parent=1 // pred_check_branch
      %101 = sbr.rel (0) target = $region29
    $region28: #{tpu_custom_call.1} parent=1 // pred_region
      %s103 = ssub.s32 32, 32
      %104 = vsyncadd [#allocation12], %s103
      %s106 = sshll.u32 [#allocation13], 4
      %s107 = int_to_ptr.vmem [resolvable:$true] %s106
      %109 = dma.hbm_to_vmem [thread:$0]  %s6, 32, %s107, [#allocation12]
    $region29: #{tpu_custom_call.1} parent=1 // pred_fallthru
      _
    // Predicated region
    $region30: #{tpu_custom_call.1} parent=1 // pred_check
      _
    $region31: #{tpu_custom_call.1} parent=1 // pred_check_branch
      %111 = sbr.rel (0) target = $region33
    $region32: #{tpu_custom_call.1} parent=1 // pred_region
      %s113 = ssub.s32 8192, 8192
      %114 = vsyncadd [#allocation15], %s113
      %s115 = sshll.u32 [#allocation14], 4
      %s116 = int_to_ptr.vmem [resolvable:$true] %s115
      %121 = dma.hbm_to_vmem [thread:$0]  %s7, 8192, %s116, [#allocation15], 256, 256, 16
    $region33: #{tpu_custom_call.1} parent=1 // pred_fallthru
      _
    // Predicated region
    $region34: #{tpu_custom_call.1} parent=1 // pred_check
      _
    $region35: #{tpu_custom_call.1} parent=1 // pred_check_branch
      %123 = sbr.rel (0) target = $region37
    $region36: #{tpu_custom_call.1} parent=1 // pred_region
      %s125 = ssub.s32 32, 32
      %126 = vsyncadd [#allocation15], %s125
      %s128 = sshll.u32 [#allocation16], 4
      %s129 = int_to_ptr.vmem [resolvable:$true] %s128
      %131 = dma.hbm_to_vmem [thread:$0]  %s8, 32, %s129, [#allocation15]
    $region37: #{tpu_custom_call.1} parent=1 // pred_fallthru
      _
    // Predicated region
    $region38: #{tpu_custom_call.1} parent=1 // pred_check
      _
    $region39: #{tpu_custom_call.1} parent=1 // pred_check_branch
      %133 = sbr.rel (0) target = $region41
    $region40: #{tpu_custom_call.1} parent=1 // pred_region
      _
    $region41: #{tpu_custom_call.1} parent=1 // pred_fallthru
      _
    // Predicated region
    $region42: #{tpu_custom_call.1} parent=1 // pred_check
      _
    $region43: #{tpu_custom_call.1} parent=1 // pred_check_branch
      %135 = sbr.rel (0) target = $region45
    $region44: #{tpu_custom_call.1} parent=1 // pred_region
      %s137 = ssub.s32 16, 16
      %138 = vsyncadd [#allocation18], %s137
      %s140 = sshll.u32 [#allocation17], 4
      %s141 = int_to_ptr.vmem [resolvable:$true] %s140
      %143 = dma.hbm_to_vmem [thread:$0]  %s10, 16, %s141, [#allocation18]
    $region45: #{tpu_custom_call.1} parent=1 // pred_fallthru
      _
    // Predicated region
    $region46: #{tpu_custom_call.1} parent=1 // pred_check
      _
    $region47: #{tpu_custom_call.1} parent=1 // pred_check_branch
      %145 = sbr.rel (0) target = $region49
    $region48: #{tpu_custom_call.1} parent=1 // pred_region
      %s147 = ssub.s32 32, 32
      %148 = vsyncadd [#allocation18], %s147
      %s150 = sshll.u32 [#allocation19], 4
      %s151 = int_to_ptr.vmem [resolvable:$true] %s150
      %153 = dma.hbm_to_vmem [thread:$0]  %s11, 32, %s151, [#allocation18]
    $region49: #{tpu_custom_call.1} parent=1 // pred_fallthru
      _
    // Predicated region
    $region50: #{tpu_custom_call.1} parent=1 // pred_check
      _
    $region51: #{tpu_custom_call.1} parent=1 // pred_check_branch
      %155 = sbr.rel (0) target = $region53
    $region52: #{tpu_custom_call.1} parent=1 // pred_region
      %156 = dma.done [#allocation3], 512
    $region53: #{tpu_custom_call.1} parent=1 // pred_fallthru
      _
    // Predicated region
    $region54: #{tpu_custom_call.1} parent=1 // pred_check
      _
    $region55: #{tpu_custom_call.1} parent=1 // pred_check_branch
      %158 = sbr.rel (0) target = $region57
    $region56: #{tpu_custom_call.1} parent=1 // pred_region
      %159 = dma.done [#allocation6], 512
    $region57: #{tpu_custom_call.1} parent=1 // pred_fallthru
      _
    // Predicated region
    $region58: #{tpu_custom_call.1} parent=1 // pred_check
      _
    $region59: #{tpu_custom_call.1} parent=1 // pred_check_branch
      %161 = sbr.rel (0) target = $region61
    $region60: #{tpu_custom_call.1} parent=1 // pred_region
      %162 = dma.done [#allocation6], 512
    $region61: #{tpu_custom_call.1} parent=1 // pred_fallthru
      _
    // Predicated region
    $region62: #{tpu_custom_call.1} parent=1 // pred_check
      _
    $region63: #{tpu_custom_call.1} parent=1 // pred_check_branch
      %164 = sbr.rel (0) target = $region65
    $region64: #{tpu_custom_call.1} parent=1 // pred_region
      %165 = dma.done [#allocation9], 65536
    $region65: #{tpu_custom_call.1} parent=1 // pred_fallthru
      _
    // Predicated region
    $region66: #{tpu_custom_call.1} parent=1 // pred_check
      _
    $region67: #{tpu_custom_call.1} parent=1 // pred_check_branch
      %167 = sbr.rel (0) target = $region69
    $region68: #{tpu_custom_call.1} parent=1 // pred_region
      %168 = dma.done [#allocation9], 256
    $region69: #{tpu_custom_call.1} parent=1 // pred_fallthru
      _
    // Predicated region
    $region70: #{tpu_custom_call.1} parent=1 // pred_check
      _
    $region71: #{tpu_custom_call.1} parent=1 // pred_check_branch
      %170 = sbr.rel (0) target = $region73
    $region72: #{tpu_custom_call.1} parent=1 // pred_region
      %171 = dma.done [#allocation12], 8192
    $region73: #{tpu_custom_call.1} parent=1 // pred_fallthru
      _
    // Predicated region
    $region74: #{tpu_custom_call.1} parent=1 // pred_check
      _
    $region75: #{tpu_custom_call.1} parent=1 // pred_check_branch
      %173 = sbr.rel (0) target = $region77
    $region76: #{tpu_custom_call.1} parent=1 // pred_region
      %174 = dma.done [#allocation12], 32
    $region77: #{tpu_custom_call.1} parent=1 // pred_fallthru
      _
    // Predicated region
    $region78: #{tpu_custom_call.1} parent=1 // pred_check
      _
    $region79: #{tpu_custom_call.1} parent=1 // pred_check_branch
      %176 = sbr.rel (0) target = $region81
    $region80: #{tpu_custom_call.1} parent=1 // pred_region
      %177 = dma.done [#allocation15], 8192
    $region81: #{tpu_custom_call.1} parent=1 // pred_fallthru
      _
    // Predicated region
    $region82: #{tpu_custom_call.1} parent=1 // pred_check
      _
    $region83: #{tpu_custom_call.1} parent=1 // pred_check_branch
      %179 = sbr.rel (0) target = $region85
    $region84: #{tpu_custom_call.1} parent=1 // pred_region
      %180 = dma.done [#allocation15], 32
    $region85: #{tpu_custom_call.1} parent=1 // pred_fallthru
      _
    // Predicated region
    $region86: #{tpu_custom_call.1} parent=1 // pred_check
      _
    $region87: #{tpu_custom_call.1} parent=1 // pred_check_branch
      %182 = sbr.rel (0) target = $region89
    $region88: #{tpu_custom_call.1} parent=1 // pred_region
      %183 = dma.done [#allocation18], 16
    $region89: #{tpu_custom_call.1} parent=1 // pred_fallthru
      _
    // Predicated region
    $region90: #{tpu_custom_call.1} parent=1 // pred_check
      _
    $region91: #{tpu_custom_call.1} parent=1 // pred_check_branch
      %185 = sbr.rel (0) target = $region93
    $region92: #{tpu_custom_call.1} parent=1 // pred_region
      %186 = dma.done [#allocation18], 32
    $region93: #{tpu_custom_call.1} parent=1 // pred_fallthru
      _
    %v187 = vld [vmem:[#allocation2] sm:$0xff]
    %v188 = vld [vmem:[#allocation2 + $0x8] sm:$0xff]
    %v189 = vld [vmem:[#allocation2 + $0x10] sm:$0xff]
    %v190 = vld [vmem:[#allocation2 + $0x18] sm:$0xff]
    %v191 = vunpack.c.l.bf16 %v187
    %v192 = vunpack.c.h.bf16 %v187
    %v193 = vunpack.c.l.bf16 %v188
    %v194 = vunpack.c.h.bf16 %v188
    %v195 = vunpack.c.l.bf16 %v189
    %v196 = vunpack.c.h.bf16 %v189
    %v197 = vunpack.c.l.bf16 %v190
    %v198 = vunpack.c.h.bf16 %v190
    %v199 = vld [vmem:[#allocation5] sm:$0xff]
    %v200 = vld [vmem:[#allocation5 + $0x8] sm:$0xff]
    %v201 = vld [vmem:[#allocation5 + $0x10] sm:$0xff]
    %v202 = vld [vmem:[#allocation5 + $0x18] sm:$0xff]
    %v203 = vld [vmem:[#allocation7] sm:$0xff]
    %v204 = vld [vmem:[#allocation7 + $0x8] sm:$0xff]
    %v205 = vld [vmem:[#allocation7 + $0x10] sm:$0xff]
    %v206 = vld [vmem:[#allocation7 + $0x18] sm:$0xff]
    %v207 = vld [vmem:[#allocation8] sm:$0xff]
    %v208 = vld [vmem:[#allocation8 + $0x8] sm:$0xff]
    %v209 = vld [vmem:[#allocation8 + $0x10] sm:$0xff]
    %v210 = vld [vmem:[#allocation8 + $0x18] sm:$0xff]
    %v211 = vld [vmem:[#allocation8 + $0x20] sm:$0xff]
    %v212 = vld [vmem:[#allocation8 + $0x28] sm:$0xff]
    %v213 = vld [vmem:[#allocation8 + $0x30] sm:$0xff]
    %v214 = vld [vmem:[#allocation8 + $0x38] sm:$0xff]
    %v215 = vld [vmem:[#allocation8 + $0x40] sm:$0xff]
    %v216 = vld [vmem:[#allocation8 + $0x48] sm:$0xff]
    %v217 = vld [vmem:[#allocation8 + $0x50] sm:$0xff]
    %v218 = vld [vmem:[#allocation8 + $0x58] sm:$0xff]
    %v219 = vld [vmem:[#allocation8 + $0x60] sm:$0xff]
    %v220 = vld [vmem:[#allocation8 + $0x68] sm:$0xff]
    %v221 = vld [vmem:[#allocation8 + $0x70] sm:$0xff]
    %v222 = vld [vmem:[#allocation8 + $0x78] sm:$0xff]
    %v223 = vld [vmem:[#allocation8 + $0x80] sm:$0xff]
    %v224 = vld [vmem:[#allocation8 + $0x88] sm:$0xff]
    %v225 = vld [vmem:[#allocation8 + $0x90] sm:$0xff]
    %v226 = vld [vmem:[#allocation8 + $0x98] sm:$0xff]
    %v227 = vld [vmem:[#allocation8 + $0xa0] sm:$0xff]
    %v228 = vld [vmem:[#allocation8 + $0xa8] sm:$0xff]
    %v229 = vld [vmem:[#allocation8 + $0xb0] sm:$0xff]
    %v230 = vld [vmem:[#allocation8 + $0xb8] sm:$0xff]
    %v231 = vld [vmem:[#allocation8 + $0xc0] sm:$0xff]
    %v232 = vld [vmem:[#allocation8 + $0xc8] sm:$0xff]
    %v233 = vld [vmem:[#allocation8 + $0xd0] sm:$0xff]
    %v234 = vld [vmem:[#allocation8 + $0xd8] sm:$0xff]
    %v235 = vld [vmem:[#allocation8 + $0xe0] sm:$0xff]
    %v236 = vld [vmem:[#allocation8 + $0xe8] sm:$0xff]
    %v237 = vld [vmem:[#allocation8 + $0xf0] sm:$0xff]
    %v238 = vld [vmem:[#allocation8 + $0xf8] sm:$0xff]
    %v239 = vld [vmem:[#allocation8 + $0x100] sm:$0xff]
    %v240 = vld [vmem:[#allocation8 + $0x108] sm:$0xff]
    %v241 = vld [vmem:[#allocation8 + $0x110] sm:$0xff]
    %v242 = vld [vmem:[#allocation8 + $0x118] sm:$0xff]
    %v243 = vld [vmem:[#allocation8 + $0x120] sm:$0xff]
    %v244 = vld [vmem:[#allocation8 + $0x128] sm:$0xff]
    %v245 = vld [vmem:[#allocation8 + $0x130] sm:$0xff]
    %v246 = vld [vmem:[#allocation8 + $0x138] sm:$0xff]
    %v247 = vld [vmem:[#allocation8 + $0x140] sm:$0xff]
    %v248 = vld [vmem:[#allocation8 + $0x148] sm:$0xff]
    %v249 = vld [vmem:[#allocation8 + $0x150] sm:$0xff]
    %v250 = vld [vmem:[#allocation8 + $0x158] sm:$0xff]
    %v251 = vld [vmem:[#allocation8 + $0x160] sm:$0xff]
    %v252 = vld [vmem:[#allocation8 + $0x168] sm:$0xff]
    %v253 = vld [vmem:[#allocation8 + $0x170] sm:$0xff]
    %v254 = vld [vmem:[#allocation8 + $0x178] sm:$0xff]
    %v255 = vld [vmem:[#allocation8 + $0x180] sm:$0xff]
    %v256 = vld [vmem:[#allocation8 + $0x188] sm:$0xff]
    %v257 = vld [vmem:[#allocation8 + $0x190] sm:$0xff]
    %v258 = vld [vmem:[#allocation8 + $0x198] sm:$0xff]
    %v259 = vld [vmem:[#allocation8 + $0x1a0] sm:$0xff]
    %v260 = vld [vmem:[#allocation8 + $0x1a8] sm:$0xff]
    %v261 = vld [vmem:[#allocation8 + $0x1b0] sm:$0xff]
    %v262 = vld [vmem:[#allocation8 + $0x1b8] sm:$0xff]
    %v263 = vld [vmem:[#allocation8 + $0x1c0] sm:$0xff]
    %v264 = vld [vmem:[#allocation8 + $0x1c8] sm:$0xff]
    %v265 = vld [vmem:[#allocation8 + $0x1d0] sm:$0xff]
    %v266 = vld [vmem:[#allocation8 + $0x1d8] sm:$0xff]
    %v267 = vld [vmem:[#allocation8 + $0x1e0] sm:$0xff]
    %v268 = vld [vmem:[#allocation8 + $0x1e8] sm:$0xff]
    %v269 = vld [vmem:[#allocation8 + $0x1f0] sm:$0xff]
    %v270 = vld [vmem:[#allocation8 + $0x1f8] sm:$0xff]
    %v271 = vld [vmem:[#allocation8 + $0x200] sm:$0xff]
    %v272 = vld [vmem:[#allocation8 + $0x208] sm:$0xff]
    %v273 = vld [vmem:[#allocation8 + $0x210] sm:$0xff]
    %v274 = vld [vmem:[#allocation8 + $0x218] sm:$0xff]
    %v275 = vld [vmem:[#allocation8 + $0x220] sm:$0xff]
    %v276 = vld [vmem:[#allocation8 + $0x228] sm:$0xff]
    %v277 = vld [vmem:[#allocation8 + $0x230] sm:$0xff]
    %v278 = vld [vmem:[#allocation8 + $0x238] sm:$0xff]
    %v279 = vld [vmem:[#allocation8 + $0x240] sm:$0xff]
    %v280 = vld [vmem:[#allocation8 + $0x248] sm:$0xff]
    %v281 = vld [vmem:[#allocation8 + $0x250] sm:$0xff]
    %v282 = vld [vmem:[#allocation8 + $0x258] sm:$0xff]
    %v283 = vld [vmem:[#allocation8 + $0x260] sm:$0xff]
    %v284 = vld [vmem:[#allocation8 + $0x268] sm:$0xff]
    %v285 = vld [vmem:[#allocation8 + $0x270] sm:$0xff]
    %v286 = vld [vmem:[#allocation8 + $0x278] sm:$0xff]
    %v287 = vld [vmem:[#allocation8 + $0x280] sm:$0xff]
    %v288 = vld [vmem:[#allocation8 + $0x288] sm:$0xff]
    %v289 = vld [vmem:[#allocation8 + $0x290] sm:$0xff]
    %v290 = vld [vmem:[#allocation8 + $0x298] sm:$0xff]
    %v291 = vld [vmem:[#allocation8 + $0x2a0] sm:$0xff]
    %v292 = vld [vmem:[#allocation8 + $0x2a8] sm:$0xff]
    %v293 = vld [vmem:[#allocation8 + $0x2b0] sm:$0xff]
    %v294 = vld [vmem:[#allocation8 + $0x2b8] sm:$0xff]
    %v295 = vld [vmem:[#allocation8 + $0x2c0] sm:$0xff]
    %v296 = vld [vmem:[#allocation8 + $0x2c8] sm:$0xff]
    %v297 = vld [vmem:[#allocation8 + $0x2d0] sm:$0xff]
    %v298 = vld [vmem:[#allocation8 + $0x2d8] sm:$0xff]
    %v299 = vld [vmem:[#allocation8 + $0x2e0] sm:$0xff]
    %v300 = vld [vmem:[#allocation8 + $0x2e8] sm:$0xff]
    %v301 = vld [vmem:[#allocation8 + $0x2f0] sm:$0xff]
    %v302 = vld [vmem:[#allocation8 + $0x2f8] sm:$0xff]
    %v303 = vld [vmem:[#allocation8 + $0x300] sm:$0xff]
    %v304 = vld [vmem:[#allocation8 + $0x308] sm:$0xff]
    %v305 = vld [vmem:[#allocation8 + $0x310] sm:$0xff]
    %v306 = vld [vmem:[#allocation8 + $0x318] sm:$0xff]
    %v307 = vld [vmem:[#allocation8 + $0x320] sm:$0xff]
    %v308 = vld [vmem:[#allocation8 + $0x328] sm:$0xff]
    %v309 = vld [vmem:[#allocation8 + $0x330] sm:$0xff]
    %v310 = vld [vmem:[#allocation8 + $0x338] sm:$0xff]
    %v311 = vld [vmem:[#allocation8 + $0x340] sm:$0xff]
    %v312 = vld [vmem:[#allocation8 + $0x348] sm:$0xff]
    %v313 = vld [vmem:[#allocation8 + $0x350] sm:$0xff]
    %v314 = vld [vmem:[#allocation8 + $0x358] sm:$0xff]
    %v315 = vld [vmem:[#allocation8 + $0x360] sm:$0xff]
    %v316 = vld [vmem:[#allocation8 + $0x368] sm:$0xff]
    %v317 = vld [vmem:[#allocation8 + $0x370] sm:$0xff]
    %v318 = vld [vmem:[#allocation8 + $0x378] sm:$0xff]
    %v319 = vld [vmem:[#allocation8 + $0x380] sm:$0xff]
    %v320 = vld [vmem:[#allocation8 + $0x388] sm:$0xff]
    %v321 = vld [vmem:[#allocation8 + $0x390] sm:$0xff]
    %v322 = vld [vmem:[#allocation8 + $0x398] sm:$0xff]
    %v323 = vld [vmem:[#allocation8 + $0x3a0] sm:$0xff]
    %v324 = vld [vmem:[#allocation8 + $0x3a8] sm:$0xff]
    %v325 = vld [vmem:[#allocation8 + $0x3b0] sm:$0xff]
    %v326 = vld [vmem:[#allocation8 + $0x3b8] sm:$0xff]
    %v327 = vld [vmem:[#allocation8 + $0x3c0] sm:$0xff]
    %v328 = vld [vmem:[#allocation8 + $0x3c8] sm:$0xff]
    %v329 = vld [vmem:[#allocation8 + $0x3d0] sm:$0xff]
    %v330 = vld [vmem:[#allocation8 + $0x3d8] sm:$0xff]
    %v331 = vld [vmem:[#allocation8 + $0x3e0] sm:$0xff]
    %v332 = vld [vmem:[#allocation8 + $0x3e8] sm:$0xff]
    %v333 = vld [vmem:[#allocation8 + $0x3f0] sm:$0xff]
    %v334 = vld [vmem:[#allocation8 + $0x3f8] sm:$0xff]
    %v335 = vld [vmem:[#allocation8 + $0x400] sm:$0xff]
    %v336 = vld [vmem:[#allocation8 + $0x408] sm:$0xff]
    %v337 = vld [vmem:[#allocation8 + $0x410] sm:$0xff]
    %v338 = vld [vmem:[#allocation8 + $0x418] sm:$0xff]
    %v339 = vld [vmem:[#allocation8 + $0x420] sm:$0xff]
    %v340 = vld [vmem:[#allocation8 + $0x428] sm:$0xff]
    %v341 = vld [vmem:[#allocation8 + $0x430] sm:$0xff]
    %v342 = vld [vmem:[#allocation8 + $0x438] sm:$0xff]
    %v343 = vld [vmem:[#allocation8 + $0x440] sm:$0xff]
    %v344 = vld [vmem:[#allocation8 + $0x448] sm:$0xff]
    %v345 = vld [vmem:[#allocation8 + $0x450] sm:$0xff]
    %v346 = vld [vmem:[#allocation8 + $0x458] sm:$0xff]
    %v347 = vld [vmem:[#allocation8 + $0x460] sm:$0xff]
    %v348 = vld [vmem:[#allocation8 + $0x468] sm:$0xff]
    %v349 = vld [vmem:[#allocation8 + $0x470] sm:$0xff]
    %v350 = vld [vmem:[#allocation8 + $0x478] sm:$0xff]
    %v351 = vld [vmem:[#allocation8 + $0x480] sm:$0xff]
    %v352 = vld [vmem:[#allocation8 + $0x488] sm:$0xff]
    %v353 = vld [vmem:[#allocation8 + $0x490] sm:$0xff]
    %v354 = vld [vmem:[#allocation8 + $0x498] sm:$0xff]
    %v355 = vld [vmem:[#allocation8 + $0x4a0] sm:$0xff]
    %v356 = vld [vmem:[#allocation8 + $0x4a8] sm:$0xff]
    %v357 = vld [vmem:[#allocation8 + $0x4b0] sm:$0xff]
    %v358 = vld [vmem:[#allocation8 + $0x4b8] sm:$0xff]
    %v359 = vld [vmem:[#allocation8 + $0x4c0] sm:$0xff]
    %v360 = vld [vmem:[#allocation8 + $0x4c8] sm:$0xff]
    %v361 = vld [vmem:[#allocation8 + $0x4d0] sm:$0xff]
    %v362 = vld [vmem:[#allocation8 + $0x4d8] sm:$0xff]
    %v363 = vld [vmem:[#allocation8 + $0x4e0] sm:$0xff]
    %v364 = vld [vmem:[#allocation8 + $0x4e8] sm:$0xff]
    %v365 = vld [vmem:[#allocation8 + $0x4f0] sm:$0xff]
    %v366 = vld [vmem:[#allocation8 + $0x4f8] sm:$0xff]
    %v367 = vld [vmem:[#allocation8 + $0x500] sm:$0xff]
    %v368 = vld [vmem:[#allocation8 + $0x508] sm:$0xff]
    %v369 = vld [vmem:[#allocation8 + $0x510] sm:$0xff]
    %v370 = vld [vmem:[#allocation8 + $0x518] sm:$0xff]
    %v371 = vld [vmem:[#allocation8 + $0x520] sm:$0xff]
    %v372 = vld [vmem:[#allocation8 + $0x528] sm:$0xff]
    %v373 = vld [vmem:[#allocation8 + $0x530] sm:$0xff]
    %v374 = vld [vmem:[#allocation8 + $0x538] sm:$0xff]
    %v375 = vld [vmem:[#allocation8 + $0x540] sm:$0xff]
    %v376 = vld [vmem:[#allocation8 + $0x548] sm:$0xff]
    %v377 = vld [vmem:[#allocation8 + $0x550] sm:$0xff]
    %v378 = vld [vmem:[#allocation8 + $0x558] sm:$0xff]
    %v379 = vld [vmem:[#allocation8 + $0x560] sm:$0xff]
    %v380 = vld [vmem:[#allocation8 + $0x568] sm:$0xff]
    %v381 = vld [vmem:[#allocation8 + $0x570] sm:$0xff]
    %v382 = vld [vmem:[#allocation8 + $0x578] sm:$0xff]
    %v383 = vld [vmem:[#allocation8 + $0x580] sm:$0xff]
    %v384 = vld [vmem:[#allocation8 + $0x588] sm:$0xff]
    %v385 = vld [vmem:[#allocation8 + $0x590] sm:$0xff]
    %v386 = vld [vmem:[#allocation8 + $0x598] sm:$0xff]
    %v387 = vld [vmem:[#allocation8 + $0x5a0] sm:$0xff]
    %v388 = vld [vmem:[#allocation8 + $0x5a8] sm:$0xff]
    %v389 = vld [vmem:[#allocation8 + $0x5b0] sm:$0xff]
    %v390 = vld [vmem:[#allocation8 + $0x5b8] sm:$0xff]
    %v391 = vld [vmem:[#allocation8 + $0x5c0] sm:$0xff]
    %v392 = vld [vmem:[#allocation8 + $0x5c8] sm:$0xff]
    %v393 = vld [vmem:[#allocation8 + $0x5d0] sm:$0xff]
    %v394 = vld [vmem:[#allocation8 + $0x5d8] sm:$0xff]
    %v395 = vld [vmem:[#allocation8 + $0x5e0] sm:$0xff]
    %v396 = vld [vmem:[#allocation8 + $0x5e8] sm:$0xff]
    %v397 = vld [vmem:[#allocation8 + $0x5f0] sm:$0xff]
    %v398 = vld [vmem:[#allocation8 + $0x5f8] sm:$0xff]
    %v399 = vld [vmem:[#allocation8 + $0x600] sm:$0xff]
    %v400 = vld [vmem:[#allocation8 + $0x608] sm:$0xff]
    %v401 = vld [vmem:[#allocation8 + $0x610] sm:$0xff]
    %v402 = vld [vmem:[#allocation8 + $0x618] sm:$0xff]
    %v403 = vld [vmem:[#allocation8 + $0x620] sm:$0xff]
    %v404 = vld [vmem:[#allocation8 + $0x628] sm:$0xff]
    %v405 = vld [vmem:[#allocation8 + $0x630] sm:$0xff]
    %v406 = vld [vmem:[#allocation8 + $0x638] sm:$0xff]
    %v407 = vld [vmem:[#allocation8 + $0x640] sm:$0xff]
    %v408 = vld [vmem:[#allocation8 + $0x648] sm:$0xff]
    %v409 = vld [vmem:[#allocation8 + $0x650] sm:$0xff]
    %v410 = vld [vmem:[#allocation8 + $0x658] sm:$0xff]
    %v411 = vld [vmem:[#allocation8 + $0x660] sm:$0xff]
    %v412 = vld [vmem:[#allocation8 + $0x668] sm:$0xff]
    %v413 = vld [vmem:[#allocation8 + $0x670] sm:$0xff]
    %v414 = vld [vmem:[#allocation8 + $0x678] sm:$0xff]
    %v415 = vld [vmem:[#allocation8 + $0x680] sm:$0xff]
    %v416 = vld [vmem:[#allocation8 + $0x688] sm:$0xff]
    %v417 = vld [vmem:[#allocation8 + $0x690] sm:$0xff]
    %v418 = vld [vmem:[#allocation8 + $0x698] sm:$0xff]
    %v419 = vld [vmem:[#allocation8 + $0x6a0] sm:$0xff]
    %v420 = vld [vmem:[#allocation8 + $0x6a8] sm:$0xff]
    %v421 = vld [vmem:[#allocation8 + $0x6b0] sm:$0xff]
    %v422 = vld [vmem:[#allocation8 + $0x6b8] sm:$0xff]
    %v423 = vld [vmem:[#allocation8 + $0x6c0] sm:$0xff]
    %v424 = vld [vmem:[#allocation8 + $0x6c8] sm:$0xff]
    %v425 = vld [vmem:[#allocation8 + $0x6d0] sm:$0xff]
    %v426 = vld [vmem:[#allocation8 + $0x6d8] sm:$0xff]
    %v427 = vld [vmem:[#allocation8 + $0x6e0] sm:$0xff]
    %v428 = vld [vmem:[#allocation8 + $0x6e8] sm:$0xff]
    %v429 = vld [vmem:[#allocation8 + $0x6f0] sm:$0xff]
    %v430 = vld [vmem:[#allocation8 + $0x6f8] sm:$0xff]
    %v431 = vld [vmem:[#allocation8 + $0x700] sm:$0xff]
    %v432 = vld [vmem:[#allocation8 + $0x708] sm:$0xff]
    %v433 = vld [vmem:[#allocation8 + $0x710] sm:$0xff]
    %v434 = vld [vmem:[#allocation8 + $0x718] sm:$0xff]
    %v435 = vld [vmem:[#allocation8 + $0x720] sm:$0xff]
    %v436 = vld [vmem:[#allocation8 + $0x728] sm:$0xff]
    %v437 = vld [vmem:[#allocation8 + $0x730] sm:$0xff]
    %v438 = vld [vmem:[#allocation8 + $0x738] sm:$0xff]
    %v439 = vld [vmem:[#allocation8 + $0x740] sm:$0xff]
    %v440 = vld [vmem:[#allocation8 + $0x748] sm:$0xff]
    %v441 = vld [vmem:[#allocation8 + $0x750] sm:$0xff]
    %v442 = vld [vmem:[#allocation8 + $0x758] sm:$0xff]
    %v443 = vld [vmem:[#allocation8 + $0x760] sm:$0xff]
    %v444 = vld [vmem:[#allocation8 + $0x768] sm:$0xff]
    %v445 = vld [vmem:[#allocation8 + $0x770] sm:$0xff]
    %v446 = vld [vmem:[#allocation8 + $0x778] sm:$0xff]
    %v447 = vld [vmem:[#allocation8 + $0x780] sm:$0xff]
    %v448 = vld [vmem:[#allocation8 + $0x788] sm:$0xff]
    %v449 = vld [vmem:[#allocation8 + $0x790] sm:$0xff]
    %v450 = vld [vmem:[#allocation8 + $0x798] sm:$0xff]
    %v451 = vld [vmem:[#allocation8 + $0x7a0] sm:$0xff]
    %v452 = vld [vmem:[#allocation8 + $0x7a8] sm:$0xff]
    %v453 = vld [vmem:[#allocation8 + $0x7b0] sm:$0xff]
    %v454 = vld [vmem:[#allocation8 + $0x7b8] sm:$0xff]
    %v455 = vld [vmem:[#allocation8 + $0x7c0] sm:$0xff]
    %v456 = vld [vmem:[#allocation8 + $0x7c8] sm:$0xff]
    %v457 = vld [vmem:[#allocation8 + $0x7d0] sm:$0xff]
    %v458 = vld [vmem:[#allocation8 + $0x7d8] sm:$0xff]
    %v459 = vld [vmem:[#allocation8 + $0x7e0] sm:$0xff]
    %v460 = vld [vmem:[#allocation8 + $0x7e8] sm:$0xff]
    %v461 = vld [vmem:[#allocation8 + $0x7f0] sm:$0xff]
    %v462 = vld [vmem:[#allocation8 + $0x7f8] sm:$0xff]
    %v463 = vld [vmem:[#allocation8 + $0x800] sm:$0xff]
    %v464 = vld [vmem:[#allocation8 + $0x808] sm:$0xff]
    %v465 = vld [vmem:[#allocation8 + $0x810] sm:$0xff]
    %v466 = vld [vmem:[#allocation8 + $0x818] sm:$0xff]
    %v467 = vld [vmem:[#allocation8 + $0x820] sm:$0xff]
    %v468 = vld [vmem:[#allocation8 + $0x828] sm:$0xff]
    %v469 = vld [vmem:[#allocation8 + $0x830] sm:$0xff]
    %v470 = vld [vmem:[#allocation8 + $0x838] sm:$0xff]
    %v471 = vld [vmem:[#allocation8 + $0x840] sm:$0xff]
    %v472 = vld [vmem:[#allocation8 + $0x848] sm:$0xff]
    %v473 = vld [vmem:[#allocation8 + $0x850] sm:$0xff]
    %v474 = vld [vmem:[#allocation8 + $0x858] sm:$0xff]
    %v475 = vld [vmem:[#allocation8 + $0x860] sm:$0xff]
    %v476 = vld [vmem:[#allocation8 + $0x868] sm:$0xff]
    %v477 = vld [vmem:[#allocation8 + $0x870] sm:$0xff]
    %v478 = vld [vmem:[#allocation8 + $0x878] sm:$0xff]
    %v479 = vld [vmem:[#allocation8 + $0x880] sm:$0xff]
    %v480 = vld [vmem:[#allocation8 + $0x888] sm:$0xff]
    %v481 = vld [vmem:[#allocation8 + $0x890] sm:$0xff]
    %v482 = vld [vmem:[#allocation8 + $0x898] sm:$0xff]
    %v483 = vld [vmem:[#allocation8 + $0x8a0] sm:$0xff]
    %v484 = vld [vmem:[#allocation8 + $0x8a8] sm:$0xff]
    %v485 = vld [vmem:[#allocation8 + $0x8b0] sm:$0xff]
    %v486 = vld [vmem:[#allocation8 + $0x8b8] sm:$0xff]
    %v487 = vld [vmem:[#allocation8 + $0x8c0] sm:$0xff]
    %v488 = vld [vmem:[#allocation8 + $0x8c8] sm:$0xff]
    %v489 = vld [vmem:[#allocation8 + $0x8d0] sm:$0xff]
    %v490 = vld [vmem:[#allocation8 + $0x8d8] sm:$0xff]
    %v491 = vld [vmem:[#allocation8 + $0x8e0] sm:$0xff]
    %v492 = vld [vmem:[#allocation8 + $0x8e8] sm:$0xff]
    %v493 = vld [vmem:[#allocation8 + $0x8f0] sm:$0xff]
    %v494 = vld [vmem:[#allocation8 + $0x8f8] sm:$0xff]
    %v495 = vld [vmem:[#allocation8 + $0x900] sm:$0xff]
    %v496 = vld [vmem:[#allocation8 + $0x908] sm:$0xff]
    %v497 = vld [vmem:[#allocation8 + $0x910] sm:$0xff]
    %v498 = vld [vmem:[#allocation8 + $0x918] sm:$0xff]
    %v499 = vld [vmem:[#allocation8 + $0x920] sm:$0xff]
    %v500 = vld [vmem:[#allocation8 + $0x928] sm:$0xff]
    %v501 = vld [vmem:[#allocation8 + $0x930] sm:$0xff]
    %v502 = vld [vmem:[#allocation8 + $0x938] sm:$0xff]
    %v503 = vld [vmem:[#allocation8 + $0x940] sm:$0xff]
    %v504 = vld [vmem:[#allocation8 + $0x948] sm:$0xff]
    %v505 = vld [vmem:[#allocation8 + $0x950] sm:$0xff]
    %v506 = vld [vmem:[#allocation8 + $0x958] sm:$0xff]
    %v507 = vld [vmem:[#allocation8 + $0x960] sm:$0xff]
    %v508 = vld [vmem:[#allocation8 + $0x968] sm:$0xff]
    %v509 = vld [vmem:[#allocation8 + $0x970] sm:$0xff]
    %v510 = vld [vmem:[#allocation8 + $0x978] sm:$0xff]
    %v511 = vld [vmem:[#allocation8 + $0x980] sm:$0xff]
    %v512 = vld [vmem:[#allocation8 + $0x988] sm:$0xff]
    %v513 = vld [vmem:[#allocation8 + $0x990] sm:$0xff]
    %v514 = vld [vmem:[#allocation8 + $0x998] sm:$0xff]
    %v515 = vld [vmem:[#allocation8 + $0x9a0] sm:$0xff]
    %v516 = vld [vmem:[#allocation8 + $0x9a8] sm:$0xff]
    %v517 = vld [vmem:[#allocation8 + $0x9b0] sm:$0xff]
    %v518 = vld [vmem:[#allocation8 + $0x9b8] sm:$0xff]
    %v519 = vld [vmem:[#allocation8 + $0x9c0] sm:$0xff]
    %v520 = vld [vmem:[#allocation8 + $0x9c8] sm:$0xff]
    %v521 = vld [vmem:[#allocation8 + $0x9d0] sm:$0xff]
    %v522 = vld [vmem:[#allocation8 + $0x9d8] sm:$0xff]
    %v523 = vld [vmem:[#allocation8 + $0x9e0] sm:$0xff]
    %v524 = vld [vmem:[#allocation8 + $0x9e8] sm:$0xff]
    %v525 = vld [vmem:[#allocation8 + $0x9f0] sm:$0xff]
    %v526 = vld [vmem:[#allocation8 + $0x9f8] sm:$0xff]
    %v527 = vld [vmem:[#allocation8 + $0xa00] sm:$0xff]
    %v528 = vld [vmem:[#allocation8 + $0xa08] sm:$0xff]
    %v529 = vld [vmem:[#allocation8 + $0xa10] sm:$0xff]
    %v530 = vld [vmem:[#allocation8 + $0xa18] sm:$0xff]
    %v531 = vld [vmem:[#allocation8 + $0xa20] sm:$0xff]
    %v532 = vld [vmem:[#allocation8 + $0xa28] sm:$0xff]
    %v533 = vld [vmem:[#allocation8 + $0xa30] sm:$0xff]
    %v534 = vld [vmem:[#allocation8 + $0xa38] sm:$0xff]
    %v535 = vld [vmem:[#allocation8 + $0xa40] sm:$0xff]
    %v536 = vld [vmem:[#allocation8 + $0xa48] sm:$0xff]
    %v537 = vld [vmem:[#allocation8 + $0xa50] sm:$0xff]
    %v538 = vld [vmem:[#allocation8 + $0xa58] sm:$0xff]
    %v539 = vld [vmem:[#allocation8 + $0xa60] sm:$0xff]
    %v540 = vld [vmem:[#allocation8 + $0xa68] sm:$0xff]
    %v541 = vld [vmem:[#allocation8 + $0xa70] sm:$0xff]
    %v542 = vld [vmem:[#allocation8 + $0xa78] sm:$0xff]
    %v543 = vld [vmem:[#allocation8 + $0xa80] sm:$0xff]
    %v544 = vld [vmem:[#allocation8 + $0xa88] sm:$0xff]
    %v545 = vld [vmem:[#allocation8 + $0xa90] sm:$0xff]
    %v546 = vld [vmem:[#allocation8 + $0xa98] sm:$0xff]
    %v547 = vld [vmem:[#allocation8 + $0xaa0] sm:$0xff]
    %v548 = vld [vmem:[#allocation8 + $0xaa8] sm:$0xff]
    %v549 = vld [vmem:[#allocation8 + $0xab0] sm:$0xff]
    %v550 = vld [vmem:[#allocation8 + $0xab8] sm:$0xff]
    %v551 = vld [vmem:[#allocation8 + $0xac0] sm:$0xff]
    %v552 = vld [vmem:[#allocation8 + $0xac8] sm:$0xff]
    %v553 = vld [vmem:[#allocation8 + $0xad0] sm:$0xff]
    %v554 = vld [vmem:[#allocation8 + $0xad8] sm:$0xff]
    %v555 = vld [vmem:[#allocation8 + $0xae0] sm:$0xff]
    %v556 = vld [vmem:[#allocation8 + $0xae8] sm:$0xff]
    %v557 = vld [vmem:[#allocation8 + $0xaf0] sm:$0xff]
    %v558 = vld [vmem:[#allocation8 + $0xaf8] sm:$0xff]
    %v559 = vld [vmem:[#allocation8 + $0xb00] sm:$0xff]
    %v560 = vld [vmem:[#allocation8 + $0xb08] sm:$0xff]
    %v561 = vld [vmem:[#allocation8 + $0xb10] sm:$0xff]
    %v562 = vld [vmem:[#allocation8 + $0xb18] sm:$0xff]
    %v563 = vld [vmem:[#allocation8 + $0xb20] sm:$0xff]
    %v564 = vld [vmem:[#allocation8 + $0xb28] sm:$0xff]
    %v565 = vld [vmem:[#allocation8 + $0xb30] sm:$0xff]
    %v566 = vld [vmem:[#allocation8 + $0xb38] sm:$0xff]
    %v567 = vld [vmem:[#allocation8 + $0xb40] sm:$0xff]
    %v568 = vld [vmem:[#allocation8 + $0xb48] sm:$0xff]
    %v569 = vld [vmem:[#allocation8 + $0xb50] sm:$0xff]
    %v570 = vld [vmem:[#allocation8 + $0xb58] sm:$0xff]
    %v571 = vld [vmem:[#allocation8 + $0xb60] sm:$0xff]
    %v572 = vld [vmem:[#allocation8 + $0xb68] sm:$0xff]
    %v573 = vld [vmem:[#allocation8 + $0xb70] sm:$0xff]
    %v574 = vld [vmem:[#allocation8 + $0xb78] sm:$0xff]
    %v575 = vld [vmem:[#allocation8 + $0xb80] sm:$0xff]
    %v576 = vld [vmem:[#allocation8 + $0xb88] sm:$0xff]
    %v577 = vld [vmem:[#allocation8 + $0xb90] sm:$0xff]
    %v578 = vld [vmem:[#allocation8 + $0xb98] sm:$0xff]
    %v579 = vld [vmem:[#allocation8 + $0xba0] sm:$0xff]
    %v580 = vld [vmem:[#allocation8 + $0xba8] sm:$0xff]
    %v581 = vld [vmem:[#allocation8 + $0xbb0] sm:$0xff]
    %v582 = vld [vmem:[#allocation8 + $0xbb8] sm:$0xff]
    %v583 = vld [vmem:[#allocation8 + $0xbc0] sm:$0xff]
    %v584 = vld [vmem:[#allocation8 + $0xbc8] sm:$0xff]
    %v585 = vld [vmem:[#allocation8 + $0xbd0] sm:$0xff]
    %v586 = vld [vmem:[#allocation8 + $0xbd8] sm:$0xff]
    %v587 = vld [vmem:[#allocation8 + $0xbe0] sm:$0xff]
    %v588 = vld [vmem:[#allocation8 + $0xbe8] sm:$0xff]
    %v589 = vld [vmem:[#allocation8 + $0xbf0] sm:$0xff]
    %v590 = vld [vmem:[#allocation8 + $0xbf8] sm:$0xff]
    %v591 = vld [vmem:[#allocation8 + $0xc00] sm:$0xff]
    %v592 = vld [vmem:[#allocation8 + $0xc08] sm:$0xff]
    %v593 = vld [vmem:[#allocation8 + $0xc10] sm:$0xff]
    %v594 = vld [vmem:[#allocation8 + $0xc18] sm:$0xff]
    %v595 = vld [vmem:[#allocation8 + $0xc20] sm:$0xff]
    %v596 = vld [vmem:[#allocation8 + $0xc28] sm:$0xff]
    %v597 = vld [vmem:[#allocation8 + $0xc30] sm:$0xff]
    %v598 = vld [vmem:[#allocation8 + $0xc38] sm:$0xff]
    %v599 = vld [vmem:[#allocation8 + $0xc40] sm:$0xff]
    %v600 = vld [vmem:[#allocation8 + $0xc48] sm:$0xff]
    %v601 = vld [vmem:[#allocation8 + $0xc50] sm:$0xff]
    %v602 = vld [vmem:[#allocation8 + $0xc58] sm:$0xff]
    %v603 = vld [vmem:[#allocation8 + $0xc60] sm:$0xff]
    %v604 = vld [vmem:[#allocation8 + $0xc68] sm:$0xff]
    %v605 = vld [vmem:[#allocation8 + $0xc70] sm:$0xff]
    %v606 = vld [vmem:[#allocation8 + $0xc78] sm:$0xff]
    %v607 = vld [vmem:[#allocation8 + $0xc80] sm:$0xff]
    %v608 = vld [vmem:[#allocation8 + $0xc88] sm:$0xff]
    %v609 = vld [vmem:[#allocation8 + $0xc90] sm:$0xff]
    %v610 = vld [vmem:[#allocation8 + $0xc98] sm:$0xff]
    %v611 = vld [vmem:[#allocation8 + $0xca0] sm:$0xff]
    %v612 = vld [vmem:[#allocation8 + $0xca8] sm:$0xff]
    %v613 = vld [vmem:[#allocation8 + $0xcb0] sm:$0xff]
    %v614 = vld [vmem:[#allocation8 + $0xcb8] sm:$0xff]
    %v615 = vld [vmem:[#allocation8 + $0xcc0] sm:$0xff]
    %v616 = vld [vmem:[#allocation8 + $0xcc8] sm:$0xff]
    %v617 = vld [vmem:[#allocation8 + $0xcd0] sm:$0xff]
    %v618 = vld [vmem:[#allocation8 + $0xcd8] sm:$0xff]
    %v619 = vld [vmem:[#allocation8 + $0xce0] sm:$0xff]
    %v620 = vld [vmem:[#allocation8 + $0xce8] sm:$0xff]
    %v621 = vld [vmem:[#allocation8 + $0xcf0] sm:$0xff]
    %v622 = vld [vmem:[#allocation8 + $0xcf8] sm:$0xff]
    %v623 = vld [vmem:[#allocation8 + $0xd00] sm:$0xff]
    %v624 = vld [vmem:[#allocation8 + $0xd08] sm:$0xff]
    %v625 = vld [vmem:[#allocation8 + $0xd10] sm:$0xff]
    %v626 = vld [vmem:[#allocation8 + $0xd18] sm:$0xff]
    %v627 = vld [vmem:[#allocation8 + $0xd20] sm:$0xff]
    %v628 = vld [vmem:[#allocation8 + $0xd28] sm:$0xff]
    %v629 = vld [vmem:[#allocation8 + $0xd30] sm:$0xff]
    %v630 = vld [vmem:[#allocation8 + $0xd38] sm:$0xff]
    %v631 = vld [vmem:[#allocation8 + $0xd40] sm:$0xff]
    %v632 = vld [vmem:[#allocation8 + $0xd48] sm:$0xff]
    %v633 = vld [vmem:[#allocation8 + $0xd50] sm:$0xff]
    %v634 = vld [vmem:[#allocation8 + $0xd58] sm:$0xff]
    %v635 = vld [vmem:[#allocation8 + $0xd60] sm:$0xff]
    %v636 = vld [vmem:[#allocation8 + $0xd68] sm:$0xff]
    %v637 = vld [vmem:[#allocation8 + $0xd70] sm:$0xff]
    %v638 = vld [vmem:[#allocation8 + $0xd78] sm:$0xff]
    %v639 = vld [vmem:[#allocation8 + $0xd80] sm:$0xff]
    %v640 = vld [vmem:[#allocation8 + $0xd88] sm:$0xff]
    %v641 = vld [vmem:[#allocation8 + $0xd90] sm:$0xff]
    %v642 = vld [vmem:[#allocation8 + $0xd98] sm:$0xff]
    %v643 = vld [vmem:[#allocation8 + $0xda0] sm:$0xff]
    %v644 = vld [vmem:[#allocation8 + $0xda8] sm:$0xff]
    %v645 = vld [vmem:[#allocation8 + $0xdb0] sm:$0xff]
    %v646 = vld [vmem:[#allocation8 + $0xdb8] sm:$0xff]
    %v647 = vld [vmem:[#allocation8 + $0xdc0] sm:$0xff]
    %v648 = vld [vmem:[#allocation8 + $0xdc8] sm:$0xff]
    %v649 = vld [vmem:[#allocation8 + $0xdd0] sm:$0xff]
    %v650 = vld [vmem:[#allocation8 + $0xdd8] sm:$0xff]
    %v651 = vld [vmem:[#allocation8 + $0xde0] sm:$0xff]
    %v652 = vld [vmem:[#allocation8 + $0xde8] sm:$0xff]
    %v653 = vld [vmem:[#allocation8 + $0xdf0] sm:$0xff]
    %v654 = vld [vmem:[#allocation8 + $0xdf8] sm:$0xff]
    %v655 = vld [vmem:[#allocation8 + $0xe00] sm:$0xff]
    %v656 = vld [vmem:[#allocation8 + $0xe08] sm:$0xff]
    %v657 = vld [vmem:[#allocation8 + $0xe10] sm:$0xff]
    %v658 = vld [vmem:[#allocation8 + $0xe18] sm:$0xff]
    %v659 = vld [vmem:[#allocation8 + $0xe20] sm:$0xff]
    %v660 = vld [vmem:[#allocation8 + $0xe28] sm:$0xff]
    %v661 = vld [vmem:[#allocation8 + $0xe30] sm:$0xff]
    %v662 = vld [vmem:[#allocation8 + $0xe38] sm:$0xff]
    %v663 = vld [vmem:[#allocation8 + $0xe40] sm:$0xff]
    %v664 = vld [vmem:[#allocation8 + $0xe48] sm:$0xff]
    %v665 = vld [vmem:[#allocation8 + $0xe50] sm:$0xff]
    %v666 = vld [vmem:[#allocation8 + $0xe58] sm:$0xff]
    %v667 = vld [vmem:[#allocation8 + $0xe60] sm:$0xff]
    %v668 = vld [vmem:[#allocation8 + $0xe68] sm:$0xff]
    %v669 = vld [vmem:[#allocation8 + $0xe70] sm:$0xff]
    %v670 = vld [vmem:[#allocation8 + $0xe78] sm:$0xff]
    %v671 = vld [vmem:[#allocation8 + $0xe80] sm:$0xff]
    %v672 = vld [vmem:[#allocation8 + $0xe88] sm:$0xff]
    %v673 = vld [vmem:[#allocation8 + $0xe90] sm:$0xff]
    %v674 = vld [vmem:[#allocation8 + $0xe98] sm:$0xff]
    %v675 = vld [vmem:[#allocation8 + $0xea0] sm:$0xff]
    %v676 = vld [vmem:[#allocation8 + $0xea8] sm:$0xff]
    %v677 = vld [vmem:[#allocation8 + $0xeb0] sm:$0xff]
    %v678 = vld [vmem:[#allocation8 + $0xeb8] sm:$0xff]
    %v679 = vld [vmem:[#allocation8 + $0xec0] sm:$0xff]
    %v680 = vld [vmem:[#allocation8 + $0xec8] sm:$0xff]
    %v681 = vld [vmem:[#allocation8 + $0xed0] sm:$0xff]
    %v682 = vld [vmem:[#allocation8 + $0xed8] sm:$0xff]
    %v683 = vld [vmem:[#allocation8 + $0xee0] sm:$0xff]
    %v684 = vld [vmem:[#allocation8 + $0xee8] sm:$0xff]
    %v685 = vld [vmem:[#allocation8 + $0xef0] sm:$0xff]
    %v686 = vld [vmem:[#allocation8 + $0xef8] sm:$0xff]
    %v687 = vld [vmem:[#allocation8 + $0xf00] sm:$0xff]
    %v688 = vld [vmem:[#allocation8 + $0xf08] sm:$0xff]
    %v689 = vld [vmem:[#allocation8 + $0xf10] sm:$0xff]
    %v690 = vld [vmem:[#allocation8 + $0xf18] sm:$0xff]
    %v691 = vld [vmem:[#allocation8 + $0xf20] sm:$0xff]
    %v692 = vld [vmem:[#allocation8 + $0xf28] sm:$0xff]
    %v693 = vld [vmem:[#allocation8 + $0xf30] sm:$0xff]
    %v694 = vld [vmem:[#allocation8 + $0xf38] sm:$0xff]
    %v695 = vld [vmem:[#allocation8 + $0xf40] sm:$0xff]
    %v696 = vld [vmem:[#allocation8 + $0xf48] sm:$0xff]
    %v697 = vld [vmem:[#allocation8 + $0xf50] sm:$0xff]
    %v698 = vld [vmem:[#allocation8 + $0xf58] sm:$0xff]
    %v699 = vld [vmem:[#allocation8 + $0xf60] sm:$0xff]
    %v700 = vld [vmem:[#allocation8 + $0xf68] sm:$0xff]
    %v701 = vld [vmem:[#allocation8 + $0xf70] sm:$0xff]
    %v702 = vld [vmem:[#allocation8 + $0xf78] sm:$0xff]
    %v703 = vld [vmem:[#allocation8 + $0xf80] sm:$0xff]
    %v704 = vld [vmem:[#allocation8 + $0xf88] sm:$0xff]
    %v705 = vld [vmem:[#allocation8 + $0xf90] sm:$0xff]
    %v706 = vld [vmem:[#allocation8 + $0xf98] sm:$0xff]
    %v707 = vld [vmem:[#allocation8 + $0xfa0] sm:$0xff]
    %v708 = vld [vmem:[#allocation8 + $0xfa8] sm:$0xff]
    %v709 = vld [vmem:[#allocation8 + $0xfb0] sm:$0xff]
    %v710 = vld [vmem:[#allocation8 + $0xfb8] sm:$0xff]
    %v711 = vld [vmem:[#allocation8 + $0xfc0] sm:$0xff]
    %v712 = vld [vmem:[#allocation8 + $0xfc8] sm:$0xff]
    %v713 = vld [vmem:[#allocation8 + $0xfd0] sm:$0xff]
    %v714 = vld [vmem:[#allocation8 + $0xfd8] sm:$0xff]
    %v715 = vld [vmem:[#allocation8 + $0xfe0] sm:$0xff]
    %v716 = vld [vmem:[#allocation8 + $0xfe8] sm:$0xff]
    %v717 = vld [vmem:[#allocation8 + $0xff0] sm:$0xff]
    %v718 = vld [vmem:[#allocation8 + $0xff8] sm:$0xff]
    %v719 = vld [vmem:[#allocation10] sm:$0xff]
    %v720 = vld [vmem:[#allocation10 + $0x8] sm:$0xff]
    %v723 = vlaneseq
    %v724 = vshrl.u32 %v723, 7
    %v725 = vsub.s32 0, %v724
    %v726 = vrot.slane %v719, %v725
    %v727 = vlaneseq
    %v728 = vshrl.u32 %v727, 7
    %v729 = vsub.s32 1, %v728
    %v730 = vrot.slane %v719, %v729
    %v731 = vlaneseq
    %v732 = vshrl.u32 %v731, 7
    %v733 = vsub.s32 2, %v732
    %v734 = vrot.slane %v719, %v733
    %v735 = vlaneseq
    %v736 = vshrl.u32 %v735, 7
    %v737 = vsub.s32 3, %v736
    %v738 = vrot.slane %v719, %v737
    %v739 = vlaneseq
    %v740 = vshrl.u32 %v739, 7
    %v741 = vsub.s32 4, %v740
    %v742 = vrot.slane %v719, %v741
    %v743 = vlaneseq
    %v744 = vshrl.u32 %v743, 7
    %v745 = vsub.s32 5, %v744
    %v746 = vrot.slane %v719, %v745
    %v747 = vlaneseq
    %v748 = vshrl.u32 %v747, 7
    %v749 = vsub.s32 6, %v748
    %v750 = vrot.slane %v719, %v749
    %v751 = vlaneseq
    %v752 = vshrl.u32 %v751, 7
    %v753 = vsub.s32 7, %v752
    %v754 = vrot.slane %v719, %v753
    %v755 = vlaneseq
    %v756 = vshrl.u32 %v755, 7
    %v757 = vsub.s32 0, %v756
    %v758 = vrot.slane %v720, %v757
    %v759 = vlaneseq
    %v760 = vshrl.u32 %v759, 7
    %v761 = vsub.s32 1, %v760
    %v762 = vrot.slane %v720, %v761
    %v763 = vlaneseq
    %v764 = vshrl.u32 %v763, 7
    %v765 = vsub.s32 2, %v764
    %v766 = vrot.slane %v720, %v765
    %v767 = vlaneseq
    %v768 = vshrl.u32 %v767, 7
    %v769 = vsub.s32 3, %v768
    %v770 = vrot.slane %v720, %v769
    %v771 = vlaneseq
    %v772 = vshrl.u32 %v771, 7
    %v773 = vsub.s32 4, %v772
    %v774 = vrot.slane %v720, %v773
    %v775 = vlaneseq
    %v776 = vshrl.u32 %v775, 7
    %v777 = vsub.s32 5, %v776
    %v778 = vrot.slane %v720, %v777
    %v779 = vlaneseq
    %v780 = vshrl.u32 %v779, 7
    %v781 = vsub.s32 6, %v780
    %v782 = vrot.slane %v720, %v781
    %v783 = vlaneseq
    %v784 = vshrl.u32 %v783, 7
    %v785 = vsub.s32 7, %v784
    %v786 = vrot.slane %v720, %v785
    %803 = vmatprep.subr.mxu0 %v208
    %804 = vmatpush1.msra.mxu0 %v207
    %805 = vmatprep.subr.mxu0 %v224
    %806 = vmatpush1.msra.mxu0 %v223
    %807 = vmatprep.subr.mxu0 %v240
    %808 = vmatpush1.msra.mxu0 %v239
    %809 = vmatprep.subr.mxu0 %v256
    %810 = vmatpush1.msra.mxu0 %v255
    %811 = vmatprep.subr.mxu0 %v272
    %812 = vmatpush1.msra.mxu0 %v271
    %813 = vmatprep.subr.mxu0 %v288
    %814 = vmatpush1.msra.mxu0 %v287
    %815 = vmatprep.subr.mxu0 %v304
    %816 = vmatpush1.msra.mxu0 %v303
    %817 = vmatprep.subr.mxu0 %v320
    %818 = vmatpush1.msra.mxu0 %v319
    %819 = vmatprep.subr.mxu0 %v336
    %820 = vmatpush1.msra.mxu0 %v335
    %821 = vmatprep.subr.mxu0 %v352
    %822 = vmatpush1.msra.mxu0 %v351
    %823 = vmatprep.subr.mxu0 %v368
    %824 = vmatpush1.msra.mxu0 %v367
    %825 = vmatprep.subr.mxu0 %v384
    %826 = vmatpush1.msra.mxu0 %v383
    %827 = vmatprep.subr.mxu0 %v400
    %828 = vmatpush1.msra.mxu0 %v399
    %829 = vmatprep.subr.mxu0 %v416
    %830 = vmatpush1.msra.mxu0 %v415
    %831 = vmatprep.subr.mxu0 %v432
    %832 = vmatpush1.msra.mxu0 %v431
    %833 = vmatprep.subr.mxu0 %v448
    %834 = vmatpush1.msra.mxu0 %v447
    %835 = vmatprep.subr.mxu0 %v464
    %836 = vmatpush1.msra.mxu0 %v463
    %837 = vmatprep.subr.mxu0 %v480
    %838 = vmatpush1.msra.mxu0 %v479
    %839 = vmatprep.subr.mxu0 %v496
    %840 = vmatpush1.msra.mxu0 %v495
    %841 = vmatprep.subr.mxu0 %v512
    %842 = vmatpush1.msra.mxu0 %v511
    %843 = vmatprep.subr.mxu0 %v528
    %844 = vmatpush1.msra.mxu0 %v527
    %845 = vmatprep.subr.mxu0 %v544
    %846 = vmatpush1.msra.mxu0 %v543
    %847 = vmatprep.subr.mxu0 %v560
    %848 = vmatpush1.msra.mxu0 %v559
    %849 = vmatprep.subr.mxu0 %v576
    %850 = vmatpush1.msra.mxu0 %v575
    %851 = vmatprep.subr.mxu0 %v592
    %852 = vmatpush1.msra.mxu0 %v591
    %853 = vmatprep.subr.mxu0 %v608
    %854 = vmatpush1.msra.mxu0 %v607
    %855 = vmatprep.subr.mxu0 %v624
    %856 = vmatpush1.msra.mxu0 %v623
    %857 = vmatprep.subr.mxu0 %v640
    %858 = vmatpush1.msra.mxu0 %v639
    %859 = vmatprep.subr.mxu0 %v656
    %860 = vmatpush1.msra.mxu0 %v655
    %861 = vmatprep.subr.mxu0 %v672
    %862 = vmatpush1.msra.mxu0 %v671
    %863 = vmatprep.subr.mxu0 %v688
    %864 = vmatpush1.msra.mxu0 %v687
    %865 = vmatprep.subr.mxu0 %v704
    %866 = vmatpush1.msra.mxu0 %v703
    %867 = vmatprep.mubr.f32.mxu0 %v192
    %868 = vmatmul.mubr.f32.gmra.mrb[0].mxu0 %v191
    %v869 = vpop.f32.mrb[0].mxu0
    %v870 = vadd.f32 %v726, %v869
    %v871 = vpop.f32.mrb[0].mxu0
    %v872 = vadd.f32 %v730, %v871
    %873 = vmatprep.mubr.f32.mxu0 %v194
    %874 = vmatmul.mubr.f32.gmra.mrb[0].mxu0 %v193
    %v875 = vpop.f32.mrb[0].mxu0
    %v876 = vadd.f32 %v726, %v875
    %v877 = vpop.f32.mrb[0].mxu0
    %v878 = vadd.f32 %v730, %v877
    %879 = vmatprep.mubr.f32.mxu0 %v196
    %880 = vmatmul.mubr.f32.gmra.mrb[0].mxu0 %v195
    %v881 = vpop.f32.mrb[0].mxu0
    %v882 = vadd.f32 %v726, %v881
    %v883 = vpop.f32.mrb[0].mxu0
    %v884 = vadd.f32 %v730, %v883
    %885 = vmatprep.mubr.f32.mxu0 %v198
    %886 = vmatmul.mubr.f32.gmra.mrb[0].mxu0 %v197
    %v887 = vpop.f32.mrb[0].mxu0
    %v888 = vadd.f32 %v726, %v887
    %v889 = vpop.f32.mrb[0].mxu0
    %v890 = vadd.f32 %v730, %v889
    %891 = vdwg.mxu0
    %892 = vmatprep.subr.mxu0 %v210
    %893 = vmatpush1.msra.mxu0 %v209
    %894 = vmatprep.subr.mxu0 %v226
    %895 = vmatpush1.msra.mxu0 %v225
    %896 = vmatprep.subr.mxu0 %v242
    %897 = vmatpush1.msra.mxu0 %v241
    %898 = vmatprep.subr.mxu0 %v258
    %899 = vmatpush1.msra.mxu0 %v257
    %900 = vmatprep.subr.mxu0 %v274
    %901 = vmatpush1.msra.mxu0 %v273
    %902 = vmatprep.subr.mxu0 %v290
    %903 = vmatpush1.msra.mxu0 %v289
    %904 = vmatprep.subr.mxu0 %v306
    %905 = vmatpush1.msra.mxu0 %v305
    %906 = vmatprep.subr.mxu0 %v322
    %907 = vmatpush1.msra.mxu0 %v321
    %908 = vmatprep.subr.mxu0 %v338
    %909 = vmatpush1.msra.mxu0 %v337
    %910 = vmatprep.subr.mxu0 %v354
    %911 = vmatpush1.msra.mxu0 %v353
    %912 = vmatprep.subr.mxu0 %v370
    %913 = vmatpush1.msra.mxu0 %v369
    %914 = vmatprep.subr.mxu0 %v386
    %915 = vmatpush1.msra.mxu0 %v385
    %916 = vmatprep.subr.mxu0 %v402
    %917 = vmatpush1.msra.mxu0 %v401
    %918 = vmatprep.subr.mxu0 %v418
    %919 = vmatpush1.msra.mxu0 %v417
    %920 = vmatprep.subr.mxu0 %v434
    %921 = vmatpush1.msra.mxu0 %v433
    %922 = vmatprep.subr.mxu0 %v450
    %923 = vmatpush1.msra.mxu0 %v449
    %924 = vmatprep.subr.mxu0 %v466
    %925 = vmatpush1.msra.mxu0 %v465
    %926 = vmatprep.subr.mxu0 %v482
    %927 = vmatpush1.msra.mxu0 %v481
    %928 = vmatprep.subr.mxu0 %v498
    %929 = vmatpush1.msra.mxu0 %v497
    %930 = vmatprep.subr.mxu0 %v514
    %931 = vmatpush1.msra.mxu0 %v513
    %932 = vmatprep.subr.mxu0 %v530
    %933 = vmatpush1.msra.mxu0 %v529
    %934 = vmatprep.subr.mxu0 %v546
    %935 = vmatpush1.msra.mxu0 %v545
    %936 = vmatprep.subr.mxu0 %v562
    %937 = vmatpush1.msra.mxu0 %v561
    %938 = vmatprep.subr.mxu0 %v578
    %939 = vmatpush1.msra.mxu0 %v577
    %940 = vmatprep.subr.mxu0 %v594
    %941 = vmatpush1.msra.mxu0 %v593
    %942 = vmatprep.subr.mxu0 %v610
    %943 = vmatpush1.msra.mxu0 %v609
    %944 = vmatprep.subr.mxu0 %v626
    %945 = vmatpush1.msra.mxu0 %v625
    %946 = vmatprep.subr.mxu0 %v642
    %947 = vmatpush1.msra.mxu0 %v641
    %948 = vmatprep.subr.mxu0 %v658
    %949 = vmatpush1.msra.mxu0 %v657
    %950 = vmatprep.subr.mxu0 %v674
    %951 = vmatpush1.msra.mxu0 %v673
    %952 = vmatprep.subr.mxu0 %v690
    %953 = vmatpush1.msra.mxu0 %v689
    %954 = vmatprep.subr.mxu0 %v706
    %955 = vmatpush1.msra.mxu0 %v705
    %956 = vmatprep.mubr.f32.mxu0 %v192
    %957 = vmatmul.mubr.f32.gmra.mrb[0].mxu0 %v191
    %v958 = vpop.f32.mrb[0].mxu0
    %v959 = vadd.f32 %v734, %v958
    %v960 = vpop.f32.mrb[0].mxu0
    %v961 = vadd.f32 %v738, %v960
    %962 = vmatprep.mubr.f32.mxu0 %v194
    %963 = vmatmul.mubr.f32.gmra.mrb[0].mxu0 %v193
    %v964 = vpop.f32.mrb[0].mxu0
    %v965 = vadd.f32 %v734, %v964
    %v966 = vpop.f32.mrb[0].mxu0
    %v967 = vadd.f32 %v738, %v966
    %968 = vmatprep.mubr.f32.mxu0 %v196
    %969 = vmatmul.mubr.f32.gmra.mrb[0].mxu0 %v195
    %v970 = vpop.f32.mrb[0].mxu0
    %v971 = vadd.f32 %v734, %v970
    %v972 = vpop.f32.mrb[0].mxu0
    %v973 = vadd.f32 %v738, %v972
    %974 = vmatprep.mubr.f32.mxu0 %v198
    %975 = vmatmul.mubr.f32.gmra.mrb[0].mxu0 %v197
    %v976 = vpop.f32.mrb[0].mxu0
    %v977 = vadd.f32 %v734, %v976
    %v978 = vpop.f32.mrb[0].mxu0
    %v979 = vadd.f32 %v738, %v978
    %980 = vdwg.mxu0
    %981 = vmatprep.subr.mxu0 %v212
    %982 = vmatpush1.msra.mxu0 %v211
    %983 = vmatprep.subr.mxu0 %v228
    %984 = vmatpush1.msra.mxu0 %v227
    %985 = vmatprep.subr.mxu0 %v244
    %986 = vmatpush1.msra.mxu0 %v243
    %987 = vmatprep.subr.mxu0 %v260
    %988 = vmatpush1.msra.mxu0 %v259
    %989 = vmatprep.subr.mxu0 %v276
    %990 = vmatpush1.msra.mxu0 %v275
    %991 = vmatprep.subr.mxu0 %v292
    %992 = vmatpush1.msra.mxu0 %v291
    %993 = vmatprep.subr.mxu0 %v308
    %994 = vmatpush1.msra.mxu0 %v307
    %995 = vmatprep.subr.mxu0 %v324
    %996 = vmatpush1.msra.mxu0 %v323
    %997 = vmatprep.subr.mxu0 %v340
    %998 = vmatpush1.msra.mxu0 %v339
    %999 = vmatprep.subr.mxu0 %v356
    %1000 = vmatpush1.msra.mxu0 %v355
    %1001 = vmatprep.subr.mxu0 %v372
    %1002 = vmatpush1.msra.mxu0 %v371
    %1003 = vmatprep.subr.mxu0 %v388
    %1004 = vmatpush1.msra.mxu0 %v387
    %1005 = vmatprep.subr.mxu0 %v404
    %1006 = vmatpush1.msra.mxu0 %v403
    %1007 = vmatprep.subr.mxu0 %v420
    %1008 = vmatpush1.msra.mxu0 %v419
    %1009 = vmatprep.subr.mxu0 %v436
    %1010 = vmatpush1.msra.mxu0 %v435
    %1011 = vmatprep.subr.mxu0 %v452
    %1012 = vmatpush1.msra.mxu0 %v451
    %1013 = vmatprep.subr.mxu0 %v468
    %1014 = vmatpush1.msra.mxu0 %v467
    %1015 = vmatprep.subr.mxu0 %v484
    %1016 = vmatpush1.msra.mxu0 %v483
    %1017 = vmatprep.subr.mxu0 %v500
    %1018 = vmatpush1.msra.mxu0 %v499
    %1019 = vmatprep.subr.mxu0 %v516
    %1020 = vmatpush1.msra.mxu0 %v515
    %1021 = vmatprep.subr.mxu0 %v532
    %1022 = vmatpush1.msra.mxu0 %v531
    %1023 = vmatprep.subr.mxu0 %v548
    %1024 = vmatpush1.msra.mxu0 %v547
    %1025 = vmatprep.subr.mxu0 %v564
    %1026 = vmatpush1.msra.mxu0 %v563
    %1027 = vmatprep.subr.mxu0 %v580
    %1028 = vmatpush1.msra.mxu0 %v579
    %1029 = vmatprep.subr.mxu0 %v596
    %1030 = vmatpush1.msra.mxu0 %v595
    %1031 = vmatprep.subr.mxu0 %v612
    %1032 = vmatpush1.msra.mxu0 %v611
    %1033 = vmatprep.subr.mxu0 %v628
    %1034 = vmatpush1.msra.mxu0 %v627
    %1035 = vmatprep.subr.mxu0 %v644
    %1036 = vmatpush1.msra.mxu0 %v643
    %1037 = vmatprep.subr.mxu0 %v660
    %1038 = vmatpush1.msra.mxu0 %v659
    %1039 = vmatprep.subr.mxu0 %v676
    %1040 = vmatpush1.msra.mxu0 %v675
    %1041 = vmatprep.subr.mxu0 %v692
    %1042 = vmatpush1.msra.mxu0 %v691
    %1043 = vmatprep.subr.mxu0 %v708
    %1044 = vmatpush1.msra.mxu0 %v707
    %1045 = vmatprep.mubr.f32.mxu0 %v192
    %1046 = vmatmul.mubr.f32.gmra.mrb[0].mxu0 %v191
    %v1047 = vpop.f32.mrb[0].mxu0
    %v1048 = vadd.f32 %v742, %v1047
    %v1049 = vpop.f32.mrb[0].mxu0
    %v1050 = vadd.f32 %v746, %v1049
    %1051 = vmatprep.mubr.f32.mxu0 %v194
    %1052 = vmatmul.mubr.f32.gmra.mrb[0].mxu0 %v193
    %v1053 = vpop.f32.mrb[0].mxu0
    %v1054 = vadd.f32 %v742, %v1053
    %v1055 = vpop.f32.mrb[0].mxu0
    %v1056 = vadd.f32 %v746, %v1055
    %1057 = vmatprep.mubr.f32.mxu0 %v196
    %1058 = vmatmul.mubr.f32.gmra.mrb[0].mxu0 %v195
    %v1059 = vpop.f32.mrb[0].mxu0
    %v1060 = vadd.f32 %v742, %v1059
    %v1061 = vpop.f32.mrb[0].mxu0
    %v1062 = vadd.f32 %v746, %v1061
    %1063 = vmatprep.mubr.f32.mxu0 %v198
    %1064 = vmatmul.mubr.f32.gmra.mrb[0].mxu0 %v197
    %v1065 = vpop.f32.mrb[0].mxu0
    %v1066 = vadd.f32 %v742, %v1065
    %v1067 = vpop.f32.mrb[0].mxu0
    %v1068 = vadd.f32 %v746, %v1067
    %1069 = vdwg.mxu0
    %1070 = vmatprep.subr.mxu0 %v214
    %1071 = vmatpush1.msra.mxu0 %v213
    %1072 = vmatprep.subr.mxu0 %v230
    %1073 = vmatpush1.msra.mxu0 %v229
    %1074 = vmatprep.subr.mxu0 %v246
    %1075 = vmatpush1.msra.mxu0 %v245
    %1076 = vmatprep.subr.mxu0 %v262
    %1077 = vmatpush1.msra.mxu0 %v261
    %1078 = vmatprep.subr.mxu0 %v278
    %1079 = vmatpush1.msra.mxu0 %v277
    %1080 = vmatprep.subr.mxu0 %v294
    %1081 = vmatpush1.msra.mxu0 %v293
    %1082 = vmatprep.subr.mxu0 %v310
    %1083 = vmatpush1.msra.mxu0 %v309
    %1084 = vmatprep.subr.mxu0 %v326
    %1085 = vmatpush1.msra.mxu0 %v325
    %1086 = vmatprep.subr.mxu0 %v342
    %1087 = vmatpush1.msra.mxu0 %v341
    %1088 = vmatprep.subr.mxu0 %v358
    %1089 = vmatpush1.msra.mxu0 %v357
    %1090 = vmatprep.subr.mxu0 %v374
    %1091 = vmatpush1.msra.mxu0 %v373
    %1092 = vmatprep.subr.mxu0 %v390
    %1093 = vmatpush1.msra.mxu0 %v389
    %1094 = vmatprep.subr.mxu0 %v406
    %1095 = vmatpush1.msra.mxu0 %v405
    %1096 = vmatprep.subr.mxu0 %v422
    %1097 = vmatpush1.msra.mxu0 %v421
    %1098 = vmatprep.subr.mxu0 %v438
    %1099 = vmatpush1.msra.mxu0 %v437
    %1100 = vmatprep.subr.mxu0 %v454
    %1101 = vmatpush1.msra.mxu0 %v453
    %1102 = vmatprep.subr.mxu0 %v470
    %1103 = vmatpush1.msra.mxu0 %v469
    %1104 = vmatprep.subr.mxu0 %v486
    %1105 = vmatpush1.msra.mxu0 %v485
    %1106 = vmatprep.subr.mxu0 %v502
    %1107 = vmatpush1.msra.mxu0 %v501
    %1108 = vmatprep.subr.mxu0 %v518
    %1109 = vmatpush1.msra.mxu0 %v517
    %1110 = vmatprep.subr.mxu0 %v534
    %1111 = vmatpush1.msra.mxu0 %v533
    %1112 = vmatprep.subr.mxu0 %v550
    %1113 = vmatpush1.msra.mxu0 %v549
    %1114 = vmatprep.subr.mxu0 %v566
    %1115 = vmatpush1.msra.mxu0 %v565
    %1116 = vmatprep.subr.mxu0 %v582
    %1117 = vmatpush1.msra.mxu0 %v581
    %1118 = vmatprep.subr.mxu0 %v598
    %1119 = vmatpush1.msra.mxu0 %v597
    %1120 = vmatprep.subr.mxu0 %v614
    %1121 = vmatpush1.msra.mxu0 %v613
    %1122 = vmatprep.subr.mxu0 %v630
    %1123 = vmatpush1.msra.mxu0 %v629
    %1124 = vmatprep.subr.mxu0 %v646
    %1125 = vmatpush1.msra.mxu0 %v645
    %1126 = vmatprep.subr.mxu0 %v662
    %1127 = vmatpush1.msra.mxu0 %v661
    %1128 = vmatprep.subr.mxu0 %v678
    %1129 = vmatpush1.msra.mxu0 %v677
    %1130 = vmatprep.subr.mxu0 %v694
    %1131 = vmatpush1.msra.mxu0 %v693
    %1132 = vmatprep.subr.mxu0 %v710
    %1133 = vmatpush1.msra.mxu0 %v709
    %1134 = vmatprep.mubr.f32.mxu0 %v192
    %1135 = vmatmul.mubr.f32.gmra.mrb[0].mxu0 %v191
    %v1136 = vpop.f32.mrb[0].mxu0
    %v1137 = vadd.f32 %v750, %v1136
    %v1138 = vpop.f32.mrb[0].mxu0
    %v1139 = vadd.f32 %v754, %v1138
    %1140 = vmatprep.mubr.f32.mxu0 %v194
    %1141 = vmatmul.mubr.f32.gmra.mrb[0].mxu0 %v193
    %v1142 = vpop.f32.mrb[0].mxu0
    %v1143 = vadd.f32 %v750, %v1142
    %v1144 = vpop.f32.mrb[0].mxu0
    %v1145 = vadd.f32 %v754, %v1144
    %1146 = vmatprep.mubr.f32.mxu0 %v196
    %1147 = vmatmul.mubr.f32.gmra.mrb[0].mxu0 %v195
    %v1148 = vpop.f32.mrb[0].mxu0
    %v1149 = vadd.f32 %v750, %v1148
    %v1150 = vpop.f32.mrb[0].mxu0
    %v1151 = vadd.f32 %v754, %v1150
    %1152 = vmatprep.mubr.f32.mxu0 %v198
    %1153 = vmatmul.mubr.f32.gmra.mrb[0].mxu0 %v197
    %v1154 = vpop.f32.mrb[0].mxu0
    %v1155 = vadd.f32 %v750, %v1154
    %v1156 = vpop.f32.mrb[0].mxu0
    %v1157 = vadd.f32 %v754, %v1156
    %1158 = vdwg.mxu0
    %1159 = vmatprep.subr.mxu0 %v216
    %1160 = vmatpush1.msra.mxu0 %v215
    %1161 = vmatprep.subr.mxu0 %v232
    %1162 = vmatpush1.msra.mxu0 %v231
    %1163 = vmatprep.subr.mxu0 %v248
    %1164 = vmatpush1.msra.mxu0 %v247
    %1165 = vmatprep.subr.mxu0 %v264
    %1166 = vmatpush1.msra.mxu0 %v263
    %1167 = vmatprep.subr.mxu0 %v280
    %1168 = vmatpush1.msra.mxu0 %v279
    %1169 = vmatprep.subr.mxu0 %v296
    %1170 = vmatpush1.msra.mxu0 %v295
    %1171 = vmatprep.subr.mxu0 %v312
    %1172 = vmatpush1.msra.mxu0 %v311
    %1173 = vmatprep.subr.mxu0 %v328
    %1174 = vmatpush1.msra.mxu0 %v327
    %1175 = vmatprep.subr.mxu0 %v344
    %1176 = vmatpush1.msra.mxu0 %v343
    %1177 = vmatprep.subr.mxu0 %v360
    %1178 = vmatpush1.msra.mxu0 %v359
    %1179 = vmatprep.subr.mxu0 %v376
    %1180 = vmatpush1.msra.mxu0 %v375
    %1181 = vmatprep.subr.mxu0 %v392
    %1182 = vmatpush1.msra.mxu0 %v391
    %1183 = vmatprep.subr.mxu0 %v408
    %1184 = vmatpush1.msra.mxu0 %v407
    %1185 = vmatprep.subr.mxu0 %v424
    %1186 = vmatpush1.msra.mxu0 %v423
    %1187 = vmatprep.subr.mxu0 %v440
    %1188 = vmatpush1.msra.mxu0 %v439
    %1189 = vmatprep.subr.mxu0 %v456
    %1190 = vmatpush1.msra.mxu0 %v455
    %1191 = vmatprep.subr.mxu0 %v472
    %1192 = vmatpush1.msra.mxu0 %v471
    %1193 = vmatprep.subr.mxu0 %v488
    %1194 = vmatpush1.msra.mxu0 %v487
    %1195 = vmatprep.subr.mxu0 %v504
    %1196 = vmatpush1.msra.mxu0 %v503
    %1197 = vmatprep.subr.mxu0 %v520
    %1198 = vmatpush1.msra.mxu0 %v519
    %1199 = vmatprep.subr.mxu0 %v536
    %1200 = vmatpush1.msra.mxu0 %v535
    %1201 = vmatprep.subr.mxu0 %v552
    %1202 = vmatpush1.msra.mxu0 %v551
    %1203 = vmatprep.subr.mxu0 %v568
    %1204 = vmatpush1.msra.mxu0 %v567
    %1205 = vmatprep.subr.mxu0 %v584
    %1206 = vmatpush1.msra.mxu0 %v583
    %1207 = vmatprep.subr.mxu0 %v600
    %1208 = vmatpush1.msra.mxu0 %v599
    %1209 = vmatprep.subr.mxu0 %v616
    %1210 = vmatpush1.msra.mxu0 %v615
    %1211 = vmatprep.subr.mxu0 %v632
    %1212 = vmatpush1.msra.mxu0 %v631
    %1213 = vmatprep.subr.mxu0 %v648
    %1214 = vmatpush1.msra.mxu0 %v647
    %1215 = vmatprep.subr.mxu0 %v664
    %1216 = vmatpush1.msra.mxu0 %v663
    %1217 = vmatprep.subr.mxu0 %v680
    %1218 = vmatpush1.msra.mxu0 %v679
    %1219 = vmatprep.subr.mxu0 %v696
    %1220 = vmatpush1.msra.mxu0 %v695
    %1221 = vmatprep.subr.mxu0 %v712
    %1222 = vmatpush1.msra.mxu0 %v711
    %1223 = vmatprep.mubr.f32.mxu0 %v192
    %1224 = vmatmul.mubr.f32.gmra.mrb[0].mxu0 %v191
    %v1225 = vpop.f32.mrb[0].mxu0
    %v1226 = vadd.f32 %v758, %v1225
    %v1227 = vpop.f32.mrb[0].mxu0
    %v1228 = vadd.f32 %v762, %v1227
    %1229 = vmatprep.mubr.f32.mxu0 %v194
    %1230 = vmatmul.mubr.f32.gmra.mrb[0].mxu0 %v193
    %v1231 = vpop.f32.mrb[0].mxu0
    %v1232 = vadd.f32 %v758, %v1231
    %v1233 = vpop.f32.mrb[0].mxu0
    %v1234 = vadd.f32 %v762, %v1233
    %1235 = vmatprep.mubr.f32.mxu0 %v196
    %1236 = vmatmul.mubr.f32.gmra.mrb[0].mxu0 %v195
    %v1237 = vpop.f32.mrb[0].mxu0
    %v1238 = vadd.f32 %v758, %v1237
    %v1239 = vpop.f32.mrb[0].mxu0
    %v1240 = vadd.f32 %v762, %v1239
    %1241 = vmatprep.mubr.f32.mxu0 %v198
    %1242 = vmatmul.mubr.f32.gmra.mrb[0].mxu0 %v197
    %v1243 = vpop.f32.mrb[0].mxu0
    %v1244 = vadd.f32 %v758, %v1243
    %v1245 = vpop.f32.mrb[0].mxu0
    %v1246 = vadd.f32 %v762, %v1245
    %1247 = vdwg.mxu0
    %1248 = vmatprep.subr.mxu0 %v218
    %1249 = vmatpush1.msra.mxu0 %v217
    %1250 = vmatprep.subr.mxu0 %v234
    %1251 = vmatpush1.msra.mxu0 %v233
    %1252 = vmatprep.subr.mxu0 %v250
    %1253 = vmatpush1.msra.mxu0 %v249
    %1254 = vmatprep.subr.mxu0 %v266
    %1255 = vmatpush1.msra.mxu0 %v265
    %1256 = vmatprep.subr.mxu0 %v282
    %1257 = vmatpush1.msra.mxu0 %v281
    %1258 = vmatprep.subr.mxu0 %v298
    %1259 = vmatpush1.msra.mxu0 %v297
    %1260 = vmatprep.subr.mxu0 %v314
    %1261 = vmatpush1.msra.mxu0 %v313
    %1262 = vmatprep.subr.mxu0 %v330
    %1263 = vmatpush1.msra.mxu0 %v329
    %1264 = vmatprep.subr.mxu0 %v346
    %1265 = vmatpush1.msra.mxu0 %v345
    %1266 = vmatprep.subr.mxu0 %v362
    %1267 = vmatpush1.msra.mxu0 %v361
    %1268 = vmatprep.subr.mxu0 %v378
    %1269 = vmatpush1.msra.mxu0 %v377
    %1270 = vmatprep.subr.mxu0 %v394
    %1271 = vmatpush1.msra.mxu0 %v393
    %1272 = vmatprep.subr.mxu0 %v410
    %1273 = vmatpush1.msra.mxu0 %v409
    %1274 = vmatprep.subr.mxu0 %v426
    %1275 = vmatpush1.msra.mxu0 %v425
    %1276 = vmatprep.subr.mxu0 %v442
    %1277 = vmatpush1.msra.mxu0 %v441
    %1278 = vmatprep.subr.mxu0 %v458
    %1279 = vmatpush1.msra.mxu0 %v457
    %1280 = vmatprep.subr.mxu0 %v474
    %1281 = vmatpush1.msra.mxu0 %v473
    %1282 = vmatprep.subr.mxu0 %v490
    %1283 = vmatpush1.msra.mxu0 %v489
    %1284 = vmatprep.subr.mxu0 %v506
    %1285 = vmatpush1.msra.mxu0 %v505
    %1286 = vmatprep.subr.mxu0 %v522
    %1287 = vmatpush1.msra.mxu0 %v521
    %1288 = vmatprep.subr.mxu0 %v538
    %1289 = vmatpush1.msra.mxu0 %v537
    %1290 = vmatprep.subr.mxu0 %v554
    %1291 = vmatpush1.msra.mxu0 %v553
    %1292 = vmatprep.subr.mxu0 %v570
    %1293 = vmatpush1.msra.mxu0 %v569
    %1294 = vmatprep.subr.mxu0 %v586
    %1295 = vmatpush1.msra.mxu0 %v585
    %1296 = vmatprep.subr.mxu0 %v602
    %1297 = vmatpush1.msra.mxu0 %v601
    %1298 = vmatprep.subr.mxu0 %v618
    %1299 = vmatpush1.msra.mxu0 %v617
    %1300 = vmatprep.subr.mxu0 %v634
    %1301 = vmatpush1.msra.mxu0 %v633
    %1302 = vmatprep.subr.mxu0 %v650
    %1303 = vmatpush1.msra.mxu0 %v649
    %1304 = vmatprep.subr.mxu0 %v666
    %1305 = vmatpush1.msra.mxu0 %v665
    %1306 = vmatprep.subr.mxu0 %v682
    %1307 = vmatpush1.msra.mxu0 %v681
    %1308 = vmatprep.subr.mxu0 %v698
    %1309 = vmatpush1.msra.mxu0 %v697
    %1310 = vmatprep.subr.mxu0 %v714
    %1311 = vmatpush1.msra.mxu0 %v713
    %1312 = vmatprep.mubr.f32.mxu0 %v192
    %1313 = vmatmul.mubr.f32.gmra.mrb[0].mxu0 %v191
    %v1314 = vpop.f32.mrb[0].mxu0
    %v1315 = vadd.f32 %v766, %v1314
    %v1316 = vpop.f32.mrb[0].mxu0
    %v1317 = vadd.f32 %v770, %v1316
    %1318 = vmatprep.mubr.f32.mxu0 %v194
    %1319 = vmatmul.mubr.f32.gmra.mrb[0].mxu0 %v193
    %v1320 = vpop.f32.mrb[0].mxu0
    %v1321 = vadd.f32 %v766, %v1320
    %v1322 = vpop.f32.mrb[0].mxu0
    %v1323 = vadd.f32 %v770, %v1322
    %1324 = vmatprep.mubr.f32.mxu0 %v196
    %1325 = vmatmul.mubr.f32.gmra.mrb[0].mxu0 %v195
    %v1326 = vpop.f32.mrb[0].mxu0
    %v1327 = vadd.f32 %v766, %v1326
    %v1328 = vpop.f32.mrb[0].mxu0
    %v1329 = vadd.f32 %v770, %v1328
    %1330 = vmatprep.mubr.f32.mxu0 %v198
    %1331 = vmatmul.mubr.f32.gmra.mrb[0].mxu0 %v197
    %v1332 = vpop.f32.mrb[0].mxu0
    %v1333 = vadd.f32 %v766, %v1332
    %v1334 = vpop.f32.mrb[0].mxu0
    %v1335 = vadd.f32 %v770, %v1334
    %1336 = vdwg.mxu0
    %1337 = vmatprep.subr.mxu0 %v220
    %1338 = vmatpush1.msra.mxu0 %v219
    %1339 = vmatprep.subr.mxu0 %v236
    %1340 = vmatpush1.msra.mxu0 %v235
    %1341 = vmatprep.subr.mxu0 %v252
    %1342 = vmatpush1.msra.mxu0 %v251
    %1343 = vmatprep.subr.mxu0 %v268
    %1344 = vmatpush1.msra.mxu0 %v267
    %1345 = vmatprep.subr.mxu0 %v284
    %1346 = vmatpush1.msra.mxu0 %v283
    %1347 = vmatprep.subr.mxu0 %v300
    %1348 = vmatpush1.msra.mxu0 %v299
    %1349 = vmatprep.subr.mxu0 %v316
    %1350 = vmatpush1.msra.mxu0 %v315
    %1351 = vmatprep.subr.mxu0 %v332
    %1352 = vmatpush1.msra.mxu0 %v331
    %1353 = vmatprep.subr.mxu0 %v348
    %1354 = vmatpush1.msra.mxu0 %v347
    %1355 = vmatprep.subr.mxu0 %v364
    %1356 = vmatpush1.msra.mxu0 %v363
    %1357 = vmatprep.subr.mxu0 %v380
    %1358 = vmatpush1.msra.mxu0 %v379
    %1359 = vmatprep.subr.mxu0 %v396
    %1360 = vmatpush1.msra.mxu0 %v395
    %1361 = vmatprep.subr.mxu0 %v412
    %1362 = vmatpush1.msra.mxu0 %v411
    %1363 = vmatprep.subr.mxu0 %v428
    %1364 = vmatpush1.msra.mxu0 %v427
    %1365 = vmatprep.subr.mxu0 %v444
    %1366 = vmatpush1.msra.mxu0 %v443
    %1367 = vmatprep.subr.mxu0 %v460
    %1368 = vmatpush1.msra.mxu0 %v459
    %1369 = vmatprep.subr.mxu0 %v476
    %1370 = vmatpush1.msra.mxu0 %v475
    %1371 = vmatprep.subr.mxu0 %v492
    %1372 = vmatpush1.msra.mxu0 %v491
    %1373 = vmatprep.subr.mxu0 %v508
    %1374 = vmatpush1.msra.mxu0 %v507
    %1375 = vmatprep.subr.mxu0 %v524
    %1376 = vmatpush1.msra.mxu0 %v523
    %1377 = vmatprep.subr.mxu0 %v540
    %1378 = vmatpush1.msra.mxu0 %v539
    %1379 = vmatprep.subr.mxu0 %v556
    %1380 = vmatpush1.msra.mxu0 %v555
    %1381 = vmatprep.subr.mxu0 %v572
    %1382 = vmatpush1.msra.mxu0 %v571
    %1383 = vmatprep.subr.mxu0 %v588
    %1384 = vmatpush1.msra.mxu0 %v587
    %1385 = vmatprep.subr.mxu0 %v604
    %1386 = vmatpush1.msra.mxu0 %v603
    %1387 = vmatprep.subr.mxu0 %v620
    %1388 = vmatpush1.msra.mxu0 %v619
    %1389 = vmatprep.subr.mxu0 %v636
    %1390 = vmatpush1.msra.mxu0 %v635
    %1391 = vmatprep.subr.mxu0 %v652
    %1392 = vmatpush1.msra.mxu0 %v651
    %1393 = vmatprep.subr.mxu0 %v668
    %1394 = vmatpush1.msra.mxu0 %v667
    %1395 = vmatprep.subr.mxu0 %v684
    %1396 = vmatpush1.msra.mxu0 %v683
    %1397 = vmatprep.subr.mxu0 %v700
    %1398 = vmatpush1.msra.mxu0 %v699
    %1399 = vmatprep.subr.mxu0 %v716
    %1400 = vmatpush1.msra.mxu0 %v715
    %1401 = vmatprep.mubr.f32.mxu0 %v192
    %1402 = vmatmul.mubr.f32.gmra.mrb[0].mxu0 %v191
    %v1403 = vpop.f32.mrb[0].mxu0
    %v1404 = vadd.f32 %v774, %v1403
    %v1405 = vpop.f32.mrb[0].mxu0
    %v1406 = vadd.f32 %v778, %v1405
    %1407 = vmatprep.mubr.f32.mxu0 %v194
    %1408 = vmatmul.mubr.f32.gmra.mrb[0].mxu0 %v193
    %v1409 = vpop.f32.mrb[0].mxu0
    %v1410 = vadd.f32 %v774, %v1409
    %v1411 = vpop.f32.mrb[0].mxu0
    %v1412 = vadd.f32 %v778, %v1411
    %1413 = vmatprep.mubr.f32.mxu0 %v196
    %1414 = vmatmul.mubr.f32.gmra.mrb[0].mxu0 %v195
    %v1415 = vpop.f32.mrb[0].mxu0
    %v1416 = vadd.f32 %v774, %v1415
    %v1417 = vpop.f32.mrb[0].mxu0
    %v1418 = vadd.f32 %v778, %v1417
    %1419 = vmatprep.mubr.f32.mxu0 %v198
    %1420 = vmatmul.mubr.f32.gmra.mrb[0].mxu0 %v197
    %v1421 = vpop.f32.mrb[0].mxu0
    %v1422 = vadd.f32 %v774, %v1421
    %v1423 = vpop.f32.mrb[0].mxu0
    %v1424 = vadd.f32 %v778, %v1423
    %1425 = vdwg.mxu0
    %1426 = vmatprep.subr.mxu0 %v222
    %1427 = vmatpush1.msra.mxu0 %v221
    %1428 = vmatprep.subr.mxu0 %v238
    %1429 = vmatpush1.msra.mxu0 %v237
    %1430 = vmatprep.subr.mxu0 %v254
    %1431 = vmatpush1.msra.mxu0 %v253
    %1432 = vmatprep.subr.mxu0 %v270
    %1433 = vmatpush1.msra.mxu0 %v269
    %1434 = vmatprep.subr.mxu0 %v286
    %1435 = vmatpush1.msra.mxu0 %v285
    %1436 = vmatprep.subr.mxu0 %v302
    %1437 = vmatpush1.msra.mxu0 %v301
    %1438 = vmatprep.subr.mxu0 %v318
    %1439 = vmatpush1.msra.mxu0 %v317
    %1440 = vmatprep.subr.mxu0 %v334
    %1441 = vmatpush1.msra.mxu0 %v333
    %1442 = vmatprep.subr.mxu0 %v350
    %1443 = vmatpush1.msra.mxu0 %v349
    %1444 = vmatprep.subr.mxu0 %v366
    %1445 = vmatpush1.msra.mxu0 %v365
    %1446 = vmatprep.subr.mxu0 %v382
    %1447 = vmatpush1.msra.mxu0 %v381
    %1448 = vmatprep.subr.mxu0 %v398
    %1449 = vmatpush1.msra.mxu0 %v397
    %1450 = vmatprep.subr.mxu0 %v414
    %1451 = vmatpush1.msra.mxu0 %v413
    %1452 = vmatprep.subr.mxu0 %v430
    %1453 = vmatpush1.msra.mxu0 %v429
    %1454 = vmatprep.subr.mxu0 %v446
    %1455 = vmatpush1.msra.mxu0 %v445
    %1456 = vmatprep.subr.mxu0 %v462
    %1457 = vmatpush1.msra.mxu0 %v461
    %1458 = vmatprep.subr.mxu0 %v478
    %1459 = vmatpush1.msra.mxu0 %v477
    %1460 = vmatprep.subr.mxu0 %v494
    %1461 = vmatpush1.msra.mxu0 %v493
    %1462 = vmatprep.subr.mxu0 %v510
    %1463 = vmatpush1.msra.mxu0 %v509
    %1464 = vmatprep.subr.mxu0 %v526
    %1465 = vmatpush1.msra.mxu0 %v525
    %1466 = vmatprep.subr.mxu0 %v542
    %1467 = vmatpush1.msra.mxu0 %v541
    %1468 = vmatprep.subr.mxu0 %v558
    %1469 = vmatpush1.msra.mxu0 %v557
    %1470 = vmatprep.subr.mxu0 %v574
    %1471 = vmatpush1.msra.mxu0 %v573
    %1472 = vmatprep.subr.mxu0 %v590
    %1473 = vmatpush1.msra.mxu0 %v589
    %1474 = vmatprep.subr.mxu0 %v606
    %1475 = vmatpush1.msra.mxu0 %v605
    %1476 = vmatprep.subr.mxu0 %v622
    %1477 = vmatpush1.msra.mxu0 %v621
    %1478 = vmatprep.subr.mxu0 %v638
    %1479 = vmatpush1.msra.mxu0 %v637
    %1480 = vmatprep.subr.mxu0 %v654
    %1481 = vmatpush1.msra.mxu0 %v653
    %1482 = vmatprep.subr.mxu0 %v670
    %1483 = vmatpush1.msra.mxu0 %v669
    %1484 = vmatprep.subr.mxu0 %v686
    %1485 = vmatpush1.msra.mxu0 %v685
    %1486 = vmatprep.subr.mxu0 %v702
    %1487 = vmatpush1.msra.mxu0 %v701
    %1488 = vmatprep.subr.mxu0 %v718
    %1489 = vmatpush1.msra.mxu0 %v717
    %1490 = vmatprep.mubr.f32.mxu0 %v192
    %1491 = vmatmul.mubr.f32.gmra.mrb[0].mxu0 %v191
    %v1492 = vpop.f32.mrb[0].mxu0
    %v1493 = vadd.f32 %v782, %v1492
    %v1494 = vpop.f32.mrb[0].mxu0
    %v1495 = vadd.f32 %v786, %v1494
    %1496 = vmatprep.mubr.f32.mxu0 %v194
    %1497 = vmatmul.mubr.f32.gmra.mrb[0].mxu0 %v193
    %v1498 = vpop.f32.mrb[0].mxu0
    %v1499 = vadd.f32 %v782, %v1498
    %v1500 = vpop.f32.mrb[0].mxu0
    %v1501 = vadd.f32 %v786, %v1500
    %1502 = vmatprep.mubr.f32.mxu0 %v196
    %1503 = vmatmul.mubr.f32.gmra.mrb[0].mxu0 %v195
    %v1504 = vpop.f32.mrb[0].mxu0
    %v1505 = vadd.f32 %v782, %v1504
    %v1506 = vpop.f32.mrb[0].mxu0
    %v1507 = vadd.f32 %v786, %v1506
    %1508 = vmatprep.mubr.f32.mxu0 %v198
    %1509 = vmatmul.mubr.f32.gmra.mrb[0].mxu0 %v197
    %v1510 = vpop.f32.mrb[0].mxu0
    %v1511 = vadd.f32 %v782, %v1510
    %v1512 = vpop.f32.mrb[0].mxu0
    %v1513 = vadd.f32 %v786, %v1512
    %1514 = vdwg.mxu0
    %1515 = vst [vmem:[#allocation20] sm:$0xff] %v870
    %1516 = vst [vmem:[#allocation20 + $0x8] sm:$0xff] %v872
    %1517 = vst [vmem:[#allocation20 + $0x10] sm:$0xff] %v959
    %1518 = vst [vmem:[#allocation20 + $0x18] sm:$0xff] %v961
    %1519 = vst [vmem:[#allocation20 + $0x20] sm:$0xff] %v1048
    %1520 = vst [vmem:[#allocation20 + $0x28] sm:$0xff] %v1050
    %1521 = vst [vmem:[#allocation20 + $0x30] sm:$0xff] %v1137
    %1522 = vst [vmem:[#allocation20 + $0x38] sm:$0xff] %v1139
    %1523 = vst [vmem:[#allocation20 + $0x40] sm:$0xff] %v1226
    %1524 = vst [vmem:[#allocation20 + $0x48] sm:$0xff] %v1228
    %1525 = vst [vmem:[#allocation20 + $0x50] sm:$0xff] %v1315
    %1526 = vst [vmem:[#allocation20 + $0x58] sm:$0xff] %v1317
    %1527 = vst [vmem:[#allocation20 + $0x60] sm:$0xff] %v1404
    %1528 = vst [vmem:[#allocation20 + $0x68] sm:$0xff] %v1406
    %1529 = vst [vmem:[#allocation20 + $0x70] sm:$0xff] %v1493
    %1530 = vst [vmem:[#allocation20 + $0x78] sm:$0xff] %v1495
    %1531 = vst [vmem:[#allocation20 + $0x80] sm:$0xff] %v876
    %1532 = vst [vmem:[#allocation20 + $0x88] sm:$0xff] %v878
    %1533 = vst [vmem:[#allocation20 + $0x90] sm:$0xff] %v965
    %1534 = vst [vmem:[#allocation20 + $0x98] sm:$0xff] %v967
    %1535 = vst [vmem:[#allocation20 + $0xa0] sm:$0xff] %v1054
    %1536 = vst [vmem:[#allocation20 + $0xa8] sm:$0xff] %v1056
    %1537 = vst [vmem:[#allocation20 + $0xb0] sm:$0xff] %v1143
    %1538 = vst [vmem:[#allocation20 + $0xb8] sm:$0xff] %v1145
    %1539 = vst [vmem:[#allocation20 + $0xc0] sm:$0xff] %v1232
    %1540 = vst [vmem:[#allocation20 + $0xc8] sm:$0xff] %v1234
    %1541 = vst [vmem:[#allocation20 + $0xd0] sm:$0xff] %v1321
    %1542 = vst [vmem:[#allocation20 + $0xd8] sm:$0xff] %v1323
    %1543 = vst [vmem:[#allocation20 + $0xe0] sm:$0xff] %v1410
    %1544 = vst [vmem:[#allocation20 + $0xe8] sm:$0xff] %v1412
    %1545 = vst [vmem:[#allocation20 + $0xf0] sm:$0xff] %v1499
    %1546 = vst [vmem:[#allocation20 + $0xf8] sm:$0xff] %v1501
    %1547 = vst [vmem:[#allocation20 + $0x100] sm:$0xff] %v882
    %1548 = vst [vmem:[#allocation20 + $0x108] sm:$0xff] %v884
    %1549 = vst [vmem:[#allocation20 + $0x110] sm:$0xff] %v971
    %1550 = vst [vmem:[#allocation20 + $0x118] sm:$0xff] %v973
    %1551 = vst [vmem:[#allocation20 + $0x120] sm:$0xff] %v1060
    %1552 = vst [vmem:[#allocation20 + $0x128] sm:$0xff] %v1062
    %1553 = vst [vmem:[#allocation20 + $0x130] sm:$0xff] %v1149
    %1554 = vst [vmem:[#allocation20 + $0x138] sm:$0xff] %v1151
    %1555 = vst [vmem:[#allocation20 + $0x140] sm:$0xff] %v1238
    %1556 = vst [vmem:[#allocation20 + $0x148] sm:$0xff] %v1240
    %1557 = vst [vmem:[#allocation20 + $0x150] sm:$0xff] %v1327
    %1558 = vst [vmem:[#allocation20 + $0x158] sm:$0xff] %v1329
    %1559 = vst [vmem:[#allocation20 + $0x160] sm:$0xff] %v1416
    %1560 = vst [vmem:[#allocation20 + $0x168] sm:$0xff] %v1418
    %1561 = vst [vmem:[#allocation20 + $0x170] sm:$0xff] %v1505
    %1562 = vst [vmem:[#allocation20 + $0x178] sm:$0xff] %v1507
    %1563 = vst [vmem:[#allocation20 + $0x180] sm:$0xff] %v888
    %1564 = vst [vmem:[#allocation20 + $0x188] sm:$0xff] %v890
    %1565 = vst [vmem:[#allocation20 + $0x190] sm:$0xff] %v977
    %1566 = vst [vmem:[#allocation20 + $0x198] sm:$0xff] %v979
    %1567 = vst [vmem:[#allocation20 + $0x1a0] sm:$0xff] %v1066
    %1568 = vst [vmem:[#allocation20 + $0x1a8] sm:$0xff] %v1068
    %1569 = vst [vmem:[#allocation20 + $0x1b0] sm:$0xff] %v1155
    %1570 = vst [vmem:[#allocation20 + $0x1b8] sm:$0xff] %v1157
    %1571 = vst [vmem:[#allocation20 + $0x1c0] sm:$0xff] %v1244
    %1572 = vst [vmem:[#allocation20 + $0x1c8] sm:$0xff] %v1246
    %1573 = vst [vmem:[#allocation20 + $0x1d0] sm:$0xff] %v1333
    %1574 = vst [vmem:[#allocation20 + $0x1d8] sm:$0xff] %v1335
    %1575 = vst [vmem:[#allocation20 + $0x1e0] sm:$0xff] %v1422
    %1576 = vst [vmem:[#allocation20 + $0x1e8] sm:$0xff] %v1424
    %1577 = vst [vmem:[#allocation20 + $0x1f0] sm:$0xff] %v1511
    %1578 = vst [vmem:[#allocation20 + $0x1f8] sm:$0xff] %v1513
    %v1579 = vld [vmem:[#allocation11] sm:$0xff]
    %v1580 = vld [vmem:[#allocation11 + $0x8] sm:$0xff]
    %v1581 = vld [vmem:[#allocation11 + $0x10] sm:$0xff]
    %v1582 = vld [vmem:[#allocation11 + $0x18] sm:$0xff]
    %v1583 = vld [vmem:[#allocation11 + $0x20] sm:$0xff]
    %v1584 = vld [vmem:[#allocation11 + $0x28] sm:$0xff]
    %v1585 = vld [vmem:[#allocation11 + $0x30] sm:$0xff]
    %v1586 = vld [vmem:[#allocation11 + $0x38] sm:$0xff]
    %v1587 = vld [vmem:[#allocation11 + $0x40] sm:$0xff]
    %v1588 = vld [vmem:[#allocation11 + $0x48] sm:$0xff]
    %v1589 = vld [vmem:[#allocation11 + $0x50] sm:$0xff]
    %v1590 = vld [vmem:[#allocation11 + $0x58] sm:$0xff]
    %v1591 = vld [vmem:[#allocation11 + $0x60] sm:$0xff]
    %v1592 = vld [vmem:[#allocation11 + $0x68] sm:$0xff]
    %v1593 = vld [vmem:[#allocation11 + $0x70] sm:$0xff]
    %v1594 = vld [vmem:[#allocation11 + $0x78] sm:$0xff]
    %v1595 = vld [vmem:[#allocation11 + $0x80] sm:$0xff]
    %v1596 = vld [vmem:[#allocation11 + $0x88] sm:$0xff]
    %v1597 = vld [vmem:[#allocation11 + $0x90] sm:$0xff]
    %v1598 = vld [vmem:[#allocation11 + $0x98] sm:$0xff]
    %v1599 = vld [vmem:[#allocation11 + $0xa0] sm:$0xff]
    %v1600 = vld [vmem:[#allocation11 + $0xa8] sm:$0xff]
    %v1601 = vld [vmem:[#allocation11 + $0xb0] sm:$0xff]
    %v1602 = vld [vmem:[#allocation11 + $0xb8] sm:$0xff]
    %v1603 = vld [vmem:[#allocation11 + $0xc0] sm:$0xff]
    %v1604 = vld [vmem:[#allocation11 + $0xc8] sm:$0xff]
    %v1605 = vld [vmem:[#allocation11 + $0xd0] sm:$0xff]
    %v1606 = vld [vmem:[#allocation11 + $0xd8] sm:$0xff]
    %v1607 = vld [vmem:[#allocation11 + $0xe0] sm:$0xff]
    %v1608 = vld [vmem:[#allocation11 + $0xe8] sm:$0xff]
    %v1609 = vld [vmem:[#allocation11 + $0xf0] sm:$0xff]
    %v1610 = vld [vmem:[#allocation11 + $0xf8] sm:$0xff]
    %v1611 = vld [vmem:[#allocation11 + $0x100] sm:$0xff]
    %v1612 = vld [vmem:[#allocation11 + $0x108] sm:$0xff]
    %v1613 = vld [vmem:[#allocation11 + $0x110] sm:$0xff]
    %v1614 = vld [vmem:[#allocation11 + $0x118] sm:$0xff]
    %v1615 = vld [vmem:[#allocation11 + $0x120] sm:$0xff]
    %v1616 = vld [vmem:[#allocation11 + $0x128] sm:$0xff]
    %v1617 = vld [vmem:[#allocation11 + $0x130] sm:$0xff]
    %v1618 = vld [vmem:[#allocation11 + $0x138] sm:$0xff]
    %v1619 = vld [vmem:[#allocation11 + $0x140] sm:$0xff]
    %v1620 = vld [vmem:[#allocation11 + $0x148] sm:$0xff]
    %v1621 = vld [vmem:[#allocation11 + $0x150] sm:$0xff]
    %v1622 = vld [vmem:[#allocation11 + $0x158] sm:$0xff]
    %v1623 = vld [vmem:[#allocation11 + $0x160] sm:$0xff]
    %v1624 = vld [vmem:[#allocation11 + $0x168] sm:$0xff]
    %v1625 = vld [vmem:[#allocation11 + $0x170] sm:$0xff]
    %v1626 = vld [vmem:[#allocation11 + $0x178] sm:$0xff]
    %v1627 = vld [vmem:[#allocation11 + $0x180] sm:$0xff]
    %v1628 = vld [vmem:[#allocation11 + $0x188] sm:$0xff]
    %v1629 = vld [vmem:[#allocation11 + $0x190] sm:$0xff]
    %v1630 = vld [vmem:[#allocation11 + $0x198] sm:$0xff]
    %v1631 = vld [vmem:[#allocation11 + $0x1a0] sm:$0xff]
    %v1632 = vld [vmem:[#allocation11 + $0x1a8] sm:$0xff]
    %v1633 = vld [vmem:[#allocation11 + $0x1b0] sm:$0xff]
    %v1634 = vld [vmem:[#allocation11 + $0x1b8] sm:$0xff]
    %v1635 = vld [vmem:[#allocation11 + $0x1c0] sm:$0xff]
    %v1636 = vld [vmem:[#allocation11 + $0x1c8] sm:$0xff]
    %v1637 = vld [vmem:[#allocation11 + $0x1d0] sm:$0xff]
    %v1638 = vld [vmem:[#allocation11 + $0x1d8] sm:$0xff]
    %v1639 = vld [vmem:[#allocation11 + $0x1e0] sm:$0xff]
    %v1640 = vld [vmem:[#allocation11 + $0x1e8] sm:$0xff]
    %v1641 = vld [vmem:[#allocation11 + $0x1f0] sm:$0xff]
    %v1642 = vld [vmem:[#allocation11 + $0x1f8] sm:$0xff]
    %v1643 = vld [vmem:[#allocation13] sm:$0x3]
    %v1645 = vlaneseq
    %v1646 = vshrl.u32 %v1645, 7
    %v1647 = vsub.s32 0, %v1646
    %v1648 = vrot.slane %v1643, %v1647
    %v1649 = vlaneseq
    %v1650 = vshrl.u32 %v1649, 7
    %v1651 = vsub.s32 1, %v1650
    %v1652 = vrot.slane %v1643, %v1651
    %1655 = vmatprep.subr.mxu0 %v1580
    %1656 = vmatpush1.msra.mxu0 %v1579
    %1657 = vmatprep.subr.mxu0 %v1582
    %1658 = vmatpush1.msra.mxu0 %v1581
    %1659 = vmatprep.subr.mxu0 %v1584
    %1660 = vmatpush1.msra.mxu0 %v1583
    %1661 = vmatprep.subr.mxu0 %v1586
    %1662 = vmatpush1.msra.mxu0 %v1585
    %1663 = vmatprep.subr.mxu0 %v1588
    %1664 = vmatpush1.msra.mxu0 %v1587
    %1665 = vmatprep.subr.mxu0 %v1590
    %1666 = vmatpush1.msra.mxu0 %v1589
    %1667 = vmatprep.subr.mxu0 %v1592
    %1668 = vmatpush1.msra.mxu0 %v1591
    %1669 = vmatprep.subr.mxu0 %v1594
    %1670 = vmatpush1.msra.mxu0 %v1593
    %1671 = vmatprep.subr.mxu0 %v1596
    %1672 = vmatpush1.msra.mxu0 %v1595
    %1673 = vmatprep.subr.mxu0 %v1598
    %1674 = vmatpush1.msra.mxu0 %v1597
    %1675 = vmatprep.subr.mxu0 %v1600
    %1676 = vmatpush1.msra.mxu0 %v1599
    %1677 = vmatprep.subr.mxu0 %v1602
    %1678 = vmatpush1.msra.mxu0 %v1601
    %1679 = vmatprep.subr.mxu0 %v1604
    %1680 = vmatpush1.msra.mxu0 %v1603
    %1681 = vmatprep.subr.mxu0 %v1606
    %1682 = vmatpush1.msra.mxu0 %v1605
    %1683 = vmatprep.subr.mxu0 %v1608
    %1684 = vmatpush1.msra.mxu0 %v1607
    %1685 = vmatprep.subr.mxu0 %v1610
    %1686 = vmatpush1.msra.mxu0 %v1609
    %1687 = vmatprep.subr.mxu0 %v1612
    %1688 = vmatpush1.msra.mxu0 %v1611
    %1689 = vmatprep.subr.mxu0 %v1614
    %1690 = vmatpush1.msra.mxu0 %v1613
    %1691 = vmatprep.subr.mxu0 %v1616
    %1692 = vmatpush1.msra.mxu0 %v1615
    %1693 = vmatprep.subr.mxu0 %v1618
    %1694 = vmatpush1.msra.mxu0 %v1617
    %1695 = vmatprep.subr.mxu0 %v1620
    %1696 = vmatpush1.msra.mxu0 %v1619
    %1697 = vmatprep.subr.mxu0 %v1622
    %1698 = vmatpush1.msra.mxu0 %v1621
    %1699 = vmatprep.subr.mxu0 %v1624
    %1700 = vmatpush1.msra.mxu0 %v1623
    %1701 = vmatprep.subr.mxu0 %v1626
    %1702 = vmatpush1.msra.mxu0 %v1625
    %1703 = vmatprep.subr.mxu0 %v1628
    %1704 = vmatpush1.msra.mxu0 %v1627
    %1705 = vmatprep.subr.mxu0 %v1630
    %1706 = vmatpush1.msra.mxu0 %v1629
    %1707 = vmatprep.subr.mxu0 %v1632
    %1708 = vmatpush1.msra.mxu0 %v1631
    %1709 = vmatprep.subr.mxu0 %v1634
    %1710 = vmatpush1.msra.mxu0 %v1633
    %1711 = vmatprep.subr.mxu0 %v1636
    %1712 = vmatpush1.msra.mxu0 %v1635
    %1713 = vmatprep.subr.mxu0 %v1638
    %1714 = vmatpush1.msra.mxu0 %v1637
    %1715 = vmatprep.subr.mxu0 %v1640
    %1716 = vmatpush1.msra.mxu0 %v1639
    %1717 = vmatprep.subr.mxu0 %v1642
    %1718 = vmatpush1.msra.mxu0 %v1641
    %1719 = vmatprep.mubr.f32.mxu0 %v192
    %1720 = vmatmul.mubr.f32.gmra.mrb[0].mxu0 %v191
    %v1721 = vpop.f32.mrb[0].mxu0
    %v1722 = vadd.f32 %v1648, %v1721
    %v1723 = vpop.f32.mrb[0].mxu0
    %v1724 = vadd.f32 %v1652, %v1723
    %1725 = vmatprep.mubr.f32.mxu0 %v194
    %1726 = vmatmul.mubr.f32.gmra.mrb[0].mxu0 %v193
    %v1727 = vpop.f32.mrb[0].mxu0
    %v1728 = vadd.f32 %v1648, %v1727
    %v1729 = vpop.f32.mrb[0].mxu0
    %v1730 = vadd.f32 %v1652, %v1729
    %1731 = vmatprep.mubr.f32.mxu0 %v196
    %1732 = vmatmul.mubr.f32.gmra.mrb[0].mxu0 %v195
    %v1733 = vpop.f32.mrb[0].mxu0
    %v1734 = vadd.f32 %v1648, %v1733
    %v1735 = vpop.f32.mrb[0].mxu0
    %v1736 = vadd.f32 %v1652, %v1735
    %1737 = vmatprep.mubr.f32.mxu0 %v198
    %1738 = vmatmul.mubr.f32.gmra.mrb[0].mxu0 %v197
    %v1739 = vpop.f32.mrb[0].mxu0
    %v1740 = vadd.f32 %v1648, %v1739
    %v1741 = vpop.f32.mrb[0].mxu0
    %v1742 = vadd.f32 %v1652, %v1741
    %1743 = vdwg.mxu0
    %v1744 = vmul.f32 %v1722, %v199
    %v1745 = vmul.f32 %v1728, %v200
    %v1746 = vmul.f32 %v1734, %v201
    %v1747 = vmul.f32 %v1740, %v202
    %v1748 = vmul.f32 %v1724, %v203
    %v1749 = vmul.f32 %v1730, %v204
    %v1750 = vmul.f32 %v1736, %v205
    %v1751 = vmul.f32 %v1742, %v206
    %v1752 = vsub.f32 %v1744, %v1748
    %v1753 = vsub.f32 %v1745, %v1749
    %v1754 = vsub.f32 %v1746, %v1750
    %v1755 = vsub.f32 %v1747, %v1751
    %v1756 = vmul.f32 %v1722, %v203
    %v1757 = vmul.f32 %v1728, %v204
    %v1758 = vmul.f32 %v1734, %v205
    %v1759 = vmul.f32 %v1740, %v206
    %v1760 = vmul.f32 %v1724, %v199
    %v1761 = vmul.f32 %v1730, %v200
    %v1762 = vmul.f32 %v1736, %v201
    %v1763 = vmul.f32 %v1742, %v202
    %v1764 = vadd.f32 %v1756, %v1760
    %v1765 = vadd.f32 %v1757, %v1761
    %v1766 = vadd.f32 %v1758, %v1762
    %v1767 = vadd.f32 %v1759, %v1763
    %1768 = vst [vmem:[#allocation21] sm:$0xff] %v1752
    %1769 = vst [vmem:[#allocation21 + $0x8] sm:$0xff] %v1764
    %1770 = vst [vmem:[#allocation21 + $0x10] sm:$0xff] %v1753
    %1771 = vst [vmem:[#allocation21 + $0x18] sm:$0xff] %v1765
    %1772 = vst [vmem:[#allocation21 + $0x20] sm:$0xff] %v1754
    %1773 = vst [vmem:[#allocation21 + $0x28] sm:$0xff] %v1766
    %1774 = vst [vmem:[#allocation21 + $0x30] sm:$0xff] %v1755
    %1775 = vst [vmem:[#allocation21 + $0x38] sm:$0xff] %v1767
    %v1776 = vld [vmem:[#allocation14] sm:$0xff]
    %v1777 = vld [vmem:[#allocation14 + $0x8] sm:$0xff]
    %v1778 = vld [vmem:[#allocation14 + $0x10] sm:$0xff]
    %v1779 = vld [vmem:[#allocation14 + $0x18] sm:$0xff]
    %v1780 = vld [vmem:[#allocation14 + $0x20] sm:$0xff]
    %v1781 = vld [vmem:[#allocation14 + $0x28] sm:$0xff]
    %v1782 = vld [vmem:[#allocation14 + $0x30] sm:$0xff]
    %v1783 = vld [vmem:[#allocation14 + $0x38] sm:$0xff]
    %v1784 = vld [vmem:[#allocation14 + $0x40] sm:$0xff]
    %v1785 = vld [vmem:[#allocation14 + $0x48] sm:$0xff]
    %v1786 = vld [vmem:[#allocation14 + $0x50] sm:$0xff]
    %v1787 = vld [vmem:[#allocation14 + $0x58] sm:$0xff]
    %v1788 = vld [vmem:[#allocation14 + $0x60] sm:$0xff]
    %v1789 = vld [vmem:[#allocation14 + $0x68] sm:$0xff]
    %v1790 = vld [vmem:[#allocation14 + $0x70] sm:$0xff]
    %v1791 = vld [vmem:[#allocation14 + $0x78] sm:$0xff]
    %v1792 = vld [vmem:[#allocation14 + $0x80] sm:$0xff]
    %v1793 = vld [vmem:[#allocation14 + $0x88] sm:$0xff]
    %v1794 = vld [vmem:[#allocation14 + $0x90] sm:$0xff]
    %v1795 = vld [vmem:[#allocation14 + $0x98] sm:$0xff]
    %v1796 = vld [vmem:[#allocation14 + $0xa0] sm:$0xff]
    %v1797 = vld [vmem:[#allocation14 + $0xa8] sm:$0xff]
    %v1798 = vld [vmem:[#allocation14 + $0xb0] sm:$0xff]
    %v1799 = vld [vmem:[#allocation14 + $0xb8] sm:$0xff]
    %v1800 = vld [vmem:[#allocation14 + $0xc0] sm:$0xff]
    %v1801 = vld [vmem:[#allocation14 + $0xc8] sm:$0xff]
    %v1802 = vld [vmem:[#allocation14 + $0xd0] sm:$0xff]
    %v1803 = vld [vmem:[#allocation14 + $0xd8] sm:$0xff]
    %v1804 = vld [vmem:[#allocation14 + $0xe0] sm:$0xff]
    %v1805 = vld [vmem:[#allocation14 + $0xe8] sm:$0xff]
    %v1806 = vld [vmem:[#allocation14 + $0xf0] sm:$0xff]
    %v1807 = vld [vmem:[#allocation14 + $0xf8] sm:$0xff]
    %v1808 = vld [vmem:[#allocation14 + $0x100] sm:$0xff]
    %v1809 = vld [vmem:[#allocation14 + $0x108] sm:$0xff]
    %v1810 = vld [vmem:[#allocation14 + $0x110] sm:$0xff]
    %v1811 = vld [vmem:[#allocation14 + $0x118] sm:$0xff]
    %v1812 = vld [vmem:[#allocation14 + $0x120] sm:$0xff]
    %v1813 = vld [vmem:[#allocation14 + $0x128] sm:$0xff]
    %v1814 = vld [vmem:[#allocation14 + $0x130] sm:$0xff]
    %v1815 = vld [vmem:[#allocation14 + $0x138] sm:$0xff]
    %v1816 = vld [vmem:[#allocation14 + $0x140] sm:$0xff]
    %v1817 = vld [vmem:[#allocation14 + $0x148] sm:$0xff]
    %v1818 = vld [vmem:[#allocation14 + $0x150] sm:$0xff]
    %v1819 = vld [vmem:[#allocation14 + $0x158] sm:$0xff]
    %v1820 = vld [vmem:[#allocation14 + $0x160] sm:$0xff]
    %v1821 = vld [vmem:[#allocation14 + $0x168] sm:$0xff]
    %v1822 = vld [vmem:[#allocation14 + $0x170] sm:$0xff]
    %v1823 = vld [vmem:[#allocation14 + $0x178] sm:$0xff]
    %v1824 = vld [vmem:[#allocation14 + $0x180] sm:$0xff]
    %v1825 = vld [vmem:[#allocation14 + $0x188] sm:$0xff]
    %v1826 = vld [vmem:[#allocation14 + $0x190] sm:$0xff]
    %v1827 = vld [vmem:[#allocation14 + $0x198] sm:$0xff]
    %v1828 = vld [vmem:[#allocation14 + $0x1a0] sm:$0xff]
    %v1829 = vld [vmem:[#allocation14 + $0x1a8] sm:$0xff]
    %v1830 = vld [vmem:[#allocation14 + $0x1b0] sm:$0xff]
    %v1831 = vld [vmem:[#allocation14 + $0x1b8] sm:$0xff]
    %v1832 = vld [vmem:[#allocation14 + $0x1c0] sm:$0xff]
    %v1833 = vld [vmem:[#allocation14 + $0x1c8] sm:$0xff]
    %v1834 = vld [vmem:[#allocation14 + $0x1d0] sm:$0xff]
    %v1835 = vld [vmem:[#allocation14 + $0x1d8] sm:$0xff]
    %v1836 = vld [vmem:[#allocation14 + $0x1e0] sm:$0xff]
    %v1837 = vld [vmem:[#allocation14 + $0x1e8] sm:$0xff]
    %v1838 = vld [vmem:[#allocation14 + $0x1f0] sm:$0xff]
    %v1839 = vld [vmem:[#allocation14 + $0x1f8] sm:$0xff]
    %v1840 = vld [vmem:[#allocation16] sm:$0x3]
    %v1842 = vlaneseq
    %v1843 = vshrl.u32 %v1842, 7
    %v1844 = vsub.s32 0, %v1843
    %v1845 = vrot.slane %v1840, %v1844
    %v1846 = vlaneseq
    %v1847 = vshrl.u32 %v1846, 7
    %v1848 = vsub.s32 1, %v1847
    %v1849 = vrot.slane %v1840, %v1848
    %1852 = vmatprep.subr.mxu0 %v1777
    %1853 = vmatpush1.msra.mxu0 %v1776
    %1854 = vmatprep.subr.mxu0 %v1779
    %1855 = vmatpush1.msra.mxu0 %v1778
    %1856 = vmatprep.subr.mxu0 %v1781
    %1857 = vmatpush1.msra.mxu0 %v1780
    %1858 = vmatprep.subr.mxu0 %v1783
    %1859 = vmatpush1.msra.mxu0 %v1782
    %1860 = vmatprep.subr.mxu0 %v1785
    %1861 = vmatpush1.msra.mxu0 %v1784
    %1862 = vmatprep.subr.mxu0 %v1787
    %1863 = vmatpush1.msra.mxu0 %v1786
    %1864 = vmatprep.subr.mxu0 %v1789
    %1865 = vmatpush1.msra.mxu0 %v1788
    %1866 = vmatprep.subr.mxu0 %v1791
    %1867 = vmatpush1.msra.mxu0 %v1790
    %1868 = vmatprep.subr.mxu0 %v1793
    %1869 = vmatpush1.msra.mxu0 %v1792
    %1870 = vmatprep.subr.mxu0 %v1795
    %1871 = vmatpush1.msra.mxu0 %v1794
    %1872 = vmatprep.subr.mxu0 %v1797
    %1873 = vmatpush1.msra.mxu0 %v1796
    %1874 = vmatprep.subr.mxu0 %v1799
    %1875 = vmatpush1.msra.mxu0 %v1798
    %1876 = vmatprep.subr.mxu0 %v1801
    %1877 = vmatpush1.msra.mxu0 %v1800
    %1878 = vmatprep.subr.mxu0 %v1803
    %1879 = vmatpush1.msra.mxu0 %v1802
    %1880 = vmatprep.subr.mxu0 %v1805
    %1881 = vmatpush1.msra.mxu0 %v1804
    %1882 = vmatprep.subr.mxu0 %v1807
    %1883 = vmatpush1.msra.mxu0 %v1806
    %1884 = vmatprep.subr.mxu0 %v1809
    %1885 = vmatpush1.msra.mxu0 %v1808
    %1886 = vmatprep.subr.mxu0 %v1811
    %1887 = vmatpush1.msra.mxu0 %v1810
    %1888 = vmatprep.subr.mxu0 %v1813
    %1889 = vmatpush1.msra.mxu0 %v1812
    %1890 = vmatprep.subr.mxu0 %v1815
    %1891 = vmatpush1.msra.mxu0 %v1814
    %1892 = vmatprep.subr.mxu0 %v1817
    %1893 = vmatpush1.msra.mxu0 %v1816
    %1894 = vmatprep.subr.mxu0 %v1819
    %1895 = vmatpush1.msra.mxu0 %v1818
    %1896 = vmatprep.subr.mxu0 %v1821
    %1897 = vmatpush1.msra.mxu0 %v1820
    %1898 = vmatprep.subr.mxu0 %v1823
    %1899 = vmatpush1.msra.mxu0 %v1822
    %1900 = vmatprep.subr.mxu0 %v1825
    %1901 = vmatpush1.msra.mxu0 %v1824
    %1902 = vmatprep.subr.mxu0 %v1827
    %1903 = vmatpush1.msra.mxu0 %v1826
    %1904 = vmatprep.subr.mxu0 %v1829
    %1905 = vmatpush1.msra.mxu0 %v1828
    %1906 = vmatprep.subr.mxu0 %v1831
    %1907 = vmatpush1.msra.mxu0 %v1830
    %1908 = vmatprep.subr.mxu0 %v1833
    %1909 = vmatpush1.msra.mxu0 %v1832
    %1910 = vmatprep.subr.mxu0 %v1835
    %1911 = vmatpush1.msra.mxu0 %v1834
    %1912 = vmatprep.subr.mxu0 %v1837
    %1913 = vmatpush1.msra.mxu0 %v1836
    %1914 = vmatprep.subr.mxu0 %v1839
    %1915 = vmatpush1.msra.mxu0 %v1838
    %1916 = vmatprep.mubr.f32.mxu0 %v192
    %1917 = vmatmul.mubr.f32.gmra.mrb[0].mxu0 %v191
    %v1918 = vpop.f32.mrb[0].mxu0
    %v1919 = vadd.f32 %v1845, %v1918
    %v1920 = vpop.f32.mrb[0].mxu0
    %v1921 = vadd.f32 %v1849, %v1920
    %1922 = vmatprep.mubr.f32.mxu0 %v194
    %1923 = vmatmul.mubr.f32.gmra.mrb[0].mxu0 %v193
    %v1924 = vpop.f32.mrb[0].mxu0
    %v1925 = vadd.f32 %v1845, %v1924
    %v1926 = vpop.f32.mrb[0].mxu0
    %v1927 = vadd.f32 %v1849, %v1926
    %1928 = vmatprep.mubr.f32.mxu0 %v196
    %1929 = vmatmul.mubr.f32.gmra.mrb[0].mxu0 %v195
    %v1930 = vpop.f32.mrb[0].mxu0
    %v1931 = vadd.f32 %v1845, %v1930
    %v1932 = vpop.f32.mrb[0].mxu0
    %v1933 = vadd.f32 %v1849, %v1932
    %1934 = vmatprep.mubr.f32.mxu0 %v198
    %1935 = vmatmul.mubr.f32.gmra.mrb[0].mxu0 %v197
    %v1936 = vpop.f32.mrb[0].mxu0
    %v1937 = vadd.f32 %v1845, %v1936
    %v1938 = vpop.f32.mrb[0].mxu0
    %v1939 = vadd.f32 %v1849, %v1938
    %1940 = vdwg.mxu0
    %v1941 = vmul.f32 %v1919, %v1919
    %v1942 = vmul.f32 %v1921, %v1921
    %v1943 = vmul.f32 %v1925, %v1925
    %v1944 = vmul.f32 %v1927, %v1927
    %v1945 = vmul.f32 %v1931, %v1931
    %v1946 = vmul.f32 %v1933, %v1933
    %v1947 = vmul.f32 %v1937, %v1937
    %v1948 = vmul.f32 %v1939, %v1939
    %v1949 = vadd.f32 %v1941, %v1942
    %1950 = vadd.xlane.f32.xlu0 %v1949
    %v1951 = vpop.xlane.xlu0 %1950
    %v1952 = vadd.f32 %v1943, %v1944
    %1953 = vadd.xlane.f32.xlu0 %v1952
    %v1954 = vpop.xlane.xlu0 %1953
    %v1955 = vadd.f32 %v1945, %v1946
    %1956 = vadd.xlane.f32.xlu0 %v1955
    %v1957 = vpop.xlane.xlu0 %1956
    %v1958 = vadd.f32 %v1947, %v1948
    %1959 = vadd.xlane.f32.xlu0 %v1958
    %v1960 = vpop.xlane.xlu0 %1959
    %v1961 = vrcp.pop 256.0
    %v1962 = vmul.f32 %v1951, %v1961
    %v1963 = vmul.f32 %v1954, %v1961
    %v1964 = vmul.f32 %v1957, %v1961
    %v1965 = vmul.f32 %v1960, %v1961
    %v1966 = vadd.f32 %v1962, 0.001
    %v1967 = vadd.f32 %v1963, 0.001
    %v1968 = vadd.f32 %v1964, 0.001
    %v1969 = vadd.f32 %v1965, 0.001
    %v1970 = vrsqrt.pop %v1966
    %v1971 = vrsqrt.pop %v1967
    %v1972 = vrsqrt.pop %v1968
    %v1973 = vrsqrt.pop %v1969
    %v1974 = vmul.f32 %v1919, %v1970
    %v1975 = vmul.f32 %v1921, %v1970
    %v1976 = vmul.f32 %v1925, %v1971
    %v1977 = vmul.f32 %v1927, %v1971
    %v1978 = vmul.f32 %v1931, %v1972
    %v1979 = vmul.f32 %v1933, %v1972
    %v1980 = vmul.f32 %v1937, %v1973
    %v1981 = vmul.f32 %v1939, %v1973
    %v1982 = vld [vmem:[#allocation19] sm:$0x3]
    %v1984 = vlaneseq
    %v1985 = vshrl.u32 %v1984, 7
    %v1986 = vsub.s32 0, %v1985
    %v1987 = vrot.slane %v1982, %v1986
    %v1988 = vlaneseq
    %v1989 = vshrl.u32 %v1988, 7
    %v1990 = vsub.s32 1, %v1989
    %v1991 = vrot.slane %v1982, %v1990
    %v1994 = vmul.f32 %v1974, %v1987
    %v1995 = vmul.f32 %v1975, %v1991
    %v1996 = vmul.f32 %v1976, %v1987
    %v1997 = vmul.f32 %v1977, %v1991
    %v1998 = vmul.f32 %v1978, %v1987
    %v1999 = vmul.f32 %v1979, %v1991
    %v2000 = vmul.f32 %v1980, %v1987
    %v2001 = vmul.f32 %v1981, %v1991
    %2002 = vst [vmem:[#allocation23] sm:$0xff] %v1994
    %2003 = vst [vmem:[#allocation23 + $0x8] sm:$0xff] %v1995
    %2004 = vst [vmem:[#allocation23 + $0x10] sm:$0xff] %v1996
    %2005 = vst [vmem:[#allocation23 + $0x18] sm:$0xff] %v1997
    %2006 = vst [vmem:[#allocation23 + $0x20] sm:$0xff] %v1998
    %2007 = vst [vmem:[#allocation23 + $0x28] sm:$0xff] %v1999
    %2008 = vst [vmem:[#allocation23 + $0x30] sm:$0xff] %v2000
    %2009 = vst [vmem:[#allocation23 + $0x38] sm:$0xff] %v2001
    %v2010 = vld [vmem:[%s9] sm:$0xff]
    %v2011 = vld [vmem:[%s9 + $0x8] sm:$0xff]
    %v2012 = vld [vmem:[%s9 + $0x10] sm:$0xff]
    %v2013 = vld [vmem:[%s9 + $0x18] sm:$0xff]
    %v2014 = vld [vmem:[%s9 + $0x20] sm:$0xff]
    %v2015 = vld [vmem:[%s9 + $0x28] sm:$0xff]
    %v2016 = vld [vmem:[%s9 + $0x30] sm:$0xff]
    %v2017 = vld [vmem:[%s9 + $0x38] sm:$0xff]
    %v2018 = vld [vmem:[%s9 + $0x40] sm:$0xff]
    %v2019 = vld [vmem:[%s9 + $0x48] sm:$0xff]
    %v2020 = vld [vmem:[%s9 + $0x50] sm:$0xff]
    %v2021 = vld [vmem:[%s9 + $0x58] sm:$0xff]
    %v2022 = vld [vmem:[%s9 + $0x60] sm:$0xff]
    %v2023 = vld [vmem:[%s9 + $0x68] sm:$0xff]
    %v2024 = vld [vmem:[%s9 + $0x70] sm:$0xff]
    %v2025 = vld [vmem:[%s9 + $0x78] sm:$0xff]
    %v2026 = vld [vmem:[%s9 + $0x80] sm:$0xff]
    %v2027 = vld [vmem:[%s9 + $0x88] sm:$0xff]
    %v2028 = vld [vmem:[%s9 + $0x90] sm:$0xff]
    %v2029 = vld [vmem:[%s9 + $0x98] sm:$0xff]
    %v2030 = vld [vmem:[%s9 + $0xa0] sm:$0xff]
    %v2031 = vld [vmem:[%s9 + $0xa8] sm:$0xff]
    %v2032 = vld [vmem:[%s9 + $0xb0] sm:$0xff]
    %v2033 = vld [vmem:[%s9 + $0xb8] sm:$0xff]
    %v2034 = vld [vmem:[%s9 + $0xc0] sm:$0xff]
    %v2035 = vld [vmem:[%s9 + $0xc8] sm:$0xff]
    %v2036 = vld [vmem:[%s9 + $0xd0] sm:$0xff]
    %v2037 = vld [vmem:[%s9 + $0xd8] sm:$0xff]
    %v2038 = vld [vmem:[%s9 + $0xe0] sm:$0xff]
    %v2039 = vld [vmem:[%s9 + $0xe8] sm:$0xff]
    %v2040 = vld [vmem:[%s9 + $0xf0] sm:$0xff]
    %v2041 = vld [vmem:[%s9 + $0xf8] sm:$0xff]
    %v2042 = vld [vmem:[#allocation17] sm:$0x1]
    %v2044 = vlaneseq
    %v2045 = vshrl.u32 %v2044, 7
    %v2046 = vsub.s32 0, %v2045
    %v2047 = vrot.slane %v2042, %v2046
    %2049 = vmatprep.subr.mxu0 0.0
    %2050 = vmatpush1.msra.mxu0 %v2010
    %2051 = vmatprep.subr.mxu0 0.0
    %2052 = vmatpush1.msra.mxu0 %v2011
    %2053 = vmatprep.subr.mxu0 0.0
    %2054 = vmatpush1.msra.mxu0 %v2012
    %2055 = vmatprep.subr.mxu0 0.0
    %2056 = vmatpush1.msra.mxu0 %v2013
    %2057 = vmatprep.subr.mxu0 0.0
    %2058 = vmatpush1.msra.mxu0 %v2014
    %2059 = vmatprep.subr.mxu0 0.0
    %2060 = vmatpush1.msra.mxu0 %v2015
    %2061 = vmatprep.subr.mxu0 0.0
    %2062 = vmatpush1.msra.mxu0 %v2016
    %2063 = vmatprep.subr.mxu0 0.0
    %2064 = vmatpush1.msra.mxu0 %v2017
    %2065 = vmatprep.subr.mxu0 0.0
    %2066 = vmatpush1.msra.mxu0 %v2018
    %2067 = vmatprep.subr.mxu0 0.0
    %2068 = vmatpush1.msra.mxu0 %v2019
    %2069 = vmatprep.subr.mxu0 0.0
    %2070 = vmatpush1.msra.mxu0 %v2020
    %2071 = vmatprep.subr.mxu0 0.0
    %2072 = vmatpush1.msra.mxu0 %v2021
    %2073 = vmatprep.subr.mxu0 0.0
    %2074 = vmatpush1.msra.mxu0 %v2022
    %2075 = vmatprep.subr.mxu0 0.0
    %2076 = vmatpush1.msra.mxu0 %v2023
    %2077 = vmatprep.subr.mxu0 0.0
    %2078 = vmatpush1.msra.mxu0 %v2024
    %2079 = vmatprep.subr.mxu0 0.0
    %2080 = vmatpush1.msra.mxu0 %v2025
    %2081 = vmatprep.subr.mxu0 0.0
    %2082 = vmatpush1.msra.mxu0 %v2026
    %2083 = vmatprep.subr.mxu0 0.0
    %2084 = vmatpush1.msra.mxu0 %v2027
    %2085 = vmatprep.subr.mxu0 0.0
    %2086 = vmatpush1.msra.mxu0 %v2028
    %2087 = vmatprep.subr.mxu0 0.0
    %2088 = vmatpush1.msra.mxu0 %v2029
    %2089 = vmatprep.subr.mxu0 0.0
    %2090 = vmatpush1.msra.mxu0 %v2030
    %2091 = vmatprep.subr.mxu0 0.0
    %2092 = vmatpush1.msra.mxu0 %v2031
    %2093 = vmatprep.subr.mxu0 0.0
    %2094 = vmatpush1.msra.mxu0 %v2032
    %2095 = vmatprep.subr.mxu0 0.0
    %2096 = vmatpush1.msra.mxu0 %v2033
    %2097 = vmatprep.subr.mxu0 0.0
    %2098 = vmatpush1.msra.mxu0 %v2034
    %2099 = vmatprep.subr.mxu0 0.0
    %2100 = vmatpush1.msra.mxu0 %v2035
    %2101 = vmatprep.subr.mxu0 0.0
    %2102 = vmatpush1.msra.mxu0 %v2036
    %2103 = vmatprep.subr.mxu0 0.0
    %2104 = vmatpush1.msra.mxu0 %v2037
    %2105 = vmatprep.subr.mxu0 0.0
    %2106 = vmatpush1.msra.mxu0 %v2038
    %2107 = vmatprep.subr.mxu0 0.0
    %2108 = vmatpush1.msra.mxu0 %v2039
    %2109 = vmatprep.subr.mxu0 0.0
    %2110 = vmatpush1.msra.mxu0 %v2040
    %2111 = vmatprep.subr.mxu0 0.0
    %2112 = vmatpush1.msra.mxu0 %v2041
    %2113 = vmatprep.mubr.f32.mxu0 %v192
    %2114 = vmatmul.mubr.f32.gmra.mrb[0].mxu0 %v191
    %v2115 = vpop.f32.mrb[0].mxu0
    %v2116 = vadd.f32 %v2047, %v2115
    %v2117 = vpop.f32.mrb[0].mxu0
    %2118 = vmatprep.mubr.f32.mxu0 %v194
    %2119 = vmatmul.mubr.f32.gmra.mrb[0].mxu0 %v193
    %v2120 = vpop.f32.mrb[0].mxu0
    %v2121 = vadd.f32 %v2047, %v2120
    %v2122 = vpop.f32.mrb[0].mxu0
    %2123 = vmatprep.mubr.f32.mxu0 %v196
    %2124 = vmatmul.mubr.f32.gmra.mrb[0].mxu0 %v195
    %v2125 = vpop.f32.mrb[0].mxu0
    %v2126 = vadd.f32 %v2047, %v2125
    %v2127 = vpop.f32.mrb[0].mxu0
    %2128 = vmatprep.mubr.f32.mxu0 %v198
    %2129 = vmatmul.mubr.f32.gmra.mrb[0].mxu0 %v197
    %v2130 = vpop.f32.mrb[0].mxu0
    %v2131 = vadd.f32 %v2047, %v2130
    %v2132 = vpop.f32.mrb[0].mxu0
    %2133 = vdwg.mxu0
    %v2134 = vmul.f32 %v2116, %v199
    %v2135 = vmul.f32 %v2121, %v200
    %v2136 = vmul.f32 %v2126, %v201
    %v2137 = vmul.f32 %v2131, %v202
    %2142 = vrot.lane.b32.xlu0 %v203, 16
    %v2143 = vpop.permute.xlu0 %2142
    %2144 = vrot.lane.b32.xlu0 %v204, 16
    %v2145 = vpop.permute.xlu0 %2144
    %2146 = vrot.lane.b32.xlu0 %v205, 16
    %v2147 = vpop.permute.xlu0 %2146
    %2148 = vrot.lane.b32.xlu0 %v206, 16
    %v2149 = vpop.permute.xlu0 %2148
    %v2154 = vmul.f32 %v2116, %v2143
    %v2155 = vmul.f32 %v2121, %v2145
    %v2156 = vmul.f32 %v2126, %v2147
    %v2157 = vmul.f32 %v2131, %v2149
    %2162 = vrot.lane.b32.xlu0 %v2154, 112
    %v2163 = vpop.permute.xlu0 %2162
    %2164 = vrot.lane.b32.xlu0 %v2155, 112
    %v2165 = vpop.permute.xlu0 %2164
    %2166 = vrot.lane.b32.xlu0 %v2156, 112
    %v2167 = vpop.permute.xlu0 %2166
    %2168 = vrot.lane.b32.xlu0 %v2157, 112
    %v2169 = vpop.permute.xlu0 %2168
    %v2174 = vsub.f32 %v2134, %v2163
    %v2175 = vsub.f32 %v2135, %v2165
    %v2176 = vsub.f32 %v2136, %v2167
    %v2177 = vsub.f32 %v2137, %v2169
    %v2178 = vmul.f32 %v2116, %v203
    %v2179 = vmul.f32 %v2121, %v204
    %v2180 = vmul.f32 %v2126, %v205
    %v2181 = vmul.f32 %v2131, %v206
    %2186 = vrot.lane.b32.xlu0 %v199, 16
    %v2187 = vpop.permute.xlu0 %2186
    %2188 = vrot.lane.b32.xlu0 %v200, 16
    %v2189 = vpop.permute.xlu0 %2188
    %2190 = vrot.lane.b32.xlu0 %v201, 16
    %v2191 = vpop.permute.xlu0 %2190
    %2192 = vrot.lane.b32.xlu0 %v202, 16
    %v2193 = vpop.permute.xlu0 %2192
    %v2198 = vmul.f32 %v2116, %v2187
    %v2199 = vmul.f32 %v2121, %v2189
    %v2200 = vmul.f32 %v2126, %v2191
    %v2201 = vmul.f32 %v2131, %v2193
    %2206 = vrot.lane.b32.xlu0 %v2198, 112
    %v2207 = vpop.permute.xlu0 %2206
    %2208 = vrot.lane.b32.xlu0 %v2199, 112
    %v2209 = vpop.permute.xlu0 %2208
    %2210 = vrot.lane.b32.xlu0 %v2200, 112
    %v2211 = vpop.permute.xlu0 %2210
    %2212 = vrot.lane.b32.xlu0 %v2201, 112
    %v2213 = vpop.permute.xlu0 %2212
    %v2218 = vadd.f32 %v2178, %v2207
    %v2219 = vadd.f32 %v2179, %v2209
    %v2220 = vadd.f32 %v2180, %v2211
    %v2221 = vadd.f32 %v2181, %v2213
    %2226 = vrot.lane.b32.xlu0 %v2218, 16
    %v2227 = vpop.permute.xlu0 %2226
    %2228 = vrot.lane.b32.xlu0 %v2219, 16
    %v2229 = vpop.permute.xlu0 %2228
    %2230 = vrot.lane.b32.xlu0 %v2220, 16
    %v2231 = vpop.permute.xlu0 %2230
    %2232 = vrot.lane.b32.xlu0 %v2221, 16
    %v2233 = vpop.permute.xlu0 %2232
    %vm2238 = vcmask 130048
    %v2239 = vsel %vm2238, %v2174, %v2227
    %v2240 = vsel %vm2238, %v2175, %v2229
    %v2241 = vsel %vm2238, %v2176, %v2231
    %v2242 = vsel %vm2238, %v2177, %v2233
    %vm2243 = vcmask 261120
    %2244 = vst.msk [vmem:[#allocation24] sm:$0xff] %vm2243, %v2239
    %2245 = vst.msk [vmem:[#allocation24 + $0x8] sm:$0xff] %vm2243, %v2240
    %2246 = vst.msk [vmem:[#allocation24 + $0x10] sm:$0xff] %vm2243, %v2241
    %2247 = vst.msk [vmem:[#allocation24 + $0x18] sm:$0xff] %vm2243, %v2242
    // Predicated region
    $region94: #{tpu_custom_call.1} parent=1 // pred_check
      _
    $region95: #{tpu_custom_call.1} parent=1 // pred_check_branch
      %2249 = sbr.rel (0) target = $region97
    $region96: #{tpu_custom_call.1} parent=1 // pred_region
      %s2251 = ssub.s32 8192, 8192
      %2252 = vsyncadd [#allocation4], %s2251
      %s2253 = sshll.u32 [#allocation20], 4
      %s2254 = int_to_ptr.vmem [resolvable:$true] %s2253
      %2259 = dma.vmem_to_hbm [thread:$0]  %s2254, 8192, %s12, [#allocation4], 2048, 2048, 128
    $region97: #{tpu_custom_call.1} parent=1 // pred_fallthru
      _
    // Predicated region
    $region98: #{tpu_custom_call.1} parent=1 // pred_check
      _
    $region99: #{tpu_custom_call.1} parent=1 // pred_check_branch
      %2261 = sbr.rel (0) target = $region101
    $region100: #{tpu_custom_call.1} parent=1 // pred_region
      %s2263 = ssub.s32 1024, 1024
      %2264 = vsyncadd [#allocation22], %s2263
      %s2265 = sshll.u32 [#allocation21], 4
      %s2266 = int_to_ptr.vmem [resolvable:$true] %s2265
      %2271 = dma.vmem_to_hbm [thread:$0]  %s2266, 1024, %s13, [#allocation22], 256, 256, 16
    $region101: #{tpu_custom_call.1} parent=1 // pred_fallthru
      _
    // Predicated region
    $region102: #{tpu_custom_call.1} parent=1 // pred_check
      _
    $region103: #{tpu_custom_call.1} parent=1 // pred_check_branch
      %2273 = sbr.rel (0) target = $region105
    $region104: #{tpu_custom_call.1} parent=1 // pred_region
      %s2275 = ssub.s32 1024, 1024
      %2276 = vsyncadd [#allocation22], %s2275
      %s2277 = sshll.u32 [#allocation23], 4
      %s2278 = int_to_ptr.vmem [resolvable:$true] %s2277
      %2283 = dma.vmem_to_hbm [thread:$0]  %s2278, 1024, %s14, [#allocation22], 256, 256, 16
    $region105: #{tpu_custom_call.1} parent=1 // pred_fallthru
      _
    // Predicated region
    $region106: #{tpu_custom_call.1} parent=1 // pred_check
      _
    $region107: #{tpu_custom_call.1} parent=1 // pred_check_branch
      %2285 = sbr.rel (0) target = $region109
    $region108: #{tpu_custom_call.1} parent=1 // pred_region
      %s2287 = ssub.s32 512, 512
      %2288 = vsyncadd [#allocation25], %s2287
      %s2289 = sshll.u32 [#allocation24], 4
      %s2290 = int_to_ptr.vmem [resolvable:$true] %s2289
      %2295 = dma.vmem_to_hbm [thread:$0]  %s2290, 512, %s15, [#allocation25], 128, 128, 8
    $region109: #{tpu_custom_call.1} parent=1 // pred_fallthru
      _
    // Predicated region
    $region110: #{tpu_custom_call.1} parent=1 // pred_check
      _
    $region111: #{tpu_custom_call.1} parent=1 // pred_check_branch
      %2297 = sbr.rel (0) target = $region113
    $region112: #{tpu_custom_call.1} parent=1 // pred_region
      %2298 = dma.done [#allocation4], 8192
    $region113: #{tpu_custom_call.1} parent=1 // pred_fallthru
      _
    // Predicated region
    $region114: #{tpu_custom_call.1} parent=1 // pred_check
      _
    $region115: #{tpu_custom_call.1} parent=1 // pred_check_branch
      %2300 = sbr.rel (0) target = $region117
    $region116: #{tpu_custom_call.1} parent=1 // pred_region
      %2301 = dma.done [#allocation22], 1024
    $region117: #{tpu_custom_call.1} parent=1 // pred_fallthru
      _
    // Predicated region
    $region118: #{tpu_custom_call.1} parent=1 // pred_check
      _
    $region119: #{tpu_custom_call.1} parent=1 // pred_check_branch
      %2303 = sbr.rel (0) target = $region121
    $region120: #{tpu_custom_call.1} parent=1 // pred_region
      %2304 = dma.done [#allocation22], 1024
    $region121: #{tpu_custom_call.1} parent=1 // pred_fallthru
      _
    // Predicated region
    $region122: #{tpu_custom_call.1} parent=1 // pred_check
      _
    $region123: #{tpu_custom_call.1} parent=1 // pred_check_branch
      %2306 = sbr.rel (0) target = $region125
    $region124: #{tpu_custom_call.1} parent=1 // pred_region
      %2307 = dma.done [#allocation25], 512
    $region125: #{tpu_custom_call.1} parent=1 // pred_fallthru
      _
    %2308 = vsyncpa [#allocation3], 1
    %2309 = vsyncpa [#allocation6], 1
    %2310 = vsyncpa [#allocation9], 1
    %2311 = vsyncpa [#allocation12], 1
    %2312 = vsyncpa [#allocation15], 1
    %2313 = vsyncpa [#allocation18], 1
    %2314 = vsyncpa [#allocation4], 1
    %2315 = vsyncpa [#allocation22], 1
    %2316 = vsyncpa [#allocation25], 1

</llo_original>
